<compile_context>
chip_gen: v7x
topology: tpu7x:2x2x1
jax: 0.10.0
libtpu: 0.0.40
codegen_flags: <defaults>
</compile_context>

<pallas_src>
import jax
import jax.numpy as jnp
from jax import lax
from jax.experimental import pallas as pl
from jax.experimental.pallas import tpu as pltpu


def _bigru_encoder_kernel(emb_ref, wih_ref, bih_ref,
                          whhf_ref, bhhnf_ref, whhb_ref, bhhnb_ref,
                          idx_ref,
                          wr_ref, sr_ref,
                          xpf_scr, xpb_scr):
    # Shapes (padded: Bp % 8 == 0, Hp % 128 == 0, G = 3*Hp):
    #   emb_ref  : (S*Bp, E)  bf16   time-major pre-gathered embeddings
    #   wih_ref  : (E, 6Hp)   bf16   [W_ih_f^T | W_ih_b^T], per-gate padded
    #   bih_ref  : (1, 6Hp)   f32    [b_ir+b_hr | b_iz+b_hz | b_in] x 2 dirs
    #   whh*_ref : (Hp, 3Hp)  f32    recurrent weights (transposed)
    #   bhhn*_ref: (1, Hp)    f32    b_hn (stays inside the r* term)
    #   idx_ref  : (Bp, 1)    int32  clamp(src_lens-1, 0, S-1)
    #   wr_ref   : (S, 2, Bp, Hp) f32   [:,0]=fwd, [:,1]=bwd
    #   sr_ref   : (2, Bp, Hp)    f32   [0]=forward_last, [1]=backward_first
    #   xp*_scr  : (S, Bp, 3Hp)   f32   hoisted input-side gate projections
    S, Bp, G = xpf_scr.shape
    Hp = G // 3

    # ---- Hoisted input-side projections for BOTH directions: one wide bf16
    # matmul with f32 accumulate; r/z recurrent biases already folded in. ----
    proj = jnp.dot(emb_ref[...], wih_ref[...],
                   preferred_element_type=jnp.float32) + bih_ref[...]   # (S*Bp, 6Hp)
    xpf_scr[...] = proj[:, 0:G].reshape(S, Bp, G)
    xpb_scr[...] = proj[:, G:2 * G].reshape(S, Bp, G)

    # Hoist loop-invariant loads.
    whh_f = whhf_ref[...]
    whh_b = whhb_ref[...]
    bhn_f = bhhnf_ref[...]
    bhn_b = bhhnb_ref[...]
    idx = idx_ref[...]                                                   # (Bp, 1)

    def gru_cell(xg, h, whh, bhn):
        # PyTorch nn.GRU gate order along 3H: [reset | update | new].
        hg = jnp.dot(h, whh, preferred_element_type=jnp.float32)        # (Bp, 3Hp)
        r = jax.nn.sigmoid(xg[:, 0:Hp] + hg[:, 0:Hp])
        z = jax.nn.sigmoid(xg[:, Hp:2 * Hp] + hg[:, Hp:2 * Hp])
        n = jnp.tanh(xg[:, 2 * Hp:G] + r * (hg[:, 2 * Hp:G] + bhn))
        return (1.0 - z) * n + z * h

    h0 = jnp.zeros((Bp, Hp), jnp.float32)

    # ---- Fused recurrence: forward at t = i, backward at t = S-1-i.  The two
    # chains are independent, so their small matmuls / transcendentals overlap.
    def body(i, carry):
        h_f, h_b, fl = carry
        tf = i
        tb = S - 1 - i
        h_f = gru_cell(xpf_scr[tf], h_f, whh_f, bhn_f)
        h_b = gru_cell(xpb_scr[tb], h_b, whh_b, bhn_b)
        wr_ref[tf, 0] = h_f                      # forward half of word reps
        wr_ref[tb, 1] = h_b                      # backward half of word reps
        fl = jnp.where(idx == tf, h_f, fl)       # capture forward_last
        return (h_f, h_b, fl)

    h_f, h_b, fl = lax.fori_loop(0, S, body, (h0, h0, h0), unroll=True)

    sr_ref[0] = fl        # forward_output[b, clamp(len-1, 0, S-1)]
    sr_ref[1] = h_b       # backward_output[b, 0] == final backward state


@jax.jit
def bidirectional_encoder_forward(src, src_lens, emb_table,
                                  w_ih_f, w_hh_f, b_ih_f, b_hh_f,
                                  w_ih_b, w_hh_b, b_ih_b, b_hh_b):
    """Pallas TPU equivalent of BidirectionalEncoder.forward (eval mode).

    Weights use the PyTorch nn.GRU layout: w_ih_* (3H, E), w_hh_* (3H, H),
    b_*_* (3H,), gate order [r | z | n]; *_f forward direction, *_b reverse.
    """
    B, S = src.shape
    H = w_hh_f.shape[1]
    E = emb_table.shape[1]
    Hp = ((H + 127) // 128) * 128       # lane-dense hidden size
    Bp = ((B + 7) // 8) * 8             # sublane-aligned batch
    G = 3 * Hp

    f32 = jnp.float32
    bf16 = jnp.bfloat16

    # --- weight/bias layout plumbing (per-gate zero padding keeps padded
    # hidden lanes identically zero through the recurrence) ---
    def pad_ih(w):                       # (3H, E) -> (E, 3Hp)
        w = jnp.pad(w.reshape(3, H, E), ((0, 0), (0, Hp - H), (0, 0)))
        return jnp.transpose(w.reshape(3 * Hp, E))

    def pad_hh(w):                       # (3H, H) -> (Hp, 3Hp)
        w = jnp.pad(w.reshape(3, H, H), ((0, 0), (0, Hp - H), (0, Hp - H)))
        return jnp.transpose(w.reshape(3 * Hp, Hp))

    def fold_bias(b_ih, b_hh):           # -> (3Hp,)  [b_ir+b_hr | b_iz+b_hz | b_in]
        bi = b_ih.reshape(3, H)
        bh = b_hh.reshape(3, H)
        fused = jnp.concatenate([bi[0:1] + bh[0:1], bi[1:2] + bh[1:2], bi[2:3]], 0)
        return jnp.pad(fused, ((0, 0), (0, Hp - H))).reshape(3 * Hp)

    def pad_bhn(b_hh):                   # -> (1, Hp)
        return jnp.pad(b_hh.reshape(3, H)[2], (0, Hp - H)).reshape(1, Hp)

    wih_cat = jnp.concatenate([pad_ih(w_ih_f), pad_ih(w_ih_b)], axis=1).astype(bf16)
    bih_cat = jnp.concatenate([fold_bias(b_ih_f, b_hh_f),
                               fold_bias(b_ih_b, b_hh_b)]).reshape(1, 2 * G).astype(f32)
    whh_fp = pad_hh(w_hh_f).astype(f32)
    whh_bp = pad_hh(w_hh_b).astype(f32)
    bhn_fp = pad_bhn(b_hh_f).astype(f32)
    bhn_bp = pad_bhn(b_hh_b).astype(f32)

    # --- embedding gather + dropout(identity) in XLA; time-major, batch-padded,
    # bf16 activations into the kernel ---
    emb = emb_table[src]                                            # (B, S, E) f32
    emb_tm = jnp.pad(jnp.transpose(emb, (1, 0, 2)),
                     ((0, 0), (0, Bp - B), (0, 0)))                 # (S, Bp, E)
    emb_flat = emb_tm.reshape(S * Bp, E).astype(bf16)

    idx = jnp.clip(src_lens.astype(jnp.int32) - 1, 0, S - 1)        # (B,)
    idx_p = jnp.pad(idx, (0, Bp - B)).reshape(Bp, 1)

    vmem = pltpu.MemorySpace.VMEM
    wr, sr = pl.pallas_call(
        _bigru_encoder_kernel,
        out_shape=(
            jax.ShapeDtypeStruct((S, 2, Bp, Hp), f32),
            jax.ShapeDtypeStruct((2, Bp, Hp), f32),
        ),
        in_specs=[pl.BlockSpec(memory_space=vmem)] * 8,
        out_specs=(
            pl.BlockSpec(memory_space=vmem),
            pl.BlockSpec(memory_space=vmem),
        ),
        scratch_shapes=[
            pltpu.VMEM((S, Bp, G), f32),   # fwd input-gate projections
            pltpu.VMEM((S, Bp, G), f32),   # bwd input-gate projections
        ],
    )(emb_flat, wih_cat, bih_cat, whh_fp, bhn_fp, whh_bp, bhn_bp, idx_p)

    # Un-pad / re-layout outputs (fused by XLA).
    word_representations = jnp.transpose(wr, (2, 0, 1, 3))[:B, :, :, :H] \
                              .reshape(B, S, 2 * H)                 # (B, S, 2H)
    sentence_rep = jnp.transpose(sr, (1, 0, 2))[:B, :, :H].reshape(B, 2 * H)
    return word_representations, sentence_rep


def _reference_forward(src, src_lens, emb_table,
                       w_ih_f, w_hh_f, b_ih_f, b_hh_f,
                       w_ih_b, w_hh_b, b_ih_b, b_hh_b):
    """Pure-JAX (XLA, f32) reference of the same forward, for correctness checking."""
    B, S = src.shape
    H = w_hh_f.shape[1]
    hi = jax.lax.Precision.HIGHEST
    emb = emb_table[src]                                     # (B, S, E)

    def run(w_ih, w_hh, b_ih, b_hh, reverse):
        h = jnp.zeros((B, H), jnp.float32)
        outs = [None] * S
        steps = range(S - 1, -1, -1) if reverse else range(S)
        for t in steps:
            gi = jnp.dot(emb[:, t, :], w_ih.T, precision=hi) + b_ih
            gh = jnp.dot(h, w_hh.T, precision=hi) + b_hh
            r = jax.nn.sigmoid(gi[:, :H] + gh[:, :H])
            z = jax.nn.sigmoid(gi[:, H:2 * H] + gh[:, H:2 * H])
            n = jnp.tanh(gi[:, 2 * H:] + r * gh[:, 2 * H:])
            h = (1.0 - z) * n + z * h
            outs[t] = h
        return jnp.stack(outs, axis=1)                       # (B, S, H)

    fo = run(w_ih_f, w_hh_f, b_ih_f, b_hh_f, reverse=False)
    bo = run(w_ih_b, w_hh_b, b_ih_b, b_hh_b, reverse=True)
    wr = jnp.concatenate([fo, bo], axis=-1)
    idx = jnp.clip(src_lens - 1, 0, S - 1)
    fwd_last = fo[jnp.arange(B), idx]
    sr = jnp.concatenate([fwd_last, bo[:, 0, :]], axis=-1)
    return wr, sr


if __name__ == "__main__":
    key = jax.random.PRNGKey(0)
    ks = jax.random.split(key, 10)

    # Small shapes consistent with the module:
    #   batch=2, seq=8, src_vocab_len=64, emb_dim=32, enc_hid_dim=32
    B, S = 2, 8
    V, E, H = 64, 32, 32
    scale = H ** -0.5

    emb_table = jax.random.normal(ks[0], (V, E), dtype=jnp.float32)
    w_ih_f = scale * jax.random.normal(ks[1], (3 * H, E), dtype=jnp.float32)
    w_hh_f = scale * jax.random.normal(ks[2], (3 * H, H), dtype=jnp.float32)
    b_ih_f = scale * jax.random.normal(ks[3], (3 * H,), dtype=jnp.float32)
    b_hh_f = scale * jax.random.normal(ks[4], (3 * H,), dtype=jnp.float32)
    w_ih_b = scale * jax.random.normal(ks[5], (3 * H, E), dtype=jnp.float32)
    w_hh_b = scale * jax.random.normal(ks[6], (3 * H, H), dtype=jnp.float32)
    b_ih_b = scale * jax.random.normal(ks[7], (3 * H,), dtype=jnp.float32)
    b_hh_b = scale * jax.random.normal(ks[8], (3 * H,), dtype=jnp.float32)

    src = jax.random.randint(ks[9], (B, S), 0, V, dtype=jnp.int32)
    src_lens = jnp.array([S, 5], dtype=jnp.int32)

    word_reps, sent_rep = bidirectional_encoder_forward(
        src, src_lens, emb_table,
        w_ih_f, w_hh_f, b_ih_f, b_hh_f,
        w_ih_b, w_hh_b, b_ih_b, b_hh_b)
    jax.block_until_ready((word_reps, sent_rep))

    assert word_reps.shape == (B, S, 2 * H) and word_reps.dtype == jnp.float32
    assert sent_rep.shape == (B, 2 * H) and sent_rep.dtype == jnp.float32

    wr_ref, sr_ref = _reference_forward(
        src, src_lens, emb_table,
        w_ih_f, w_hh_f, b_ih_f, b_hh_f,
        w_ih_b, w_hh_b, b_ih_b, b_hh_b)

    # Tolerance covers the bf16 input-side projection (f32 accumulate); the
    # recurrence itself runs in f32, so differences vs. the f32 reference
    # stay at the ~1e-2 level on O(1)-bounded GRU outputs.
    assert jnp.allclose(word_reps, wr_ref, atol=3e-2, rtol=3e-2), \
        float(jnp.max(jnp.abs(word_reps - wr_ref)))
    assert jnp.allclose(sent_rep, sr_ref, atol=3e-2, rtol=3e-2), \
        float(jnp.max(jnp.abs(sent_rep - sr_ref)))

    print("KERNEL_OK")
</pallas_src>

<mosaic_0001>
module attributes {stable_mosaic.version = 11 : i64} {
  func.func @_bigru_encoder_kernel(%arg0: memref<64x32xbf16, #tpu.memory_space<vmem>>, %arg1: memref<32x768xbf16, #tpu.memory_space<vmem>>, %arg2: memref<1x768xf32, #tpu.memory_space<vmem>>, %arg3: memref<128x384xf32, #tpu.memory_space<vmem>>, %arg4: memref<1x128xf32, #tpu.memory_space<vmem>>, %arg5: memref<128x384xf32, #tpu.memory_space<vmem>>, %arg6: memref<1x128xf32, #tpu.memory_space<vmem>>, %arg7: memref<8x1xi32, #tpu.memory_space<vmem>>, %arg8: memref<8x2x8x128xf32, #tpu.memory_space<vmem>>, %arg9: memref<2x8x128xf32, #tpu.memory_space<vmem>>, %arg10: memref<8x8x384xf32, #tpu.memory_space<vmem>>, %arg11: memref<8x8x384xf32, #tpu.memory_space<vmem>>) attributes {dimension_semantics = [], scalar_prefetch = 0 : i64, scratch_operands = 2 : i64, tpu.core_type = #tpu.core_type<tc>} {
    %c0 = arith.constant 0 : index
    %c0_0 = arith.constant 0 : index
    %0 = vector.load %arg0[%c0, %c0_0] : memref<64x32xbf16, #tpu.memory_space<vmem>>, vector<64x32xbf16>
    %c0_1 = arith.constant 0 : index
    %c0_2 = arith.constant 0 : index
    %1 = vector.load %arg1[%c0_1, %c0_2] : memref<32x768xbf16, #tpu.memory_space<vmem>>, vector<32x768xbf16>
    %cst = arith.constant dense<0.000000e+00> : vector<64x768xf32>
    %2 = tpu.matmul %0, %1, %cst {dimension_numbers = #tpu.dot_dimension_numbers<[1], [0], [0], [1], [0, 0, 1, 1], [], []>} : vector<64x32xbf16>, vector<32x768xbf16>, vector<64x768xf32> -> vector<64x768xf32>
    %c0_3 = arith.constant 0 : index
    %c0_4 = arith.constant 0 : index
    %3 = vector.load %arg2[%c0_3, %c0_4] : memref<1x768xf32, #tpu.memory_space<vmem>>, vector<1x768xf32>
    %4 = vector.broadcast %3 : vector<1x768xf32> to vector<64x768xf32>
    %5 = arith.addf %2, %4 : vector<64x768xf32>
    %6 = vector.extract_strided_slice %5 {offsets = [0, 0], sizes = [64, 384], strides = [1, 1]} : vector<64x768xf32> to vector<64x384xf32>
    %7 = vector.shape_cast %6 : vector<64x384xf32> to vector<8x8x384xf32>
    %c0_5 = arith.constant 0 : index
    %c0_6 = arith.constant 0 : index
    %c0_7 = arith.constant 0 : index
    %8 = vector.load %arg10[%c0_5, %c0_6, %c0_7] : memref<8x8x384xf32, #tpu.memory_space<vmem>>, vector<8x8x384xf32>
    tpu.vector_store %arg10[%c0_5, %c0_6, %c0_7], %7 {strides = array<i32>} : memref<8x8x384xf32, #tpu.memory_space<vmem>>, vector<8x8x384xf32>,
    %9 = vector.extract_strided_slice %5 {offsets = [0, 384], sizes = [64, 384], strides = [1, 1]} : vector<64x768xf32> to vector<64x384xf32>
    %10 = vector.shape_cast %9 : vector<64x384xf32> to vector<8x8x384xf32>
    %c0_8 = arith.constant 0 : index
    %c0_9 = arith.constant 0 : index
    %c0_10 = arith.constant 0 : index
    %11 = vector.load %arg11[%c0_8, %c0_9, %c0_10] : memref<8x8x384xf32, #tpu.memory_space<vmem>>, vector<8x8x384xf32>
    tpu.vector_store %arg11[%c0_8, %c0_9, %c0_10], %10 {strides = array<i32>} : memref<8x8x384xf32, #tpu.memory_space<vmem>>, vector<8x8x384xf32>,
    %c0_11 = arith.constant 0 : index
    %c0_12 = arith.constant 0 : index
    %12 = vector.load %arg3[%c0_11, %c0_12] : memref<128x384xf32, #tpu.memory_space<vmem>>, vector<128x384xf32>
    %c0_13 = arith.constant 0 : index
    %c0_14 = arith.constant 0 : index
    %13 = vector.load %arg5[%c0_13, %c0_14] : memref<128x384xf32, #tpu.memory_space<vmem>>, vector<128x384xf32>
    %c0_15 = arith.constant 0 : index
    %c0_16 = arith.constant 0 : index
    %14 = vector.load %arg4[%c0_15, %c0_16] : memref<1x128xf32, #tpu.memory_space<vmem>>, vector<1x128xf32>
    %c0_17 = arith.constant 0 : index
    %c0_18 = arith.constant 0 : index
    %15 = vector.load %arg6[%c0_17, %c0_18] : memref<1x128xf32, #tpu.memory_space<vmem>>, vector<1x128xf32>
    %c0_19 = arith.constant 0 : index
    %c0_20 = arith.constant 0 : index
    %16 = vector.load %arg7[%c0_19, %c0_20] : memref<8x1xi32, #tpu.memory_space<vmem>>, vector<8x1xi32>
    %cst_21 = arith.constant 0.000000e+00 : f32
    %17 = vector.broadcast %cst_21 : f32 to vector<8x128xf32>
    %c0_i32 = arith.constant 0 : i32
    %c7_i32 = arith.constant 7 : i32
    %18 = arith.subi %c7_i32, %c0_i32 : i32
    %19 = arith.index_cast %c0_i32 : i32 to index
    %c0_22 = arith.constant 0 : index
    %c0_23 = arith.constant 0 : index
    %20 = vector.load %arg10[%19, %c0_22, %c0_23] : memref<8x8x384xf32, #tpu.memory_space<vmem>>, vector<1x8x384xf32>
    %21 = vector.shape_cast %20 : vector<1x8x384xf32> to vector<8x384xf32>
    %cst_24 = arith.constant dense<0.000000e+00> : vector<8x384xf32>
    %22 = tpu.matmul %17, %12, %cst_24 {dimension_numbers = #tpu.dot_dimension_numbers<[1], [0], [0], [1], [0, 0, 1, 1], [], []>} : vector<8x128xf32>, vector<128x384xf32>, vector<8x384xf32> -> vector<8x384xf32>
    %23 = vector.extract_strided_slice %21 {offsets = [0, 0], sizes = [8, 128], strides = [1, 1]} : vector<8x384xf32> to vector<8x128xf32>
    %24 = vector.extract_strided_slice %22 {offsets = [0, 0], sizes = [8, 128], strides = [1, 1]} : vector<8x384xf32> to vector<8x128xf32>
    %25 = arith.addf %23, %24 : vector<8x128xf32>
    %26 = arith.negf %25 : vector<8x128xf32>
    %27 = math.exp %26 : vector<8x128xf32>
    %cst_25 = arith.constant 1.000000e+00 : f32
    %28 = vector.broadcast %cst_25 : f32 to vector<8x128xf32>
    %29 = arith.addf %28, %27 : vector<8x128xf32>
    %30 = arith.divf %28, %29 : vector<8x128xf32>
    %31 = vector.extract_strided_slice %21 {offsets = [0, 128], sizes = [8, 128], strides = [1, 1]} : vector<8x384xf32> to vector<8x128xf32>
    %32 = vector.extract_strided_slice %22 {offsets = [0, 128], sizes = [8, 128], strides = [1, 1]} : vector<8x384xf32> to vector<8x128xf32>
    %33 = arith.addf %31, %32 : vector<8x128xf32>
    %34 = arith.negf %33 : vector<8x128xf32>
    %35 = math.exp %34 : vector<8x128xf32>
    %cst_26 = arith.constant 1.000000e+00 : f32
    %36 = vector.broadcast %cst_26 : f32 to vector<8x128xf32>
    %37 = arith.addf %36, %35 : vector<8x128xf32>
    %38 = arith.divf %36, %37 : vector<8x128xf32>
    %39 = vector.extract_strided_slice %21 {offsets = [0, 256], sizes = [8, 128], strides = [1, 1]} : vector<8x384xf32> to vector<8x128xf32>
    %40 = vector.extract_strided_slice %22 {offsets = [0, 256], sizes = [8, 128], strides = [1, 1]} : vector<8x384xf32> to vector<8x128xf32>
    %41 = vector.broadcast %14 : vector<1x128xf32> to vector<8x128xf32>
    %42 = arith.addf %40, %41 : vector<8x128xf32>
    %43 = arith.mulf %30, %42 : vector<8x128xf32>
    %44 = arith.addf %39, %43 : vector<8x128xf32>
    %45 = math.tanh %44 : vector<8x128xf32>
    %cst_27 = arith.constant 1.000000e+00 : f32
    %46 = vector.broadcast %cst_27 : f32 to vector<8x128xf32>
    %47 = arith.subf %46, %38 : vector<8x128xf32>
    %48 = arith.mulf %47, %45 : vector<8x128xf32>
    %49 = arith.mulf %38, %17 : vector<8x128xf32>
    %50 = arith.addf %48, %49 : vector<8x128xf32>
    %51 = arith.index_cast %18 : i32 to index
    %c0_28 = arith.constant 0 : index
    %c0_29 = arith.constant 0 : index
    %52 = vector.load %arg11[%51, %c0_28, %c0_29] : memref<8x8x384xf32, #tpu.memory_space<vmem>>, vector<1x8x384xf32>
    %53 = vector.shape_cast %52 : vector<1x8x384xf32> to vector<8x384xf32>
    %cst_30 = arith.constant dense<0.000000e+00> : vector<8x384xf32>
    %54 = tpu.matmul %17, %13, %cst_30 {dimension_numbers = #tpu.dot_dimension_numbers<[1], [0], [0], [1], [0, 0, 1, 1], [], []>} : vector<8x128xf32>, vector<128x384xf32>, vector<8x384xf32> -> vector<8x384xf32>
    %55 = vector.extract_strided_slice %53 {offsets = [0, 0], sizes = [8, 128], strides = [1, 1]} : vector<8x384xf32> to vector<8x128xf32>
    %56 = vector.extract_strided_slice %54 {offsets = [0, 0], sizes = [8, 128], strides = [1, 1]} : vector<8x384xf32> to vector<8x128xf32>
    %57 = arith.addf %55, %56 : vector<8x128xf32>
    %58 = arith.negf %57 : vector<8x128xf32>
    %59 = math.exp %58 : vector<8x128xf32>
    %cst_31 = arith.constant 1.000000e+00 : f32
    %60 = vector.broadcast %cst_31 : f32 to vector<8x128xf32>
    %61 = arith.addf %60, %59 : vector<8x128xf32>
    %62 = arith.divf %60, %61 : vector<8x128xf32>
    %63 = vector.extract_strided_slice %53 {offsets = [0, 128], sizes = [8, 128], strides = [1, 1]} : vector<8x384xf32> to vector<8x128xf32>
    %64 = vector.extract_strided_slice %54 {offsets = [0, 128], sizes = [8, 128], strides = [1, 1]} : vector<8x384xf32> to vector<8x128xf32>
    %65 = arith.addf %63, %64 : vector<8x128xf32>
    %66 = arith.negf %65 : vector<8x128xf32>
    %67 = math.exp %66 : vector<8x128xf32>
    %cst_32 = arith.constant 1.000000e+00 : f32
    %68 = vector.broadcast %cst_32 : f32 to vector<8x128xf32>
    %69 = arith.addf %68, %67 : vector<8x128xf32>
    %70 = arith.divf %68, %69 : vector<8x128xf32>
    %71 = vector.extract_strided_slice %53 {offsets = [0, 256], sizes = [8, 128], strides = [1, 1]} : vector<8x384xf32> to vector<8x128xf32>
    %72 = vector.extract_strided_slice %54 {offsets = [0, 256], sizes = [8, 128], strides = [1, 1]} : vector<8x384xf32> to vector<8x128xf32>
    %73 = vector.broadcast %15 : vector<1x128xf32> to vector<8x128xf32>
    %74 = arith.addf %72, %73 : vector<8x128xf32>
    %75 = arith.mulf %62, %74 : vector<8x128xf32>
    %76 = arith.addf %71, %75 : vector<8x128xf32>
    %77 = math.tanh %76 : vector<8x128xf32>
    %cst_33 = arith.constant 1.000000e+00 : f32
    %78 = vector.broadcast %cst_33 : f32 to vector<8x128xf32>
    %79 = arith.subf %78, %70 : vector<8x128xf32>
    %80 = arith.mulf %79, %77 : vector<8x128xf32>
    %81 = arith.mulf %70, %17 : vector<8x128xf32>
    %82 = arith.addf %80, %81 : vector<8x128xf32>
    %83 = arith.index_cast %c0_i32 : i32 to index
    %c0_34 = arith.constant 0 : index
    %c0_35 = arith.constant 0 : index
    %c0_36 = arith.constant 0 : index
    %84 = vector.load %arg8[%83, %c0_34, %c0_35, %c0_36] : memref<8x2x8x128xf32, #tpu.memory_space<vmem>>, vector<1x1x8x128xf32>
    %85 = vector.shape_cast %84 : vector<1x1x8x128xf32> to vector<8x128xf32>
    %86 = vector.shape_cast %50 : vector<8x128xf32> to vector<1x1x8x128xf32>
    tpu.vector_store %arg8[%83, %c0_34, %c0_35, %c0_36], %86 {strides = array<i32>} : memref<8x2x8x128xf32, #tpu.memory_space<vmem>>, vector<1x1x8x128xf32>,
    %87 = arith.index_cast %18 : i32 to index
    %c1 = arith.constant 1 : index
    %c0_37 = arith.constant 0 : index
    %c0_38 = arith.constant 0 : index
    %88 = vector.load %arg8[%87, %c1, %c0_37, %c0_38] : memref<8x2x8x128xf32, #tpu.memory_space<vmem>>, vector<1x1x8x128xf32>
    %89 = vector.shape_cast %88 : vector<1x1x8x128xf32> to vector<8x128xf32>
    %90 = vector.shape_cast %82 : vector<8x128xf32> to vector<1x1x8x128xf32>
    tpu.vector_store %arg8[%87, %c1, %c0_37, %c0_38], %90 {strides = array<i32>} : memref<8x2x8x128xf32, #tpu.memory_space<vmem>>, vector<1x1x8x128xf32>,
    %91 = vector.broadcast %c0_i32 : i32 to vector<8x1xi32>
    %92 = arith.cmpi eq, %16, %91 : vector<8x1xi32>
    %93 = vector.shape_cast %92 : vector<8x1xi1> to vector<8x1xi1>
    %94 = vector.broadcast %93 : vector<8x1xi1> to vector<8x128xi1>
    %95 = arith.select %94, %50, %17 : vector<8x128xi1>, vector<8x128xf32>
    %c1_i32 = arith.constant 1 : i32
    %c7_i32_39 = arith.constant 7 : i32
    %96 = arith.subi %c7_i32_39, %c1_i32 : i32
    %97 = arith.index_cast %c1_i32 : i32 to index
    %c0_40 = arith.constant 0 : index
    %c0_41 = arith.constant 0 : index
    %98 = vector.load %arg10[%97, %c0_40, %c0_41] : memref<8x8x384xf32, #tpu.memory_space<vmem>>, vector<1x8x384xf32>
    %99 = vector.shape_cast %98 : vector<1x8x384xf32> to vector<8x384xf32>
    %cst_42 = arith.constant dense<0.000000e+00> : vector<8x384xf32>
    %100 = tpu.matmul %50, %12, %cst_42 {dimension_numbers = #tpu.dot_dimension_numbers<[1], [0], [0], [1], [0, 0, 1, 1], [], []>} : vector<8x128xf32>, vector<128x384xf32>, vector<8x384xf32> -> vector<8x384xf32>
    %101 = vector.extract_strided_slice %99 {offsets = [0, 0], sizes = [8, 128], strides = [1, 1]} : vector<8x384xf32> to vector<8x128xf32>
    %102 = vector.extract_strided_slice %100 {offsets = [0, 0], sizes = [8, 128], strides = [1, 1]} : vector<8x384xf32> to vector<8x128xf32>
    %103 = arith.addf %101, %102 : vector<8x128xf32>
    %104 = arith.negf %103 : vector<8x128xf32>
    %105 = math.exp %104 : vector<8x128xf32>
    %cst_43 = arith.constant 1.000000e+00 : f32
    %106 = vector.broadcast %cst_43 : f32 to vector<8x128xf32>
    %107 = arith.addf %106, %105 : vector<8x128xf32>
    %108 = arith.divf %106, %107 : vector<8x128xf32>
    %109 = vector.extract_strided_slice %99 {offsets = [0, 128], sizes = [8, 128], strides = [1, 1]} : vector<8x384xf32> to vector<8x128xf32>
    %110 = vector.extract_strided_slice %100 {offsets = [0, 128], sizes = [8, 128], strides = [1, 1]} : vector<8x384xf32> to vector<8x128xf32>
    %111 = arith.addf %109, %110 : vector<8x128xf32>
    %112 = arith.negf %111 : vector<8x128xf32>
    %113 = math.exp %112 : vector<8x128xf32>
    %cst_44 = arith.constant 1.000000e+00 : f32
    %114 = vector.broadcast %cst_44 : f32 to vector<8x128xf32>
    %115 = arith.addf %114, %113 : vector<8x128xf32>
    %116 = arith.divf %114, %115 : vector<8x128xf32>
    %117 = vector.extract_strided_slice %99 {offsets = [0, 256], sizes = [8, 128], strides = [1, 1]} : vector<8x384xf32> to vector<8x128xf32>
    %118 = vector.extract_strided_slice %100 {offsets = [0, 256], sizes = [8, 128], strides = [1, 1]} : vector<8x384xf32> to vector<8x128xf32>
    %119 = vector.broadcast %14 : vector<1x128xf32> to vector<8x128xf32>
    %120 = arith.addf %118, %119 : vector<8x128xf32>
    %121 = arith.mulf %108, %120 : vector<8x128xf32>
    %122 = arith.addf %117, %121 : vector<8x128xf32>
    %123 = math.tanh %122 : vector<8x128xf32>
    %cst_45 = arith.constant 1.000000e+00 : f32
    %124 = vector.broadcast %cst_45 : f32 to vector<8x128xf32>
    %125 = arith.subf %124, %116 : vector<8x128xf32>
    %126 = arith.mulf %125, %123 : vector<8x128xf32>
    %127 = arith.mulf %116, %50 : vector<8x128xf32>
    %128 = arith.addf %126, %127 : vector<8x128xf32>
    %129 = arith.index_cast %96 : i32 to index
    %c0_46 = arith.constant 0 : index
    %c0_47 = arith.constant 0 : index
    %130 = vector.load %arg11[%129, %c0_46, %c0_47] : memref<8x8x384xf32, #tpu.memory_space<vmem>>, vector<1x8x384xf32>
    %131 = vector.shape_cast %130 : vector<1x8x384xf32> to vector<8x384xf32>
    %cst_48 = arith.constant dense<0.000000e+00> : vector<8x384xf32>
    %132 = tpu.matmul %82, %13, %cst_48 {dimension_numbers = #tpu.dot_dimension_numbers<[1], [0], [0], [1], [0, 0, 1, 1], [], []>} : vector<8x128xf32>, vector<128x384xf32>, vector<8x384xf32> -> vector<8x384xf32>
    %133 = vector.extract_strided_slice %131 {offsets = [0, 0], sizes = [8, 128], strides = [1, 1]} : vector<8x384xf32> to vector<8x128xf32>
    %134 = vector.extract_strided_slice %132 {offsets = [0, 0], sizes = [8, 128], strides = [1, 1]} : vector<8x384xf32> to vector<8x128xf32>
    %135 = arith.addf %133, %134 : vector<8x128xf32>
    %136 = arith.negf %135 : vector<8x128xf32>
    %137 = math.exp %136 : vector<8x128xf32>
    %cst_49 = arith.constant 1.000000e+00 : f32
    %138 = vector.broadcast %cst_49 : f32 to vector<8x128xf32>
    %139 = arith.addf %138, %137 : vector<8x128xf32>
    %140 = arith.divf %138, %139 : vector<8x128xf32>
    %141 = vector.extract_strided_slice %131 {offsets = [0, 128], sizes = [8, 128], strides = [1, 1]} : vector<8x384xf32> to vector<8x128xf32>
    %142 = vector.extract_strided_slice %132 {offsets = [0, 128], sizes = [8, 128], strides = [1, 1]} : vector<8x384xf32> to vector<8x128xf32>
    %143 = arith.addf %141, %142 : vector<8x128xf32>
    %144 = arith.negf %143 : vector<8x128xf32>
    %145 = math.exp %144 : vector<8x128xf32>
    %cst_50 = arith.constant 1.000000e+00 : f32
    %146 = vector.broadcast %cst_50 : f32 to vector<8x128xf32>
    %147 = arith.addf %146, %145 : vector<8x128xf32>
    %148 = arith.divf %146, %147 : vector<8x128xf32>
    %149 = vector.extract_strided_slice %131 {offsets = [0, 256], sizes = [8, 128], strides = [1, 1]} : vector<8x384xf32> to vector<8x128xf32>
    %150 = vector.extract_strided_slice %132 {offsets = [0, 256], sizes = [8, 128], strides = [1, 1]} : vector<8x384xf32> to vector<8x128xf32>
    %151 = vector.broadcast %15 : vector<1x128xf32> to vector<8x128xf32>
    %152 = arith.addf %150, %151 : vector<8x128xf32>
    %153 = arith.mulf %140, %152 : vector<8x128xf32>
    %154 = arith.addf %149, %153 : vector<8x128xf32>
    %155 = math.tanh %154 : vector<8x128xf32>
    %cst_51 = arith.constant 1.000000e+00 : f32
    %156 = vector.broadcast %cst_51 : f32 to vector<8x128xf32>
    %157 = arith.subf %156, %148 : vector<8x128xf32>
    %158 = arith.mulf %157, %155 : vector<8x128xf32>
    %159 = arith.mulf %148, %82 : vector<8x128xf32>
    %160 = arith.addf %158, %159 : vector<8x128xf32>
    %161 = arith.index_cast %c1_i32 : i32 to index
    %c0_52 = arith.constant 0 : index
    %c0_53 = arith.constant 0 : index
    %c0_54 = arith.constant 0 : index
    %162 = vector.load %arg8[%161, %c0_52, %c0_53, %c0_54] : memref<8x2x8x128xf32, #tpu.memory_space<vmem>>, vector<1x1x8x128xf32>
    %163 = vector.shape_cast %162 : vector<1x1x8x128xf32> to vector<8x128xf32>
    %164 = vector.shape_cast %128 : vector<8x128xf32> to vector<1x1x8x128xf32>
    tpu.vector_store %arg8[%161, %c0_52, %c0_53, %c0_54], %164 {strides = array<i32>} : memref<8x2x8x128xf32, #tpu.memory_space<vmem>>, vector<1x1x8x128xf32>,
    %165 = arith.index_cast %96 : i32 to index
    %c1_55 = arith.constant 1 : index
    %c0_56 = arith.constant 0 : index
    %c0_57 = arith.constant 0 : index
    %166 = vector.load %arg8[%165, %c1_55, %c0_56, %c0_57] : memref<8x2x8x128xf32, #tpu.memory_space<vmem>>, vector<1x1x8x128xf32>
    %167 = vector.shape_cast %166 : vector<1x1x8x128xf32> to vector<8x128xf32>
    %168 = vector.shape_cast %160 : vector<8x128xf32> to vector<1x1x8x128xf32>
    tpu.vector_store %arg8[%165, %c1_55, %c0_56, %c0_57], %168 {strides = array<i32>} : memref<8x2x8x128xf32, #tpu.memory_space<vmem>>, vector<1x1x8x128xf32>,
    %169 = vector.broadcast %c1_i32 : i32 to vector<8x1xi32>
    %170 = arith.cmpi eq, %16, %169 : vector<8x1xi32>
    %171 = vector.shape_cast %170 : vector<8x1xi1> to vector<8x1xi1>
    %172 = vector.broadcast %171 : vector<8x1xi1> to vector<8x128xi1>
    %173 = arith.select %172, %128, %95 : vector<8x128xi1>, vector<8x128xf32>
    %c2_i32 = arith.constant 2 : i32
    %c7_i32_58 = arith.constant 7 : i32
    %174 = arith.subi %c7_i32_58, %c2_i32 : i32
    %175 = arith.index_cast %c2_i32 : i32 to index
    %c0_59 = arith.constant 0 : index
    %c0_60 = arith.constant 0 : index
    %176 = vector.load %arg10[%175, %c0_59, %c0_60] : memref<8x8x384xf32, #tpu.memory_space<vmem>>, vector<1x8x384xf32>
    %177 = vector.shape_cast %176 : vector<1x8x384xf32> to vector<8x384xf32>
    %cst_61 = arith.constant dense<0.000000e+00> : vector<8x384xf32>
    %178 = tpu.matmul %128, %12, %cst_61 {dimension_numbers = #tpu.dot_dimension_numbers<[1], [0], [0], [1], [0, 0, 1, 1], [], []>} : vector<8x128xf32>, vector<128x384xf32>, vector<8x384xf32> -> vector<8x384xf32>
    %179 = vector.extract_strided_slice %177 {offsets = [0, 0], sizes = [8, 128], strides = [1, 1]} : vector<8x384xf32> to vector<8x128xf32>
    %180 = vector.extract_strided_slice %178 {offsets = [0, 0], sizes = [8, 128], strides = [1, 1]} : vector<8x384xf32> to vector<8x128xf32>
    %181 = arith.addf %179, %180 : vector<8x128xf32>
    %182 = arith.negf %181 : vector<8x128xf32>
    %183 = math.exp %182 : vector<8x128xf32>
    %cst_62 = arith.constant 1.000000e+00 : f32
    %184 = vector.broadcast %cst_62 : f32 to vector<8x128xf32>
    %185 = arith.addf %184, %183 : vector<8x128xf32>
    %186 = arith.divf %184, %185 : vector<8x128xf32>
    %187 = vector.extract_strided_slice %177 {offsets = [0, 128], sizes = [8, 128], strides = [1, 1]} : vector<8x384xf32> to vector<8x128xf32>
    %188 = vector.extract_strided_slice %178 {offsets = [0, 128], sizes = [8, 128], strides = [1, 1]} : vector<8x384xf32> to vector<8x128xf32>
    %189 = arith.addf %187, %188 : vector<8x128xf32>
    %190 = arith.negf %189 : vector<8x128xf32>
    %191 = math.exp %190 : vector<8x128xf32>
    %cst_63 = arith.constant 1.000000e+00 : f32
    %192 = vector.broadcast %cst_63 : f32 to vector<8x128xf32>
    %193 = arith.addf %192, %191 : vector<8x128xf32>
    %194 = arith.divf %192, %193 : vector<8x128xf32>
    %195 = vector.extract_strided_slice %177 {offsets = [0, 256], sizes = [8, 128], strides = [1, 1]} : vector<8x384xf32> to vector<8x128xf32>
    %196 = vector.extract_strided_slice %178 {offsets = [0, 256], sizes = [8, 128], strides = [1, 1]} : vector<8x384xf32> to vector<8x128xf32>
    %197 = vector.broadcast %14 : vector<1x128xf32> to vector<8x128xf32>
    %198 = arith.addf %196, %197 : vector<8x128xf32>
    %199 = arith.mulf %186, %198 : vector<8x128xf32>
    %200 = arith.addf %195, %199 : vector<8x128xf32>
    %201 = math.tanh %200 : vector<8x128xf32>
    %cst_64 = arith.constant 1.000000e+00 : f32
    %202 = vector.broadcast %cst_64 : f32 to vector<8x128xf32>
    %203 = arith.subf %202, %194 : vector<8x128xf32>
    %204 = arith.mulf %203, %201 : vector<8x128xf32>
    %205 = arith.mulf %194, %128 : vector<8x128xf32>
    %206 = arith.addf %204, %205 : vector<8x128xf32>
    %207 = arith.index_cast %174 : i32 to index
    %c0_65 = arith.constant 0 : index
    %c0_66 = arith.constant 0 : index
    %208 = vector.load %arg11[%207, %c0_65, %c0_66] : memref<8x8x384xf32, #tpu.memory_space<vmem>>, vector<1x8x384xf32>
    %209 = vector.shape_cast %208 : vector<1x8x384xf32> to vector<8x384xf32>
    %cst_67 = arith.constant dense<0.000000e+00> : vector<8x384xf32>
    %210 = tpu.matmul %160, %13, %cst_67 {dimension_numbers = #tpu.dot_dimension_numbers<[1], [0], [0], [1], [0, 0, 1, 1], [], []>} : vector<8x128xf32>, vector<128x384xf32>, vector<8x384xf32> -> vector<8x384xf32>
    %211 = vector.extract_strided_slice %209 {offsets = [0, 0], sizes = [8, 128], strides = [1, 1]} : vector<8x384xf32> to vector<8x128xf32>
    %212 = vector.extract_strided_slice %210 {offsets = [0, 0], sizes = [8, 128], strides = [1, 1]} : vector<8x384xf32> to vector<8x128xf32>
    %213 = arith.addf %211, %212 : vector<8x128xf32>
    %214 = arith.negf %213 : vector<8x128xf32>
    %215 = math.exp %214 : vector<8x128xf32>
    %cst_68 = arith.constant 1.000000e+00 : f32
    %216 = vector.broadcast %cst_68 : f32 to vector<8x128xf32>
    %217 = arith.addf %216, %215 : vector<8x128xf32>
    %218 = arith.divf %216, %217 : vector<8x128xf32>
    %219 = vector.extract_strided_slice %209 {offsets = [0, 128], sizes = [8, 128], strides = [1, 1]} : vector<8x384xf32> to vector<8x128xf32>
    %220 = vector.extract_strided_slice %210 {offsets = [0, 128], sizes = [8, 128], strides = [1, 1]} : vector<8x384xf32> to vector<8x128xf32>
    %221 = arith.addf %219, %220 : vector<8x128xf32>
    %222 = arith.negf %221 : vector<8x128xf32>
    %223 = math.exp %222 : vector<8x128xf32>
    %cst_69 = arith.constant 1.000000e+00 : f32
    %224 = vector.broadcast %cst_69 : f32 to vector<8x128xf32>
    %225 = arith.addf %224, %223 : vector<8x128xf32>
    %226 = arith.divf %224, %225 : vector<8x128xf32>
    %227 = vector.extract_strided_slice %209 {offsets = [0, 256], sizes = [8, 128], strides = [1, 1]} : vector<8x384xf32> to vector<8x128xf32>
    %228 = vector.extract_strided_slice %210 {offsets = [0, 256], sizes = [8, 128], strides = [1, 1]} : vector<8x384xf32> to vector<8x128xf32>
    %229 = vector.broadcast %15 : vector<1x128xf32> to vector<8x128xf32>
    %230 = arith.addf %228, %229 : vector<8x128xf32>
    %231 = arith.mulf %218, %230 : vector<8x128xf32>
    %232 = arith.addf %227, %231 : vector<8x128xf32>
    %233 = math.tanh %232 : vector<8x128xf32>
    %cst_70 = arith.constant 1.000000e+00 : f32
    %234 = vector.broadcast %cst_70 : f32 to vector<8x128xf32>
    %235 = arith.subf %234, %226 : vector<8x128xf32>
    %236 = arith.mulf %235, %233 : vector<8x128xf32>
    %237 = arith.mulf %226, %160 : vector<8x128xf32>
    %238 = arith.addf %236, %237 : vector<8x128xf32>
    %239 = arith.index_cast %c2_i32 : i32 to index
    %c0_71 = arith.constant 0 : index
    %c0_72 = arith.constant 0 : index
    %c0_73 = arith.constant 0 : index
    %240 = vector.load %arg8[%239, %c0_71, %c0_72, %c0_73] : memref<8x2x8x128xf32, #tpu.memory_space<vmem>>, vector<1x1x8x128xf32>
    %241 = vector.shape_cast %240 : vector<1x1x8x128xf32> to vector<8x128xf32>
    %242 = vector.shape_cast %206 : vector<8x128xf32> to vector<1x1x8x128xf32>
    tpu.vector_store %arg8[%239, %c0_71, %c0_72, %c0_73], %242 {strides = array<i32>} : memref<8x2x8x128xf32, #tpu.memory_space<vmem>>, vector<1x1x8x128xf32>,
    %243 = arith.index_cast %174 : i32 to index
    %c1_74 = arith.constant 1 : index
    %c0_75 = arith.constant 0 : index
    %c0_76 = arith.constant 0 : index
    %244 = vector.load %arg8[%243, %c1_74, %c0_75, %c0_76] : memref<8x2x8x128xf32, #tpu.memory_space<vmem>>, vector<1x1x8x128xf32>
    %245 = vector.shape_cast %244 : vector<1x1x8x128xf32> to vector<8x128xf32>
    %246 = vector.shape_cast %238 : vector<8x128xf32> to vector<1x1x8x128xf32>
    tpu.vector_store %arg8[%243, %c1_74, %c0_75, %c0_76], %246 {strides = array<i32>} : memref<8x2x8x128xf32, #tpu.memory_space<vmem>>, vector<1x1x8x128xf32>,
    %247 = vector.broadcast %c2_i32 : i32 to vector<8x1xi32>
    %248 = arith.cmpi eq, %16, %247 : vector<8x1xi32>
    %249 = vector.shape_cast %248 : vector<8x1xi1> to vector<8x1xi1>
    %250 = vector.broadcast %249 : vector<8x1xi1> to vector<8x128xi1>
    %251 = arith.select %250, %206, %173 : vector<8x128xi1>, vector<8x128xf32>
    %c3_i32 = arith.constant 3 : i32
    %c7_i32_77 = arith.constant 7 : i32
    %252 = arith.subi %c7_i32_77, %c3_i32 : i32
    %253 = arith.index_cast %c3_i32 : i32 to index
    %c0_78 = arith.constant 0 : index
    %c0_79 = arith.constant 0 : index
    %254 = vector.load %arg10[%253, %c0_78, %c0_79] : memref<8x8x384xf32, #tpu.memory_space<vmem>>, vector<1x8x384xf32>
    %255 = vector.shape_cast %254 : vector<1x8x384xf32> to vector<8x384xf32>
    %cst_80 = arith.constant dense<0.000000e+00> : vector<8x384xf32>
    %256 = tpu.matmul %206, %12, %cst_80 {dimension_numbers = #tpu.dot_dimension_numbers<[1], [0], [0], [1], [0, 0, 1, 1], [], []>} : vector<8x128xf32>, vector<128x384xf32>, vector<8x384xf32> -> vector<8x384xf32>
    %257 = vector.extract_strided_slice %255 {offsets = [0, 0], sizes = [8, 128], strides = [1, 1]} : vector<8x384xf32> to vector<8x128xf32>
    %258 = vector.extract_strided_slice %256 {offsets = [0, 0], sizes = [8, 128], strides = [1, 1]} : vector<8x384xf32> to vector<8x128xf32>
    %259 = arith.addf %257, %258 : vector<8x128xf32>
    %260 = arith.negf %259 : vector<8x128xf32>
    %261 = math.exp %260 : vector<8x128xf32>
    %cst_81 = arith.constant 1.000000e+00 : f32
    %262 = vector.broadcast %cst_81 : f32 to vector<8x128xf32>
    %263 = arith.addf %262, %261 : vector<8x128xf32>
    %264 = arith.divf %262, %263 : vector<8x128xf32>
    %265 = vector.extract_strided_slice %255 {offsets = [0, 128], sizes = [8, 128], strides = [1, 1]} : vector<8x384xf32> to vector<8x128xf32>
    %266 = vector.extract_strided_slice %256 {offsets = [0, 128], sizes = [8, 128], strides = [1, 1]} : vector<8x384xf32> to vector<8x128xf32>
    %267 = arith.addf %265, %266 : vector<8x128xf32>
    %268 = arith.negf %267 : vector<8x128xf32>
    %269 = math.exp %268 : vector<8x128xf32>
    %cst_82 = arith.constant 1.000000e+00 : f32
    %270 = vector.broadcast %cst_82 : f32 to vector<8x128xf32>
    %271 = arith.addf %270, %269 : vector<8x128xf32>
    %272 = arith.divf %270, %271 : vector<8x128xf32>
    %273 = vector.extract_strided_slice %255 {offsets = [0, 256], sizes = [8, 128], strides = [1, 1]} : vector<8x384xf32> to vector<8x128xf32>
    %274 = vector.extract_strided_slice %256 {offsets = [0, 256], sizes = [8, 128], strides = [1, 1]} : vector<8x384xf32> to vector<8x128xf32>
    %275 = vector.broadcast %14 : vector<1x128xf32> to vector<8x128xf32>
    %276 = arith.addf %274, %275 : vector<8x128xf32>
    %277 = arith.mulf %264, %276 : vector<8x128xf32>
    %278 = arith.addf %273, %277 : vector<8x128xf32>
    %279 = math.tanh %278 : vector<8x128xf32>
    %cst_83 = arith.constant 1.000000e+00 : f32
    %280 = vector.broadcast %cst_83 : f32 to vector<8x128xf32>
    %281 = arith.subf %280, %272 : vector<8x128xf32>
    %282 = arith.mulf %281, %279 : vector<8x128xf32>
    %283 = arith.mulf %272, %206 : vector<8x128xf32>
    %284 = arith.addf %282, %283 : vector<8x128xf32>
    %285 = arith.index_cast %252 : i32 to index
    %c0_84 = arith.constant 0 : index
    %c0_85 = arith.constant 0 : index
    %286 = vector.load %arg11[%285, %c0_84, %c0_85] : memref<8x8x384xf32, #tpu.memory_space<vmem>>, vector<1x8x384xf32>
    %287 = vector.shape_cast %286 : vector<1x8x384xf32> to vector<8x384xf32>
    %cst_86 = arith.constant dense<0.000000e+00> : vector<8x384xf32>
    %288 = tpu.matmul %238, %13, %cst_86 {dimension_numbers = #tpu.dot_dimension_numbers<[1], [0], [0], [1], [0, 0, 1, 1], [], []>} : vector<8x128xf32>, vector<128x384xf32>, vector<8x384xf32> -> vector<8x384xf32>
    %289 = vector.extract_strided_slice %287 {offsets = [0, 0], sizes = [8, 128], strides = [1, 1]} : vector<8x384xf32> to vector<8x128xf32>
    %290 = vector.extract_strided_slice %288 {offsets = [0, 0], sizes = [8, 128], strides = [1, 1]} : vector<8x384xf32> to vector<8x128xf32>
    %291 = arith.addf %289, %290 : vector<8x128xf32>
    %292 = arith.negf %291 : vector<8x128xf32>
    %293 = math.exp %292 : vector<8x128xf32>
    %cst_87 = arith.constant 1.000000e+00 : f32
    %294 = vector.broadcast %cst_87 : f32 to vector<8x128xf32>
    %295 = arith.addf %294, %293 : vector<8x128xf32>
    %296 = arith.divf %294, %295 : vector<8x128xf32>
    %297 = vector.extract_strided_slice %287 {offsets = [0, 128], sizes = [8, 128], strides = [1, 1]} : vector<8x384xf32> to vector<8x128xf32>
    %298 = vector.extract_strided_slice %288 {offsets = [0, 128], sizes = [8, 128], strides = [1, 1]} : vector<8x384xf32> to vector<8x128xf32>
    %299 = arith.addf %297, %298 : vector<8x128xf32>
    %300 = arith.negf %299 : vector<8x128xf32>
    %301 = math.exp %300 : vector<8x128xf32>
    %cst_88 = arith.constant 1.000000e+00 : f32
    %302 = vector.broadcast %cst_88 : f32 to vector<8x128xf32>
    %303 = arith.addf %302, %301 : vector<8x128xf32>
    %304 = arith.divf %302, %303 : vector<8x128xf32>
    %305 = vector.extract_strided_slice %287 {offsets = [0, 256], sizes = [8, 128], strides = [1, 1]} : vector<8x384xf32> to vector<8x128xf32>
    %306 = vector.extract_strided_slice %288 {offsets = [0, 256], sizes = [8, 128], strides = [1, 1]} : vector<8x384xf32> to vector<8x128xf32>
    %307 = vector.broadcast %15 : vector<1x128xf32> to vector<8x128xf32>
    %308 = arith.addf %306, %307 : vector<8x128xf32>
    %309 = arith.mulf %296, %308 : vector<8x128xf32>
    %310 = arith.addf %305, %309 : vector<8x128xf32>
    %311 = math.tanh %310 : vector<8x128xf32>
    %cst_89 = arith.constant 1.000000e+00 : f32
    %312 = vector.broadcast %cst_89 : f32 to vector<8x128xf32>
    %313 = arith.subf %312, %304 : vector<8x128xf32>
    %314 = arith.mulf %313, %311 : vector<8x128xf32>
    %315 = arith.mulf %304, %238 : vector<8x128xf32>
    %316 = arith.addf %314, %315 : vector<8x128xf32>
    %317 = arith.index_cast %c3_i32 : i32 to index
    %c0_90 = arith.constant 0 : index
    %c0_91 = arith.constant 0 : index
    %c0_92 = arith.constant 0 : index
    %318 = vector.load %arg8[%317, %c0_90, %c0_91, %c0_92] : memref<8x2x8x128xf32, #tpu.memory_space<vmem>>, vector<1x1x8x128xf32>
    %319 = vector.shape_cast %318 : vector<1x1x8x128xf32> to vector<8x128xf32>
    %320 = vector.shape_cast %284 : vector<8x128xf32> to vector<1x1x8x128xf32>
    tpu.vector_store %arg8[%317, %c0_90, %c0_91, %c0_92], %320 {strides = array<i32>} : memref<8x2x8x128xf32, #tpu.memory_space<vmem>>, vector<1x1x8x128xf32>,
    %321 = arith.index_cast %252 : i32 to index
    %c1_93 = arith.constant 1 : index
    %c0_94 = arith.constant 0 : index
    %c0_95 = arith.constant 0 : index
    %322 = vector.load %arg8[%321, %c1_93, %c0_94, %c0_95] : memref<8x2x8x128xf32, #tpu.memory_space<vmem>>, vector<1x1x8x128xf32>
    %323 = vector.shape_cast %322 : vector<1x1x8x128xf32> to vector<8x128xf32>
    %324 = vector.shape_cast %316 : vector<8x128xf32> to vector<1x1x8x128xf32>
    tpu.vector_store %arg8[%321, %c1_93, %c0_94, %c0_95], %324 {strides = array<i32>} : memref<8x2x8x128xf32, #tpu.memory_space<vmem>>, vector<1x1x8x128xf32>,
    %325 = vector.broadcast %c3_i32 : i32 to vector<8x1xi32>
    %326 = arith.cmpi eq, %16, %325 : vector<8x1xi32>
    %327 = vector.shape_cast %326 : vector<8x1xi1> to vector<8x1xi1>
    %328 = vector.broadcast %327 : vector<8x1xi1> to vector<8x128xi1>
    %329 = arith.select %328, %284, %251 : vector<8x128xi1>, vector<8x128xf32>
    %c4_i32 = arith.constant 4 : i32
    %c7_i32_96 = arith.constant 7 : i32
    %330 = arith.subi %c7_i32_96, %c4_i32 : i32
    %331 = arith.index_cast %c4_i32 : i32 to index
    %c0_97 = arith.constant 0 : index
    %c0_98 = arith.constant 0 : index
    %332 = vector.load %arg10[%331, %c0_97, %c0_98] : memref<8x8x384xf32, #tpu.memory_space<vmem>>, vector<1x8x384xf32>
    %333 = vector.shape_cast %332 : vector<1x8x384xf32> to vector<8x384xf32>
    %cst_99 = arith.constant dense<0.000000e+00> : vector<8x384xf32>
    %334 = tpu.matmul %284, %12, %cst_99 {dimension_numbers = #tpu.dot_dimension_numbers<[1], [0], [0], [1], [0, 0, 1, 1], [], []>} : vector<8x128xf32>, vector<128x384xf32>, vector<8x384xf32> -> vector<8x384xf32>
    %335 = vector.extract_strided_slice %333 {offsets = [0, 0], sizes = [8, 128], strides = [1, 1]} : vector<8x384xf32> to vector<8x128xf32>
    %336 = vector.extract_strided_slice %334 {offsets = [0, 0], sizes = [8, 128], strides = [1, 1]} : vector<8x384xf32> to vector<8x128xf32>
    %337 = arith.addf %335, %336 : vector<8x128xf32>
    %338 = arith.negf %337 : vector<8x128xf32>
    %339 = math.exp %338 : vector<8x128xf32>
    %cst_100 = arith.constant 1.000000e+00 : f32
    %340 = vector.broadcast %cst_100 : f32 to vector<8x128xf32>
    %341 = arith.addf %340, %339 : vector<8x128xf32>
    %342 = arith.divf %340, %341 : vector<8x128xf32>
    %343 = vector.extract_strided_slice %333 {offsets = [0, 128], sizes = [8, 128], strides = [1, 1]} : vector<8x384xf32> to vector<8x128xf32>
    %344 = vector.extract_strided_slice %334 {offsets = [0, 128], sizes = [8, 128], strides = [1, 1]} : vector<8x384xf32> to vector<8x128xf32>
    %345 = arith.addf %343, %344 : vector<8x128xf32>
    %346 = arith.negf %345 : vector<8x128xf32>
    %347 = math.exp %346 : vector<8x128xf32>
    %cst_101 = arith.constant 1.000000e+00 : f32
    %348 = vector.broadcast %cst_101 : f32 to vector<8x128xf32>
    %349 = arith.addf %348, %347 : vector<8x128xf32>
    %350 = arith.divf %348, %349 : vector<8x128xf32>
    %351 = vector.extract_strided_slice %333 {offsets = [0, 256], sizes = [8, 128], strides = [1, 1]} : vector<8x384xf32> to vector<8x128xf32>
    %352 = vector.extract_strided_slice %334 {offsets = [0, 256], sizes = [8, 128], strides = [1, 1]} : vector<8x384xf32> to vector<8x128xf32>
    %353 = vector.broadcast %14 : vector<1x128xf32> to vector<8x128xf32>
    %354 = arith.addf %352, %353 : vector<8x128xf32>
    %355 = arith.mulf %342, %354 : vector<8x128xf32>
    %356 = arith.addf %351, %355 : vector<8x128xf32>
    %357 = math.tanh %356 : vector<8x128xf32>
    %cst_102 = arith.constant 1.000000e+00 : f32
    %358 = vector.broadcast %cst_102 : f32 to vector<8x128xf32>
    %359 = arith.subf %358, %350 : vector<8x128xf32>
    %360 = arith.mulf %359, %357 : vector<8x128xf32>
    %361 = arith.mulf %350, %284 : vector<8x128xf32>
    %362 = arith.addf %360, %361 : vector<8x128xf32>
    %363 = arith.index_cast %330 : i32 to index
    %c0_103 = arith.constant 0 : index
    %c0_104 = arith.constant 0 : index
    %364 = vector.load %arg11[%363, %c0_103, %c0_104] : memref<8x8x384xf32, #tpu.memory_space<vmem>>, vector<1x8x384xf32>
    %365 = vector.shape_cast %364 : vector<1x8x384xf32> to vector<8x384xf32>
    %cst_105 = arith.constant dense<0.000000e+00> : vector<8x384xf32>
    %366 = tpu.matmul %316, %13, %cst_105 {dimension_numbers = #tpu.dot_dimension_numbers<[1], [0], [0], [1], [0, 0, 1, 1], [], []>} : vector<8x128xf32>, vector<128x384xf32>, vector<8x384xf32> -> vector<8x384xf32>
    %367 = vector.extract_strided_slice %365 {offsets = [0, 0], sizes = [8, 128], strides = [1, 1]} : vector<8x384xf32> to vector<8x128xf32>
    %368 = vector.extract_strided_slice %366 {offsets = [0, 0], sizes = [8, 128], strides = [1, 1]} : vector<8x384xf32> to vector<8x128xf32>
    %369 = arith.addf %367, %368 : vector<8x128xf32>
    %370 = arith.negf %369 : vector<8x128xf32>
    %371 = math.exp %370 : vector<8x128xf32>
    %cst_106 = arith.constant 1.000000e+00 : f32
    %372 = vector.broadcast %cst_106 : f32 to vector<8x128xf32>
    %373 = arith.addf %372, %371 : vector<8x128xf32>
    %374 = arith.divf %372, %373 : vector<8x128xf32>
    %375 = vector.extract_strided_slice %365 {offsets = [0, 128], sizes = [8, 128], strides = [1, 1]} : vector<8x384xf32> to vector<8x128xf32>
    %376 = vector.extract_strided_slice %366 {offsets = [0, 128], sizes = [8, 128], strides = [1, 1]} : vector<8x384xf32> to vector<8x128xf32>
    %377 = arith.addf %375, %376 : vector<8x128xf32>
    %378 = arith.negf %377 : vector<8x128xf32>
    %379 = math.exp %378 : vector<8x128xf32>
    %cst_107 = arith.constant 1.000000e+00 : f32
    %380 = vector.broadcast %cst_107 : f32 to vector<8x128xf32>
    %381 = arith.addf %380, %379 : vector<8x128xf32>
    %382 = arith.divf %380, %381 : vector<8x128xf32>
    %383 = vector.extract_strided_slice %365 {offsets = [0, 256], sizes = [8, 128], strides = [1, 1]} : vector<8x384xf32> to vector<8x128xf32>
    %384 = vector.extract_strided_slice %366 {offsets = [0, 256], sizes = [8, 128], strides = [1, 1]} : vector<8x384xf32> to vector<8x128xf32>
    %385 = vector.broadcast %15 : vector<1x128xf32> to vector<8x128xf32>
    %386 = arith.addf %384, %385 : vector<8x128xf32>
    %387 = arith.mulf %374, %386 : vector<8x128xf32>
    %388 = arith.addf %383, %387 : vector<8x128xf32>
    %389 = math.tanh %388 : vector<8x128xf32>
    %cst_108 = arith.constant 1.000000e+00 : f32
    %390 = vector.broadcast %cst_108 : f32 to vector<8x128xf32>
    %391 = arith.subf %390, %382 : vector<8x128xf32>
    %392 = arith.mulf %391, %389 : vector<8x128xf32>
    %393 = arith.mulf %382, %316 : vector<8x128xf32>
    %394 = arith.addf %392, %393 : vector<8x128xf32>
    %395 = arith.index_cast %c4_i32 : i32 to index
    %c0_109 = arith.constant 0 : index
    %c0_110 = arith.constant 0 : index
    %c0_111 = arith.constant 0 : index
    %396 = vector.load %arg8[%395, %c0_109, %c0_110, %c0_111] : memref<8x2x8x128xf32, #tpu.memory_space<vmem>>, vector<1x1x8x128xf32>
    %397 = vector.shape_cast %396 : vector<1x1x8x128xf32> to vector<8x128xf32>
    %398 = vector.shape_cast %362 : vector<8x128xf32> to vector<1x1x8x128xf32>
    tpu.vector_store %arg8[%395, %c0_109, %c0_110, %c0_111], %398 {strides = array<i32>} : memref<8x2x8x128xf32, #tpu.memory_space<vmem>>, vector<1x1x8x128xf32>,
    %399 = arith.index_cast %330 : i32 to index
    %c1_112 = arith.constant 1 : index
    %c0_113 = arith.constant 0 : index
    %c0_114 = arith.constant 0 : index
    %400 = vector.load %arg8[%399, %c1_112, %c0_113, %c0_114] : memref<8x2x8x128xf32, #tpu.memory_space<vmem>>, vector<1x1x8x128xf32>
    %401 = vector.shape_cast %400 : vector<1x1x8x128xf32> to vector<8x128xf32>
    %402 = vector.shape_cast %394 : vector<8x128xf32> to vector<1x1x8x128xf32>
    tpu.vector_store %arg8[%399, %c1_112, %c0_113, %c0_114], %402 {strides = array<i32>} : memref<8x2x8x128xf32, #tpu.memory_space<vmem>>, vector<1x1x8x128xf32>,
    %403 = vector.broadcast %c4_i32 : i32 to vector<8x1xi32>
    %404 = arith.cmpi eq, %16, %403 : vector<8x1xi32>
    %405 = vector.shape_cast %404 : vector<8x1xi1> to vector<8x1xi1>
    %406 = vector.broadcast %405 : vector<8x1xi1> to vector<8x128xi1>
    %407 = arith.select %406, %362, %329 : vector<8x128xi1>, vector<8x128xf32>
    %c5_i32 = arith.constant 5 : i32
    %c7_i32_115 = arith.constant 7 : i32
    %408 = arith.subi %c7_i32_115, %c5_i32 : i32
    %409 = arith.index_cast %c5_i32 : i32 to index
    %c0_116 = arith.constant 0 : index
    %c0_117 = arith.constant 0 : index
    %410 = vector.load %arg10[%409, %c0_116, %c0_117] : memref<8x8x384xf32, #tpu.memory_space<vmem>>, vector<1x8x384xf32>
    %411 = vector.shape_cast %410 : vector<1x8x384xf32> to vector<8x384xf32>
    %cst_118 = arith.constant dense<0.000000e+00> : vector<8x384xf32>
    %412 = tpu.matmul %362, %12, %cst_118 {dimension_numbers = #tpu.dot_dimension_numbers<[1], [0], [0], [1], [0, 0, 1, 1], [], []>} : vector<8x128xf32>, vector<128x384xf32>, vector<8x384xf32> -> vector<8x384xf32>
    %413 = vector.extract_strided_slice %411 {offsets = [0, 0], sizes = [8, 128], strides = [1, 1]} : vector<8x384xf32> to vector<8x128xf32>
    %414 = vector.extract_strided_slice %412 {offsets = [0, 0], sizes = [8, 128], strides = [1, 1]} : vector<8x384xf32> to vector<8x128xf32>
    %415 = arith.addf %413, %414 : vector<8x128xf32>
    %416 = arith.negf %415 : vector<8x128xf32>
    %417 = math.exp %416 : vector<8x128xf32>
    %cst_119 = arith.constant 1.000000e+00 : f32
    %418 = vector.broadcast %cst_119 : f32 to vector<8x128xf32>
    %419 = arith.addf %418, %417 : vector<8x128xf32>
    %420 = arith.divf %418, %419 : vector<8x128xf32>
    %421 = vector.extract_strided_slice %411 {offsets = [0, 128], sizes = [8, 128], strides = [1, 1]} : vector<8x384xf32> to vector<8x128xf32>
    %422 = vector.extract_strided_slice %412 {offsets = [0, 128], sizes = [8, 128], strides = [1, 1]} : vector<8x384xf32> to vector<8x128xf32>
    %423 = arith.addf %421, %422 : vector<8x128xf32>
    %424 = arith.negf %423 : vector<8x128xf32>
    %425 = math.exp %424 : vector<8x128xf32>
    %cst_120 = arith.constant 1.000000e+00 : f32
    %426 = vector.broadcast %cst_120 : f32 to vector<8x128xf32>
    %427 = arith.addf %426, %425 : vector<8x128xf32>
    %428 = arith.divf %426, %427 : vector<8x128xf32>
    %429 = vector.extract_strided_slice %411 {offsets = [0, 256], sizes = [8, 128], strides = [1, 1]} : vector<8x384xf32> to vector<8x128xf32>
    %430 = vector.extract_strided_slice %412 {offsets = [0, 256], sizes = [8, 128], strides = [1, 1]} : vector<8x384xf32> to vector<8x128xf32>
    %431 = vector.broadcast %14 : vector<1x128xf32> to vector<8x128xf32>
    %432 = arith.addf %430, %431 : vector<8x128xf32>
    %433 = arith.mulf %420, %432 : vector<8x128xf32>
    %434 = arith.addf %429, %433 : vector<8x128xf32>
    %435 = math.tanh %434 : vector<8x128xf32>
    %cst_121 = arith.constant 1.000000e+00 : f32
    %436 = vector.broadcast %cst_121 : f32 to vector<8x128xf32>
    %437 = arith.subf %436, %428 : vector<8x128xf32>
    %438 = arith.mulf %437, %435 : vector<8x128xf32>
    %439 = arith.mulf %428, %362 : vector<8x128xf32>
    %440 = arith.addf %438, %439 : vector<8x128xf32>
    %441 = arith.index_cast %408 : i32 to index
    %c0_122 = arith.constant 0 : index
    %c0_123 = arith.constant 0 : index
    %442 = vector.load %arg11[%441, %c0_122, %c0_123] : memref<8x8x384xf32, #tpu.memory_space<vmem>>, vector<1x8x384xf32>
    %443 = vector.shape_cast %442 : vector<1x8x384xf32> to vector<8x384xf32>
    %cst_124 = arith.constant dense<0.000000e+00> : vector<8x384xf32>
    %444 = tpu.matmul %394, %13, %cst_124 {dimension_numbers = #tpu.dot_dimension_numbers<[1], [0], [0], [1], [0, 0, 1, 1], [], []>} : vector<8x128xf32>, vector<128x384xf32>, vector<8x384xf32> -> vector<8x384xf32>
    %445 = vector.extract_strided_slice %443 {offsets = [0, 0], sizes = [8, 128], strides = [1, 1]} : vector<8x384xf32> to vector<8x128xf32>
    %446 = vector.extract_strided_slice %444 {offsets = [0, 0], sizes = [8, 128], strides = [1, 1]} : vector<8x384xf32> to vector<8x128xf32>
    %447 = arith.addf %445, %446 : vector<8x128xf32>
    %448 = arith.negf %447 : vector<8x128xf32>
    %449 = math.exp %448 : vector<8x128xf32>
    %cst_125 = arith.constant 1.000000e+00 : f32
    %450 = vector.broadcast %cst_125 : f32 to vector<8x128xf32>
    %451 = arith.addf %450, %449 : vector<8x128xf32>
    %452 = arith.divf %450, %451 : vector<8x128xf32>
    %453 = vector.extract_strided_slice %443 {offsets = [0, 128], sizes = [8, 128], strides = [1, 1]} : vector<8x384xf32> to vector<8x128xf32>
    %454 = vector.extract_strided_slice %444 {offsets = [0, 128], sizes = [8, 128], strides = [1, 1]} : vector<8x384xf32> to vector<8x128xf32>
    %455 = arith.addf %453, %454 : vector<8x128xf32>
    %456 = arith.negf %455 : vector<8x128xf32>
    %457 = math.exp %456 : vector<8x128xf32>
    %cst_126 = arith.constant 1.000000e+00 : f32
    %458 = vector.broadcast %cst_126 : f32 to vector<8x128xf32>
    %459 = arith.addf %458, %457 : vector<8x128xf32>
    %460 = arith.divf %458, %459 : vector<8x128xf32>
    %461 = vector.extract_strided_slice %443 {offsets = [0, 256], sizes = [8, 128], strides = [1, 1]} : vector<8x384xf32> to vector<8x128xf32>
    %462 = vector.extract_strided_slice %444 {offsets = [0, 256], sizes = [8, 128], strides = [1, 1]} : vector<8x384xf32> to vector<8x128xf32>
    %463 = vector.broadcast %15 : vector<1x128xf32> to vector<8x128xf32>
    %464 = arith.addf %462, %463 : vector<8x128xf32>
    %465 = arith.mulf %452, %464 : vector<8x128xf32>
    %466 = arith.addf %461, %465 : vector<8x128xf32>
    %467 = math.tanh %466 : vector<8x128xf32>
    %cst_127 = arith.constant 1.000000e+00 : f32
    %468 = vector.broadcast %cst_127 : f32 to vector<8x128xf32>
    %469 = arith.subf %468, %460 : vector<8x128xf32>
    %470 = arith.mulf %469, %467 : vector<8x128xf32>
    %471 = arith.mulf %460, %394 : vector<8x128xf32>
    %472 = arith.addf %470, %471 : vector<8x128xf32>
    %473 = arith.index_cast %c5_i32 : i32 to index
    %c0_128 = arith.constant 0 : index
    %c0_129 = arith.constant 0 : index
    %c0_130 = arith.constant 0 : index
    %474 = vector.load %arg8[%473, %c0_128, %c0_129, %c0_130] : memref<8x2x8x128xf32, #tpu.memory_space<vmem>>, vector<1x1x8x128xf32>
    %475 = vector.shape_cast %474 : vector<1x1x8x128xf32> to vector<8x128xf32>
    %476 = vector.shape_cast %440 : vector<8x128xf32> to vector<1x1x8x128xf32>
    tpu.vector_store %arg8[%473, %c0_128, %c0_129, %c0_130], %476 {strides = array<i32>} : memref<8x2x8x128xf32, #tpu.memory_space<vmem>>, vector<1x1x8x128xf32>,
    %477 = arith.index_cast %408 : i32 to index
    %c1_131 = arith.constant 1 : index
    %c0_132 = arith.constant 0 : index
    %c0_133 = arith.constant 0 : index
    %478 = vector.load %arg8[%477, %c1_131, %c0_132, %c0_133] : memref<8x2x8x128xf32, #tpu.memory_space<vmem>>, vector<1x1x8x128xf32>
    %479 = vector.shape_cast %478 : vector<1x1x8x128xf32> to vector<8x128xf32>
    %480 = vector.shape_cast %472 : vector<8x128xf32> to vector<1x1x8x128xf32>
    tpu.vector_store %arg8[%477, %c1_131, %c0_132, %c0_133], %480 {strides = array<i32>} : memref<8x2x8x128xf32, #tpu.memory_space<vmem>>, vector<1x1x8x128xf32>,
    %481 = vector.broadcast %c5_i32 : i32 to vector<8x1xi32>
    %482 = arith.cmpi eq, %16, %481 : vector<8x1xi32>
    %483 = vector.shape_cast %482 : vector<8x1xi1> to vector<8x1xi1>
    %484 = vector.broadcast %483 : vector<8x1xi1> to vector<8x128xi1>
    %485 = arith.select %484, %440, %407 : vector<8x128xi1>, vector<8x128xf32>
    %c6_i32 = arith.constant 6 : i32
    %c7_i32_134 = arith.constant 7 : i32
    %486 = arith.subi %c7_i32_134, %c6_i32 : i32
    %487 = arith.index_cast %c6_i32 : i32 to index
    %c0_135 = arith.constant 0 : index
    %c0_136 = arith.constant 0 : index
    %488 = vector.load %arg10[%487, %c0_135, %c0_136] : memref<8x8x384xf32, #tpu.memory_space<vmem>>, vector<1x8x384xf32>
    %489 = vector.shape_cast %488 : vector<1x8x384xf32> to vector<8x384xf32>
    %cst_137 = arith.constant dense<0.000000e+00> : vector<8x384xf32>
    %490 = tpu.matmul %440, %12, %cst_137 {dimension_numbers = #tpu.dot_dimension_numbers<[1], [0], [0], [1], [0, 0, 1, 1], [], []>} : vector<8x128xf32>, vector<128x384xf32>, vector<8x384xf32> -> vector<8x384xf32>
    %491 = vector.extract_strided_slice %489 {offsets = [0, 0], sizes = [8, 128], strides = [1, 1]} : vector<8x384xf32> to vector<8x128xf32>
    %492 = vector.extract_strided_slice %490 {offsets = [0, 0], sizes = [8, 128], strides = [1, 1]} : vector<8x384xf32> to vector<8x128xf32>
    %493 = arith.addf %491, %492 : vector<8x128xf32>
    %494 = arith.negf %493 : vector<8x128xf32>
    %495 = math.exp %494 : vector<8x128xf32>
    %cst_138 = arith.constant 1.000000e+00 : f32
    %496 = vector.broadcast %cst_138 : f32 to vector<8x128xf32>
    %497 = arith.addf %496, %495 : vector<8x128xf32>
    %498 = arith.divf %496, %497 : vector<8x128xf32>
    %499 = vector.extract_strided_slice %489 {offsets = [0, 128], sizes = [8, 128], strides = [1, 1]} : vector<8x384xf32> to vector<8x128xf32>
    %500 = vector.extract_strided_slice %490 {offsets = [0, 128], sizes = [8, 128], strides = [1, 1]} : vector<8x384xf32> to vector<8x128xf32>
    %501 = arith.addf %499, %500 : vector<8x128xf32>
    %502 = arith.negf %501 : vector<8x128xf32>
    %503 = math.exp %502 : vector<8x128xf32>
    %cst_139 = arith.constant 1.000000e+00 : f32
    %504 = vector.broadcast %cst_139 : f32 to vector<8x128xf32>
    %505 = arith.addf %504, %503 : vector<8x128xf32>
    %506 = arith.divf %504, %505 : vector<8x128xf32>
    %507 = vector.extract_strided_slice %489 {offsets = [0, 256], sizes = [8, 128], strides = [1, 1]} : vector<8x384xf32> to vector<8x128xf32>
    %508 = vector.extract_strided_slice %490 {offsets = [0, 256], sizes = [8, 128], strides = [1, 1]} : vector<8x384xf32> to vector<8x128xf32>
    %509 = vector.broadcast %14 : vector<1x128xf32> to vector<8x128xf32>
    %510 = arith.addf %508, %509 : vector<8x128xf32>
    %511 = arith.mulf %498, %510 : vector<8x128xf32>
    %512 = arith.addf %507, %511 : vector<8x128xf32>
    %513 = math.tanh %512 : vector<8x128xf32>
    %cst_140 = arith.constant 1.000000e+00 : f32
    %514 = vector.broadcast %cst_140 : f32 to vector<8x128xf32>
    %515 = arith.subf %514, %506 : vector<8x128xf32>
    %516 = arith.mulf %515, %513 : vector<8x128xf32>
    %517 = arith.mulf %506, %440 : vector<8x128xf32>
    %518 = arith.addf %516, %517 : vector<8x128xf32>
    %519 = arith.index_cast %486 : i32 to index
    %c0_141 = arith.constant 0 : index
    %c0_142 = arith.constant 0 : index
    %520 = vector.load %arg11[%519, %c0_141, %c0_142] : memref<8x8x384xf32, #tpu.memory_space<vmem>>, vector<1x8x384xf32>
    %521 = vector.shape_cast %520 : vector<1x8x384xf32> to vector<8x384xf32>
    %cst_143 = arith.constant dense<0.000000e+00> : vector<8x384xf32>
    %522 = tpu.matmul %472, %13, %cst_143 {dimension_numbers = #tpu.dot_dimension_numbers<[1], [0], [0], [1], [0, 0, 1, 1], [], []>} : vector<8x128xf32>, vector<128x384xf32>, vector<8x384xf32> -> vector<8x384xf32>
    %523 = vector.extract_strided_slice %521 {offsets = [0, 0], sizes = [8, 128], strides = [1, 1]} : vector<8x384xf32> to vector<8x128xf32>
    %524 = vector.extract_strided_slice %522 {offsets = [0, 0], sizes = [8, 128], strides = [1, 1]} : vector<8x384xf32> to vector<8x128xf32>
    %525 = arith.addf %523, %524 : vector<8x128xf32>
    %526 = arith.negf %525 : vector<8x128xf32>
    %527 = math.exp %526 : vector<8x128xf32>
    %cst_144 = arith.constant 1.000000e+00 : f32
    %528 = vector.broadcast %cst_144 : f32 to vector<8x128xf32>
    %529 = arith.addf %528, %527 : vector<8x128xf32>
    %530 = arith.divf %528, %529 : vector<8x128xf32>
    %531 = vector.extract_strided_slice %521 {offsets = [0, 128], sizes = [8, 128], strides = [1, 1]} : vector<8x384xf32> to vector<8x128xf32>
    %532 = vector.extract_strided_slice %522 {offsets = [0, 128], sizes = [8, 128], strides = [1, 1]} : vector<8x384xf32> to vector<8x128xf32>
    %533 = arith.addf %531, %532 : vector<8x128xf32>
    %534 = arith.negf %533 : vector<8x128xf32>
    %535 = math.exp %534 : vector<8x128xf32>
    %cst_145 = arith.constant 1.000000e+00 : f32
    %536 = vector.broadcast %cst_145 : f32 to vector<8x128xf32>
    %537 = arith.addf %536, %535 : vector<8x128xf32>
    %538 = arith.divf %536, %537 : vector<8x128xf32>
    %539 = vector.extract_strided_slice %521 {offsets = [0, 256], sizes = [8, 128], strides = [1, 1]} : vector<8x384xf32> to vector<8x128xf32>
    %540 = vector.extract_strided_slice %522 {offsets = [0, 256], sizes = [8, 128], strides = [1, 1]} : vector<8x384xf32> to vector<8x128xf32>
    %541 = vector.broadcast %15 : vector<1x128xf32> to vector<8x128xf32>
    %542 = arith.addf %540, %541 : vector<8x128xf32>
    %543 = arith.mulf %530, %542 : vector<8x128xf32>
    %544 = arith.addf %539, %543 : vector<8x128xf32>
    %545 = math.tanh %544 : vector<8x128xf32>
    %cst_146 = arith.constant 1.000000e+00 : f32
    %546 = vector.broadcast %cst_146 : f32 to vector<8x128xf32>
    %547 = arith.subf %546, %538 : vector<8x128xf32>
    %548 = arith.mulf %547, %545 : vector<8x128xf32>
    %549 = arith.mulf %538, %472 : vector<8x128xf32>
    %550 = arith.addf %548, %549 : vector<8x128xf32>
    %551 = arith.index_cast %c6_i32 : i32 to index
    %c0_147 = arith.constant 0 : index
    %c0_148 = arith.constant 0 : index
    %c0_149 = arith.constant 0 : index
    %552 = vector.load %arg8[%551, %c0_147, %c0_148, %c0_149] : memref<8x2x8x128xf32, #tpu.memory_space<vmem>>, vector<1x1x8x128xf32>
    %553 = vector.shape_cast %552 : vector<1x1x8x128xf32> to vector<8x128xf32>
    %554 = vector.shape_cast %518 : vector<8x128xf32> to vector<1x1x8x128xf32>
    tpu.vector_store %arg8[%551, %c0_147, %c0_148, %c0_149], %554 {strides = array<i32>} : memref<8x2x8x128xf32, #tpu.memory_space<vmem>>, vector<1x1x8x128xf32>,
    %555 = arith.index_cast %486 : i32 to index
    %c1_150 = arith.constant 1 : index
    %c0_151 = arith.constant 0 : index
    %c0_152 = arith.constant 0 : index
    %556 = vector.load %arg8[%555, %c1_150, %c0_151, %c0_152] : memref<8x2x8x128xf32, #tpu.memory_space<vmem>>, vector<1x1x8x128xf32>
    %557 = vector.shape_cast %556 : vector<1x1x8x128xf32> to vector<8x128xf32>
    %558 = vector.shape_cast %550 : vector<8x128xf32> to vector<1x1x8x128xf32>
    tpu.vector_store %arg8[%555, %c1_150, %c0_151, %c0_152], %558 {strides = array<i32>} : memref<8x2x8x128xf32, #tpu.memory_space<vmem>>, vector<1x1x8x128xf32>,
    %559 = vector.broadcast %c6_i32 : i32 to vector<8x1xi32>
    %560 = arith.cmpi eq, %16, %559 : vector<8x1xi32>
    %561 = vector.shape_cast %560 : vector<8x1xi1> to vector<8x1xi1>
    %562 = vector.broadcast %561 : vector<8x1xi1> to vector<8x128xi1>
    %563 = arith.select %562, %518, %485 : vector<8x128xi1>, vector<8x128xf32>
    %c7_i32_153 = arith.constant 7 : i32
    %c7_i32_154 = arith.constant 7 : i32
    %564 = arith.subi %c7_i32_154, %c7_i32_153 : i32
    %565 = arith.index_cast %c7_i32_153 : i32 to index
    %c0_155 = arith.constant 0 : index
    %c0_156 = arith.constant 0 : index
    %566 = vector.load %arg10[%565, %c0_155, %c0_156] : memref<8x8x384xf32, #tpu.memory_space<vmem>>, vector<1x8x384xf32>
    %567 = vector.shape_cast %566 : vector<1x8x384xf32> to vector<8x384xf32>
    %cst_157 = arith.constant dense<0.000000e+00> : vector<8x384xf32>
    %568 = tpu.matmul %518, %12, %cst_157 {dimension_numbers = #tpu.dot_dimension_numbers<[1], [0], [0], [1], [0, 0, 1, 1], [], []>} : vector<8x128xf32>, vector<128x384xf32>, vector<8x384xf32> -> vector<8x384xf32>
    %569 = vector.extract_strided_slice %567 {offsets = [0, 0], sizes = [8, 128], strides = [1, 1]} : vector<8x384xf32> to vector<8x128xf32>
    %570 = vector.extract_strided_slice %568 {offsets = [0, 0], sizes = [8, 128], strides = [1, 1]} : vector<8x384xf32> to vector<8x128xf32>
    %571 = arith.addf %569, %570 : vector<8x128xf32>
    %572 = arith.negf %571 : vector<8x128xf32>
    %573 = math.exp %572 : vector<8x128xf32>
    %cst_158 = arith.constant 1.000000e+00 : f32
    %574 = vector.broadcast %cst_158 : f32 to vector<8x128xf32>
    %575 = arith.addf %574, %573 : vector<8x128xf32>
    %576 = arith.divf %574, %575 : vector<8x128xf32>
    %577 = vector.extract_strided_slice %567 {offsets = [0, 128], sizes = [8, 128], strides = [1, 1]} : vector<8x384xf32> to vector<8x128xf32>
    %578 = vector.extract_strided_slice %568 {offsets = [0, 128], sizes = [8, 128], strides = [1, 1]} : vector<8x384xf32> to vector<8x128xf32>
    %579 = arith.addf %577, %578 : vector<8x128xf32>
    %580 = arith.negf %579 : vector<8x128xf32>
    %581 = math.exp %580 : vector<8x128xf32>
    %cst_159 = arith.constant 1.000000e+00 : f32
    %582 = vector.broadcast %cst_159 : f32 to vector<8x128xf32>
    %583 = arith.addf %582, %581 : vector<8x128xf32>
    %584 = arith.divf %582, %583 : vector<8x128xf32>
    %585 = vector.extract_strided_slice %567 {offsets = [0, 256], sizes = [8, 128], strides = [1, 1]} : vector<8x384xf32> to vector<8x128xf32>
    %586 = vector.extract_strided_slice %568 {offsets = [0, 256], sizes = [8, 128], strides = [1, 1]} : vector<8x384xf32> to vector<8x128xf32>
    %587 = vector.broadcast %14 : vector<1x128xf32> to vector<8x128xf32>
    %588 = arith.addf %586, %587 : vector<8x128xf32>
    %589 = arith.mulf %576, %588 : vector<8x128xf32>
    %590 = arith.addf %585, %589 : vector<8x128xf32>
    %591 = math.tanh %590 : vector<8x128xf32>
    %cst_160 = arith.constant 1.000000e+00 : f32
    %592 = vector.broadcast %cst_160 : f32 to vector<8x128xf32>
    %593 = arith.subf %592, %584 : vector<8x128xf32>
    %594 = arith.mulf %593, %591 : vector<8x128xf32>
    %595 = arith.mulf %584, %518 : vector<8x128xf32>
    %596 = arith.addf %594, %595 : vector<8x128xf32>
    %597 = arith.index_cast %564 : i32 to index
    %c0_161 = arith.constant 0 : index
    %c0_162 = arith.constant 0 : index
    %598 = vector.load %arg11[%597, %c0_161, %c0_162] : memref<8x8x384xf32, #tpu.memory_space<vmem>>, vector<1x8x384xf32>
    %599 = vector.shape_cast %598 : vector<1x8x384xf32> to vector<8x384xf32>
    %cst_163 = arith.constant dense<0.000000e+00> : vector<8x384xf32>
    %600 = tpu.matmul %550, %13, %cst_163 {dimension_numbers = #tpu.dot_dimension_numbers<[1], [0], [0], [1], [0, 0, 1, 1], [], []>} : vector<8x128xf32>, vector<128x384xf32>, vector<8x384xf32> -> vector<8x384xf32>
    %601 = vector.extract_strided_slice %599 {offsets = [0, 0], sizes = [8, 128], strides = [1, 1]} : vector<8x384xf32> to vector<8x128xf32>
    %602 = vector.extract_strided_slice %600 {offsets = [0, 0], sizes = [8, 128], strides = [1, 1]} : vector<8x384xf32> to vector<8x128xf32>
    %603 = arith.addf %601, %602 : vector<8x128xf32>
    %604 = arith.negf %603 : vector<8x128xf32>
    %605 = math.exp %604 : vector<8x128xf32>
    %cst_164 = arith.constant 1.000000e+00 : f32
    %606 = vector.broadcast %cst_164 : f32 to vector<8x128xf32>
    %607 = arith.addf %606, %605 : vector<8x128xf32>
    %608 = arith.divf %606, %607 : vector<8x128xf32>
    %609 = vector.extract_strided_slice %599 {offsets = [0, 128], sizes = [8, 128], strides = [1, 1]} : vector<8x384xf32> to vector<8x128xf32>
    %610 = vector.extract_strided_slice %600 {offsets = [0, 128], sizes = [8, 128], strides = [1, 1]} : vector<8x384xf32> to vector<8x128xf32>
    %611 = arith.addf %609, %610 : vector<8x128xf32>
    %612 = arith.negf %611 : vector<8x128xf32>
    %613 = math.exp %612 : vector<8x128xf32>
    %cst_165 = arith.constant 1.000000e+00 : f32
    %614 = vector.broadcast %cst_165 : f32 to vector<8x128xf32>
    %615 = arith.addf %614, %613 : vector<8x128xf32>
    %616 = arith.divf %614, %615 : vector<8x128xf32>
    %617 = vector.extract_strided_slice %599 {offsets = [0, 256], sizes = [8, 128], strides = [1, 1]} : vector<8x384xf32> to vector<8x128xf32>
    %618 = vector.extract_strided_slice %600 {offsets = [0, 256], sizes = [8, 128], strides = [1, 1]} : vector<8x384xf32> to vector<8x128xf32>
    %619 = vector.broadcast %15 : vector<1x128xf32> to vector<8x128xf32>
    %620 = arith.addf %618, %619 : vector<8x128xf32>
    %621 = arith.mulf %608, %620 : vector<8x128xf32>
    %622 = arith.addf %617, %621 : vector<8x128xf32>
    %623 = math.tanh %622 : vector<8x128xf32>
    %cst_166 = arith.constant 1.000000e+00 : f32
    %624 = vector.broadcast %cst_166 : f32 to vector<8x128xf32>
    %625 = arith.subf %624, %616 : vector<8x128xf32>
    %626 = arith.mulf %625, %623 : vector<8x128xf32>
    %627 = arith.mulf %616, %550 : vector<8x128xf32>
    %628 = arith.addf %626, %627 : vector<8x128xf32>
    %629 = arith.index_cast %c7_i32_153 : i32 to index
    %c0_167 = arith.constant 0 : index
    %c0_168 = arith.constant 0 : index
    %c0_169 = arith.constant 0 : index
    %630 = vector.load %arg8[%629, %c0_167, %c0_168, %c0_169] : memref<8x2x8x128xf32, #tpu.memory_space<vmem>>, vector<1x1x8x128xf32>
    %631 = vector.shape_cast %630 : vector<1x1x8x128xf32> to vector<8x128xf32>
    %632 = vector.shape_cast %596 : vector<8x128xf32> to vector<1x1x8x128xf32>
    tpu.vector_store %arg8[%629, %c0_167, %c0_168, %c0_169], %632 {strides = array<i32>} : memref<8x2x8x128xf32, #tpu.memory_space<vmem>>, vector<1x1x8x128xf32>,
    %633 = arith.index_cast %564 : i32 to index
    %c1_170 = arith.constant 1 : index
    %c0_171 = arith.constant 0 : index
    %c0_172 = arith.constant 0 : index
    %634 = vector.load %arg8[%633, %c1_170, %c0_171, %c0_172] : memref<8x2x8x128xf32, #tpu.memory_space<vmem>>, vector<1x1x8x128xf32>
    %635 = vector.shape_cast %634 : vector<1x1x8x128xf32> to vector<8x128xf32>
    %636 = vector.shape_cast %628 : vector<8x128xf32> to vector<1x1x8x128xf32>
    tpu.vector_store %arg8[%633, %c1_170, %c0_171, %c0_172], %636 {strides = array<i32>} : memref<8x2x8x128xf32, #tpu.memory_space<vmem>>, vector<1x1x8x128xf32>,
    %637 = vector.broadcast %c7_i32_153 : i32 to vector<8x1xi32>
    %638 = arith.cmpi eq, %16, %637 : vector<8x1xi32>
    %639 = vector.shape_cast %638 : vector<8x1xi1> to vector<8x1xi1>
    %640 = vector.broadcast %639 : vector<8x1xi1> to vector<8x128xi1>
    %641 = arith.select %640, %596, %563 : vector<8x128xi1>, vector<8x128xf32>
    %c8_i32 = arith.constant 8 : i32
    %c0_173 = arith.constant 0 : index
    %c0_174 = arith.constant 0 : index
    %c0_175 = arith.constant 0 : index
    %642 = vector.load %arg9[%c0_173, %c0_174, %c0_175] : memref<2x8x128xf32, #tpu.memory_space<vmem>>, vector<1x8x128xf32>
    %643 = vector.shape_cast %642 : vector<1x8x128xf32> to vector<8x128xf32>
    %644 = vector.shape_cast %641 : vector<8x128xf32> to vector<1x8x128xf32>
    tpu.vector_store %arg9[%c0_173, %c0_174, %c0_175], %644 {strides = array<i32>} : memref<2x8x128xf32, #tpu.memory_space<vmem>>, vector<1x8x128xf32>,
    %c1_176 = arith.constant 1 : index
    %c0_177 = arith.constant 0 : index
    %c0_178 = arith.constant 0 : index
    %645 = vector.load %arg9[%c1_176, %c0_177, %c0_178] : memref<2x8x128xf32, #tpu.memory_space<vmem>>, vector<1x8x128xf32>
    %646 = vector.shape_cast %645 : vector<1x8x128xf32> to vector<8x128xf32>
    %647 = vector.shape_cast %628 : vector<8x128xf32> to vector<1x8x128xf32>
    tpu.vector_store %arg9[%c1_176, %c0_177, %c0_178], %647 {strides = array<i32>} : memref<2x8x128xf32, #tpu.memory_space<vmem>>, vector<1x8x128xf32>,
    return
  }
}

</mosaic_0001>

<llo_original>
// kernel: bidirectional_encoder_forward.1
$region0: #{bidirectional_encoder_forward.1}
  #allocation0 [shape = 'u32[]', space=smem, size = 0x4, offset = 0x4, fixed_abs, tag = 'smem constant byte address 0x4 - core index']
  #allocation1 [shape = 'u32[144,128]{1,0:T(1,128)}', space=vmem, size = 0x12000, scoped, tag = 'internal scratch']
  #allocation2 [shape = 'f32[8,8,384]{2,1,0:T(8,128)}', space=vmem, size = 0x18000, scoped, tag = 'scratch operand']
  #allocation3 [shape = 'f32[8,8,384]{2,1,0:T(8,128)}', space=vmem, size = 0x18000, scoped, tag = 'scratch operand']
  %s0 = inlined_call_operand.vmem [shape: bf16[64,32], index: 0, kind: input, shape index: {}]
  %s1 = inlined_call_operand.vmem [shape: bf16[32,768], index: 1, kind: input, shape index: {}]
  %s2 = inlined_call_operand.vmem [shape: f32[1,768], index: 2, kind: input, shape index: {}]
  %s3 = inlined_call_operand.vmem [shape: f32[128,384], index: 3, kind: input, shape index: {}]
  %s4 = inlined_call_operand.vmem [shape: f32[1,128], index: 4, kind: input, shape index: {}]
  %s5 = inlined_call_operand.vmem [shape: f32[128,384], index: 5, kind: input, shape index: {}]
  %s6 = inlined_call_operand.vmem [shape: f32[1,128], index: 6, kind: input, shape index: {}]
  %s7 = inlined_call_operand.vmem [shape: s32[8,1], index: 7, kind: input, shape index: {}]
  %s8 = inlined_call_operand.vmem [shape: f32[8,2,8,128], index: 8, kind: output, shape index: {0}]
  %s9 = inlined_call_operand.vmem [shape: f32[2,8,128], index: 9, kind: output, shape index: {1}]
  %10 = xla_tuple %s8, %s9
  %s11 = sld [smem:[#allocation0]]
  $region50: #{bidirectional_encoder_forward.1} parent=0
    _
  %s13 = ssub.s32 1, %s11
  %s14 = scalar_select 0, %s13, %s11
  // Predicated region
  $region2: #{bidirectional_encoder_forward.1} parent=0 // pred_check
    _
  $region3: #{bidirectional_encoder_forward.1} parent=0 // pred_check_branch
    %16 = sbr.rel (0) target = $region5
  $region4: #{bidirectional_encoder_forward.1} parent=0 // pred_region
    _
  $region5: #{bidirectional_encoder_forward.1} parent=0 // pred_fallthru
    _
  // Predicated region
  $region6: #{bidirectional_encoder_forward.1} parent=0 // pred_check
    _
  $region7: #{bidirectional_encoder_forward.1} parent=0 // pred_check_branch
    %18 = sbr.rel (0) target = $region9
  $region8: #{bidirectional_encoder_forward.1} parent=0 // pred_region
    _
  $region9: #{bidirectional_encoder_forward.1} parent=0 // pred_fallthru
    _
  // Predicated region
  $region10: #{bidirectional_encoder_forward.1} parent=0 // pred_check
    _
  $region11: #{bidirectional_encoder_forward.1} parent=0 // pred_check_branch
    %20 = sbr.rel (0) target = $region13
  $region12: #{bidirectional_encoder_forward.1} parent=0 // pred_region
    _
  $region13: #{bidirectional_encoder_forward.1} parent=0 // pred_fallthru
    _
  // Predicated region
  $region14: #{bidirectional_encoder_forward.1} parent=0 // pred_check
    _
  $region15: #{bidirectional_encoder_forward.1} parent=0 // pred_check_branch
    %22 = sbr.rel (0) target = $region17
  $region16: #{bidirectional_encoder_forward.1} parent=0 // pred_region
    _
  $region17: #{bidirectional_encoder_forward.1} parent=0 // pred_fallthru
    _
  // Predicated region
  $region18: #{bidirectional_encoder_forward.1} parent=0 // pred_check
    _
  $region19: #{bidirectional_encoder_forward.1} parent=0 // pred_check_branch
    %24 = sbr.rel (0) target = $region21
  $region20: #{bidirectional_encoder_forward.1} parent=0 // pred_region
    _
  $region21: #{bidirectional_encoder_forward.1} parent=0 // pred_fallthru
    _
  // Predicated region
  $region22: #{bidirectional_encoder_forward.1} parent=0 // pred_check
    _
  $region23: #{bidirectional_encoder_forward.1} parent=0 // pred_check_branch
    %26 = sbr.rel (0) target = $region25
  $region24: #{bidirectional_encoder_forward.1} parent=0 // pred_region
    _
  $region25: #{bidirectional_encoder_forward.1} parent=0 // pred_fallthru
    _
  // Predicated region
  $region26: #{bidirectional_encoder_forward.1} parent=0 // pred_check
    _
  $region27: #{bidirectional_encoder_forward.1} parent=0 // pred_check_branch
    %28 = sbr.rel (0) target = $region29
  $region28: #{bidirectional_encoder_forward.1} parent=0 // pred_region
    _
  $region29: #{bidirectional_encoder_forward.1} parent=0 // pred_fallthru
    _
  // Predicated region
  $region30: #{bidirectional_encoder_forward.1} parent=0 // pred_check
    _
  $region31: #{bidirectional_encoder_forward.1} parent=0 // pred_check_branch
    %30 = sbr.rel (0) target = $region33
  $region32: #{bidirectional_encoder_forward.1} parent=0 // pred_region
    _
  $region33: #{bidirectional_encoder_forward.1} parent=0 // pred_fallthru
    _
  %v32 = vld [vmem:[%s0] sm:$0xf]
  %v33 = vld [vmem:[%s0 + $0x4] sm:$0xf]
  %v34 = vld [vmem:[%s0 + $0x8] sm:$0xf]
  %v35 = vld [vmem:[%s0 + $0xc] sm:$0xf]
  %v36 = vld [vmem:[%s0 + $0x10] sm:$0xf]
  %v37 = vld [vmem:[%s0 + $0x14] sm:$0xf]
  %v38 = vld [vmem:[%s0 + $0x18] sm:$0xf]
  %v39 = vld [vmem:[%s0 + $0x1c] sm:$0xf]
  %v40 = vld [vmem:[%s1] sm:$0xff]
  %v41 = vld [vmem:[%s1 + $0x8] sm:$0xff]
  %v42 = vld [vmem:[%s1 + $0x10] sm:$0xff]
  %v43 = vld [vmem:[%s1 + $0x18] sm:$0xff]
  %v44 = vld [vmem:[%s1 + $0x20] sm:$0xff]
  %v45 = vld [vmem:[%s1 + $0x28] sm:$0xff]
  %v46 = vld [vmem:[%s1 + $0x30] sm:$0xff]
  %v47 = vld [vmem:[%s1 + $0x38] sm:$0xff]
  %v48 = vld [vmem:[%s1 + $0x40] sm:$0xff]
  %v49 = vld [vmem:[%s1 + $0x48] sm:$0xff]
  %v50 = vld [vmem:[%s1 + $0x50] sm:$0xff]
  %v51 = vld [vmem:[%s1 + $0x58] sm:$0xff]
  %v52 = vld [vmem:[%s2] sm:$0x3f]
  %v54 = vlaneseq
  %v55 = vshrl.u32 %v54, 7
  %v56 = vsub.s32 0, %v55
  %v57 = vrot.slane %v52, %v56
  %v58 = vlaneseq
  %v59 = vshrl.u32 %v58, 7
  %v60 = vsub.s32 1, %v59
  %v61 = vrot.slane %v52, %v60
  %v62 = vlaneseq
  %v63 = vshrl.u32 %v62, 7
  %v64 = vsub.s32 2, %v63
  %v65 = vrot.slane %v52, %v64
  %v66 = vlaneseq
  %v67 = vshrl.u32 %v66, 7
  %v68 = vsub.s32 3, %v67
  %v69 = vrot.slane %v52, %v68
  %v70 = vlaneseq
  %v71 = vshrl.u32 %v70, 7
  %v72 = vsub.s32 4, %v71
  %v73 = vrot.slane %v52, %v72
  %v74 = vlaneseq
  %v75 = vshrl.u32 %v74, 7
  %v76 = vsub.s32 5, %v75
  %v77 = vrot.slane %v52, %v76
  %v92 = vunpack.c.l.b16 %v32
  %v93 = vunpack.c.l.b16 %v33
  %v94 = vunpack.c.l.b16 %v34
  %v95 = vunpack.c.l.b16 %v35
  %v96 = vunpack.c.l.b16 %v36
  %v97 = vunpack.c.l.b16 %v37
  %v98 = vunpack.c.l.b16 %v38
  %v99 = vunpack.c.l.b16 %v39
  %v100 = vpack.c.b16 %v93, %v92
  %v101 = vpack.c.b16 %v95, %v94
  %v102 = vpack.c.b16 %v97, %v96
  %v103 = vpack.c.b16 %v99, %v98
  %v116 = vunpack.c.l.b16 %v40
  %v117 = vunpack.c.h.b16 %v40
  %v118 = vunpack.c.l.b16 %v41
  %v119 = vunpack.c.h.b16 %v41
  %v120 = vunpack.c.l.b16 %v42
  %v121 = vunpack.c.h.b16 %v42
  %v122 = vunpack.c.l.b16 %v43
  %v123 = vunpack.c.h.b16 %v43
  %v124 = vunpack.c.l.b16 %v44
  %v125 = vunpack.c.h.b16 %v44
  %v126 = vunpack.c.l.b16 %v45
  %v127 = vunpack.c.h.b16 %v45
  %v128 = vunpack.c.l.b16 %v46
  %v129 = vunpack.c.h.b16 %v46
  %v130 = vunpack.c.l.b16 %v47
  %v131 = vunpack.c.h.b16 %v47
  %v132 = vunpack.c.l.b16 %v48
  %v133 = vunpack.c.h.b16 %v48
  %v134 = vunpack.c.l.b16 %v49
  %v135 = vunpack.c.h.b16 %v49
  %v136 = vunpack.c.l.b16 %v50
  %v137 = vunpack.c.h.b16 %v50
  %v138 = vunpack.c.l.b16 %v51
  %v139 = vunpack.c.h.b16 %v51
  %v140 = vpack.c.b16 %v122, %v116
  %v141 = vpack.c.b16 %v123, %v117
  %v142 = vpack.c.b16 %v124, %v118
  %v143 = vpack.c.b16 %v125, %v119
  %v144 = vpack.c.b16 %v126, %v120
  %v145 = vpack.c.b16 %v127, %v121
  %v146 = vpack.c.b16 %v134, %v128
  %v147 = vpack.c.b16 %v135, %v129
  %v148 = vpack.c.b16 %v136, %v130
  %v149 = vpack.c.b16 %v137, %v131
  %v150 = vpack.c.b16 %v138, %v132
  %v151 = vpack.c.b16 %v139, %v133
  %vm164 = vcmask 261120
  %v166 = vsel %vm164, %v100, 0
  %v169 = vsel %vm164, %v101, 0
  %v172 = vsel %vm164, %v102, 0
  %v175 = vsel %vm164, %v103, 0
  %177 = vmatprep.subr.bf16.mxu0 %v141
  %178 = vmatpush1.bf16.msra.mxu0 %v140
  %179 = vmatprep.subr.bf16.mxu0 %v147
  %180 = vmatpush1.bf16.msra.mxu0 %v146
  %181 = vmatprep.subr.bf16.mxu0 0
  %182 = vmatpush1.bf16.msra.mxu0 0
  %183 = vmatprep.subr.bf16.mxu0 0
  %184 = vmatpush1.bf16.msra.mxu0 0
  %185 = vmatprep.subr.bf16.mxu0 0
  %186 = vmatpush1.bf16.msra.mxu0 0
  %187 = vmatprep.subr.bf16.mxu0 0
  %188 = vmatpush1.bf16.msra.mxu0 0
  %189 = vmatprep.subr.bf16.mxu0 0
  %190 = vmatpush1.bf16.msra.mxu0 0
  %191 = vmatprep.subr.bf16.mxu0 0
  %192 = vmatpush1.bf16.msra.mxu0 0
  %193 = vmatprep.subr.bf16.mxu0 0
  %194 = vmatpush1.bf16.msra.mxu0 0
  %195 = vmatprep.subr.bf16.mxu0 0
  %196 = vmatpush1.bf16.msra.mxu0 0
  %197 = vmatprep.subr.bf16.mxu0 0
  %198 = vmatpush1.bf16.msra.mxu0 0
  %199 = vmatprep.subr.bf16.mxu0 0
  %200 = vmatpush1.bf16.msra.mxu0 0
  %201 = vmatprep.subr.bf16.mxu0 0
  %202 = vmatpush1.bf16.msra.mxu0 0
  %203 = vmatprep.subr.bf16.mxu0 0
  %204 = vmatpush1.bf16.msra.mxu0 0
  %205 = vmatprep.subr.bf16.mxu0 0
  %206 = vmatpush1.bf16.msra.mxu0 0
  %207 = vmatprep.subr.bf16.mxu0 0
  %208 = vmatpush1.bf16.msra.mxu0 0
  %209 = vmatprep.mubr.bf16.mxu0 0
  %210 = vmatmul.mubr.bf16.gmra.mrb[0].mxu0 %v166
  %v211 = vpop.f32.mrb[0].mxu0
  %v212 = vadd.f32 %v57, %v211
  %v213 = vpop.f32.mrb[0].mxu0
  %v214 = vadd.f32 %v61, %v213
  %v215 = vpop.f32.mrb[0].mxu0
  %v216 = vadd.f32 %v57, %v215
  %v217 = vpop.f32.mrb[0].mxu0
  %v218 = vadd.f32 %v61, %v217
  %219 = vmatprep.mubr.bf16.mxu0 0
  %220 = vmatmul.mubr.bf16.gmra.mrb[0].mxu0 %v169
  %v221 = vpop.f32.mrb[0].mxu0
  %v222 = vadd.f32 %v57, %v221
  %v223 = vpop.f32.mrb[0].mxu0
  %v224 = vadd.f32 %v61, %v223
  %v225 = vpop.f32.mrb[0].mxu0
  %v226 = vadd.f32 %v57, %v225
  %v227 = vpop.f32.mrb[0].mxu0
  %v228 = vadd.f32 %v61, %v227
  %229 = vmatprep.mubr.bf16.mxu0 0
  %230 = vmatmul.mubr.bf16.gmra.mrb[0].mxu0 %v172
  %v231 = vpop.f32.mrb[0].mxu0
  %v232 = vadd.f32 %v57, %v231
  %v233 = vpop.f32.mrb[0].mxu0
  %v234 = vadd.f32 %v61, %v233
  %v235 = vpop.f32.mrb[0].mxu0
  %v236 = vadd.f32 %v57, %v235
  %v237 = vpop.f32.mrb[0].mxu0
  %v238 = vadd.f32 %v61, %v237
  %239 = vmatprep.mubr.bf16.mxu0 0
  %240 = vmatmul.mubr.bf16.gmra.mrb[0].mxu0 %v175
  %v241 = vpop.f32.mrb[0].mxu0
  %v242 = vadd.f32 %v57, %v241
  %v243 = vpop.f32.mrb[0].mxu0
  %v244 = vadd.f32 %v61, %v243
  %v245 = vpop.f32.mrb[0].mxu0
  %v246 = vadd.f32 %v57, %v245
  %v247 = vpop.f32.mrb[0].mxu0
  %v248 = vadd.f32 %v61, %v247
  %249 = vdwg.mxu0
  %250 = vmatprep.subr.bf16.mxu0 %v143
  %251 = vmatpush1.bf16.msra.mxu0 %v142
  %252 = vmatprep.subr.bf16.mxu0 %v149
  %253 = vmatpush1.bf16.msra.mxu0 %v148
  %254 = vmatprep.subr.bf16.mxu0 0
  %255 = vmatpush1.bf16.msra.mxu0 0
  %256 = vmatprep.subr.bf16.mxu0 0
  %257 = vmatpush1.bf16.msra.mxu0 0
  %258 = vmatprep.subr.bf16.mxu0 0
  %259 = vmatpush1.bf16.msra.mxu0 0
  %260 = vmatprep.subr.bf16.mxu0 0
  %261 = vmatpush1.bf16.msra.mxu0 0
  %262 = vmatprep.subr.bf16.mxu0 0
  %263 = vmatpush1.bf16.msra.mxu0 0
  %264 = vmatprep.subr.bf16.mxu0 0
  %265 = vmatpush1.bf16.msra.mxu0 0
  %266 = vmatprep.subr.bf16.mxu0 0
  %267 = vmatpush1.bf16.msra.mxu0 0
  %268 = vmatprep.subr.bf16.mxu0 0
  %269 = vmatpush1.bf16.msra.mxu0 0
  %270 = vmatprep.subr.bf16.mxu0 0
  %271 = vmatpush1.bf16.msra.mxu0 0
  %272 = vmatprep.subr.bf16.mxu0 0
  %273 = vmatpush1.bf16.msra.mxu0 0
  %274 = vmatprep.subr.bf16.mxu0 0
  %275 = vmatpush1.bf16.msra.mxu0 0
  %276 = vmatprep.subr.bf16.mxu0 0
  %277 = vmatpush1.bf16.msra.mxu0 0
  %278 = vmatprep.subr.bf16.mxu0 0
  %279 = vmatpush1.bf16.msra.mxu0 0
  %280 = vmatprep.subr.bf16.mxu0 0
  %281 = vmatpush1.bf16.msra.mxu0 0
  %282 = vmatprep.mubr.bf16.mxu0 0
  %283 = vmatmul.mubr.bf16.gmra.mrb[0].mxu0 %v166
  %v284 = vpop.f32.mrb[0].mxu0
  %v285 = vadd.f32 %v65, %v284
  %v286 = vpop.f32.mrb[0].mxu0
  %v287 = vadd.f32 %v69, %v286
  %v288 = vpop.f32.mrb[0].mxu0
  %v289 = vadd.f32 %v65, %v288
  %v290 = vpop.f32.mrb[0].mxu0
  %v291 = vadd.f32 %v69, %v290
  %292 = vmatprep.mubr.bf16.mxu0 0
  %293 = vmatmul.mubr.bf16.gmra.mrb[0].mxu0 %v169
  %v294 = vpop.f32.mrb[0].mxu0
  %v295 = vadd.f32 %v65, %v294
  %v296 = vpop.f32.mrb[0].mxu0
  %v297 = vadd.f32 %v69, %v296
  %v298 = vpop.f32.mrb[0].mxu0
  %v299 = vadd.f32 %v65, %v298
  %v300 = vpop.f32.mrb[0].mxu0
  %v301 = vadd.f32 %v69, %v300
  %302 = vmatprep.mubr.bf16.mxu0 0
  %303 = vmatmul.mubr.bf16.gmra.mrb[0].mxu0 %v172
  %v304 = vpop.f32.mrb[0].mxu0
  %v305 = vadd.f32 %v65, %v304
  %v306 = vpop.f32.mrb[0].mxu0
  %v307 = vadd.f32 %v69, %v306
  %v308 = vpop.f32.mrb[0].mxu0
  %v309 = vadd.f32 %v65, %v308
  %v310 = vpop.f32.mrb[0].mxu0
  %v311 = vadd.f32 %v69, %v310
  %312 = vmatprep.mubr.bf16.mxu0 0
  %313 = vmatmul.mubr.bf16.gmra.mrb[0].mxu0 %v175
  %v314 = vpop.f32.mrb[0].mxu0
  %v315 = vadd.f32 %v65, %v314
  %v316 = vpop.f32.mrb[0].mxu0
  %v317 = vadd.f32 %v69, %v316
  %v318 = vpop.f32.mrb[0].mxu0
  %v319 = vadd.f32 %v65, %v318
  %v320 = vpop.f32.mrb[0].mxu0
  %v321 = vadd.f32 %v69, %v320
  %322 = vdwg.mxu0
  %323 = vmatprep.subr.bf16.mxu0 %v145
  %324 = vmatpush1.bf16.msra.mxu0 %v144
  %325 = vmatprep.subr.bf16.mxu0 %v151
  %326 = vmatpush1.bf16.msra.mxu0 %v150
  %327 = vmatprep.subr.bf16.mxu0 0
  %328 = vmatpush1.bf16.msra.mxu0 0
  %329 = vmatprep.subr.bf16.mxu0 0
  %330 = vmatpush1.bf16.msra.mxu0 0
  %331 = vmatprep.subr.bf16.mxu0 0
  %332 = vmatpush1.bf16.msra.mxu0 0
  %333 = vmatprep.subr.bf16.mxu0 0
  %334 = vmatpush1.bf16.msra.mxu0 0
  %335 = vmatprep.subr.bf16.mxu0 0
  %336 = vmatpush1.bf16.msra.mxu0 0
  %337 = vmatprep.subr.bf16.mxu0 0
  %338 = vmatpush1.bf16.msra.mxu0 0
  %339 = vmatprep.subr.bf16.mxu0 0
  %340 = vmatpush1.bf16.msra.mxu0 0
  %341 = vmatprep.subr.bf16.mxu0 0
  %342 = vmatpush1.bf16.msra.mxu0 0
  %343 = vmatprep.subr.bf16.mxu0 0
  %344 = vmatpush1.bf16.msra.mxu0 0
  %345 = vmatprep.subr.bf16.mxu0 0
  %346 = vmatpush1.bf16.msra.mxu0 0
  %347 = vmatprep.subr.bf16.mxu0 0
  %348 = vmatpush1.bf16.msra.mxu0 0
  %349 = vmatprep.subr.bf16.mxu0 0
  %350 = vmatpush1.bf16.msra.mxu0 0
  %351 = vmatprep.subr.bf16.mxu0 0
  %352 = vmatpush1.bf16.msra.mxu0 0
  %353 = vmatprep.subr.bf16.mxu0 0
  %354 = vmatpush1.bf16.msra.mxu0 0
  %355 = vmatprep.mubr.bf16.mxu0 0
  %356 = vmatmul.mubr.bf16.gmra.mrb[0].mxu0 %v166
  %v357 = vpop.f32.mrb[0].mxu0
  %v358 = vadd.f32 %v73, %v357
  %v359 = vpop.f32.mrb[0].mxu0
  %v360 = vadd.f32 %v77, %v359
  %v361 = vpop.f32.mrb[0].mxu0
  %v362 = vadd.f32 %v73, %v361
  %v363 = vpop.f32.mrb[0].mxu0
  %v364 = vadd.f32 %v77, %v363
  %365 = vmatprep.mubr.bf16.mxu0 0
  %366 = vmatmul.mubr.bf16.gmra.mrb[0].mxu0 %v169
  %v367 = vpop.f32.mrb[0].mxu0
  %v368 = vadd.f32 %v73, %v367
  %v369 = vpop.f32.mrb[0].mxu0
  %v370 = vadd.f32 %v77, %v369
  %v371 = vpop.f32.mrb[0].mxu0
  %v372 = vadd.f32 %v73, %v371
  %v373 = vpop.f32.mrb[0].mxu0
  %v374 = vadd.f32 %v77, %v373
  %375 = vmatprep.mubr.bf16.mxu0 0
  %376 = vmatmul.mubr.bf16.gmra.mrb[0].mxu0 %v172
  %v377 = vpop.f32.mrb[0].mxu0
  %v378 = vadd.f32 %v73, %v377
  %v379 = vpop.f32.mrb[0].mxu0
  %v380 = vadd.f32 %v77, %v379
  %v381 = vpop.f32.mrb[0].mxu0
  %v382 = vadd.f32 %v73, %v381
  %v383 = vpop.f32.mrb[0].mxu0
  %v384 = vadd.f32 %v77, %v383
  %385 = vmatprep.mubr.bf16.mxu0 0
  %386 = vmatmul.mubr.bf16.gmra.mrb[0].mxu0 %v175
  %v387 = vpop.f32.mrb[0].mxu0
  %v388 = vadd.f32 %v73, %v387
  %v389 = vpop.f32.mrb[0].mxu0
  %v390 = vadd.f32 %v77, %v389
  %v391 = vpop.f32.mrb[0].mxu0
  %v392 = vadd.f32 %v73, %v391
  %v393 = vpop.f32.mrb[0].mxu0
  %v394 = vadd.f32 %v77, %v393
  %395 = vdwg.mxu0
  %396 = vst [vmem:[#allocation2] sm:$0xff] %v212
  %397 = vst [vmem:[#allocation2 + $0x8] sm:$0xff] %v214
  %398 = vst [vmem:[#allocation2 + $0x10] sm:$0xff] %v285
  %399 = vst [vmem:[#allocation2 + $0x18] sm:$0xff] %v216
  %400 = vst [vmem:[#allocation2 + $0x20] sm:$0xff] %v218
  %401 = vst [vmem:[#allocation2 + $0x28] sm:$0xff] %v289
  %402 = vst [vmem:[#allocation2 + $0x30] sm:$0xff] %v222
  %403 = vst [vmem:[#allocation2 + $0x38] sm:$0xff] %v224
  %404 = vst [vmem:[#allocation2 + $0x40] sm:$0xff] %v295
  %405 = vst [vmem:[#allocation2 + $0x48] sm:$0xff] %v226
  %406 = vst [vmem:[#allocation2 + $0x50] sm:$0xff] %v228
  %407 = vst [vmem:[#allocation2 + $0x58] sm:$0xff] %v299
  %408 = vst [vmem:[#allocation2 + $0x60] sm:$0xff] %v232
  %409 = vst [vmem:[#allocation2 + $0x68] sm:$0xff] %v234
  %410 = vst [vmem:[#allocation2 + $0x70] sm:$0xff] %v305
  %411 = vst [vmem:[#allocation2 + $0x78] sm:$0xff] %v236
  %412 = vst [vmem:[#allocation2 + $0x80] sm:$0xff] %v238
  %413 = vst [vmem:[#allocation2 + $0x88] sm:$0xff] %v309
  %414 = vst [vmem:[#allocation2 + $0x90] sm:$0xff] %v242
  %415 = vst [vmem:[#allocation2 + $0x98] sm:$0xff] %v244
  %416 = vst [vmem:[#allocation2 + $0xa0] sm:$0xff] %v315
  %417 = vst [vmem:[#allocation2 + $0xa8] sm:$0xff] %v246
  %418 = vst [vmem:[#allocation2 + $0xb0] sm:$0xff] %v248
  %419 = vst [vmem:[#allocation2 + $0xb8] sm:$0xff] %v319
  %420 = vst [vmem:[#allocation3] sm:$0xff] %v287
  %421 = vst [vmem:[#allocation3 + $0x8] sm:$0xff] %v358
  %422 = vst [vmem:[#allocation3 + $0x10] sm:$0xff] %v360
  %423 = vst [vmem:[#allocation3 + $0x18] sm:$0xff] %v291
  %424 = vst [vmem:[#allocation3 + $0x20] sm:$0xff] %v362
  %425 = vst [vmem:[#allocation3 + $0x28] sm:$0xff] %v364
  %426 = vst [vmem:[#allocation3 + $0x30] sm:$0xff] %v297
  %427 = vst [vmem:[#allocation3 + $0x38] sm:$0xff] %v368
  %428 = vst [vmem:[#allocation3 + $0x40] sm:$0xff] %v370
  %429 = vst [vmem:[#allocation3 + $0x48] sm:$0xff] %v301
  %430 = vst [vmem:[#allocation3 + $0x50] sm:$0xff] %v372
  %431 = vst [vmem:[#allocation3 + $0x58] sm:$0xff] %v374
  %432 = vst [vmem:[#allocation3 + $0x60] sm:$0xff] %v307
  %433 = vst [vmem:[#allocation3 + $0x68] sm:$0xff] %v378
  %434 = vst [vmem:[#allocation3 + $0x70] sm:$0xff] %v380
  %435 = vst [vmem:[#allocation3 + $0x78] sm:$0xff] %v311
  %436 = vst [vmem:[#allocation3 + $0x80] sm:$0xff] %v382
  %437 = vst [vmem:[#allocation3 + $0x88] sm:$0xff] %v384
  %438 = vst [vmem:[#allocation3 + $0x90] sm:$0xff] %v317
  %439 = vst [vmem:[#allocation3 + $0x98] sm:$0xff] %v388
  %440 = vst [vmem:[#allocation3 + $0xa0] sm:$0xff] %v390
  %441 = vst [vmem:[#allocation3 + $0xa8] sm:$0xff] %v321
  %442 = vst [vmem:[#allocation3 + $0xb0] sm:$0xff] %v392
  %443 = vst [vmem:[#allocation3 + $0xb8] sm:$0xff] %v394
  %v444 = vld [vmem:[%s3] sm:$0xff]
  %v445 = vld [vmem:[%s3 + $0x8] sm:$0xff]
  %v446 = vld [vmem:[%s3 + $0x10] sm:$0xff]
  %v447 = vld [vmem:[%s3 + $0x18] sm:$0xff]
  %v448 = vld [vmem:[%s3 + $0x20] sm:$0xff]
  %v449 = vld [vmem:[%s3 + $0x28] sm:$0xff]
  %v450 = vld [vmem:[%s3 + $0x30] sm:$0xff]
  %v451 = vld [vmem:[%s3 + $0x38] sm:$0xff]
  %v452 = vld [vmem:[%s3 + $0x40] sm:$0xff]
  %v453 = vld [vmem:[%s3 + $0x48] sm:$0xff]
  %v454 = vld [vmem:[%s3 + $0x50] sm:$0xff]
  %v455 = vld [vmem:[%s3 + $0x58] sm:$0xff]
  %v456 = vld [vmem:[%s3 + $0x60] sm:$0xff]
  %v457 = vld [vmem:[%s3 + $0x68] sm:$0xff]
  %v458 = vld [vmem:[%s3 + $0x70] sm:$0xff]
  %v459 = vld [vmem:[%s3 + $0x78] sm:$0xff]
  %v460 = vld [vmem:[%s3 + $0x80] sm:$0xff]
  %v461 = vld [vmem:[%s3 + $0x88] sm:$0xff]
  %v462 = vld [vmem:[%s3 + $0x90] sm:$0xff]
  %v463 = vld [vmem:[%s3 + $0x98] sm:$0xff]
  %v464 = vld [vmem:[%s3 + $0xa0] sm:$0xff]
  %v465 = vld [vmem:[%s3 + $0xa8] sm:$0xff]
  %v466 = vld [vmem:[%s3 + $0xb0] sm:$0xff]
  %v467 = vld [vmem:[%s3 + $0xb8] sm:$0xff]
  %v468 = vld [vmem:[%s3 + $0xc0] sm:$0xff]
  %v469 = vld [vmem:[%s3 + $0xc8] sm:$0xff]
  %v470 = vld [vmem:[%s3 + $0xd0] sm:$0xff]
  %v471 = vld [vmem:[%s3 + $0xd8] sm:$0xff]
  %v472 = vld [vmem:[%s3 + $0xe0] sm:$0xff]
  %v473 = vld [vmem:[%s3 + $0xe8] sm:$0xff]
  %v474 = vld [vmem:[%s3 + $0xf0] sm:$0xff]
  %v475 = vld [vmem:[%s3 + $0xf8] sm:$0xff]
  %v476 = vld [vmem:[%s3 + $0x100] sm:$0xff]
  %v477 = vld [vmem:[%s3 + $0x108] sm:$0xff]
  %v478 = vld [vmem:[%s3 + $0x110] sm:$0xff]
  %v479 = vld [vmem:[%s3 + $0x118] sm:$0xff]
  %v480 = vld [vmem:[%s3 + $0x120] sm:$0xff]
  %v481 = vld [vmem:[%s3 + $0x128] sm:$0xff]
  %v482 = vld [vmem:[%s3 + $0x130] sm:$0xff]
  %v483 = vld [vmem:[%s3 + $0x138] sm:$0xff]
  %v484 = vld [vmem:[%s3 + $0x140] sm:$0xff]
  %v485 = vld [vmem:[%s3 + $0x148] sm:$0xff]
  %v486 = vld [vmem:[%s3 + $0x150] sm:$0xff]
  %v487 = vld [vmem:[%s3 + $0x158] sm:$0xff]
  %v488 = vld [vmem:[%s3 + $0x160] sm:$0xff]
  %v489 = vld [vmem:[%s3 + $0x168] sm:$0xff]
  %v490 = vld [vmem:[%s3 + $0x170] sm:$0xff]
  %v491 = vld [vmem:[%s3 + $0x178] sm:$0xff]
  %v492 = vld [vmem:[%s5] sm:$0xff]
  %v493 = vld [vmem:[%s5 + $0x8] sm:$0xff]
  %v494 = vld [vmem:[%s5 + $0x10] sm:$0xff]
  %v495 = vld [vmem:[%s5 + $0x18] sm:$0xff]
  %v496 = vld [vmem:[%s5 + $0x20] sm:$0xff]
  %v497 = vld [vmem:[%s5 + $0x28] sm:$0xff]
  %v498 = vld [vmem:[%s5 + $0x30] sm:$0xff]
  %v499 = vld [vmem:[%s5 + $0x38] sm:$0xff]
  %v500 = vld [vmem:[%s5 + $0x40] sm:$0xff]
  %v501 = vld [vmem:[%s5 + $0x48] sm:$0xff]
  %v502 = vld [vmem:[%s5 + $0x50] sm:$0xff]
  %v503 = vld [vmem:[%s5 + $0x58] sm:$0xff]
  %v504 = vld [vmem:[%s5 + $0x60] sm:$0xff]
  %v505 = vld [vmem:[%s5 + $0x68] sm:$0xff]
  %v506 = vld [vmem:[%s5 + $0x70] sm:$0xff]
  %v507 = vld [vmem:[%s5 + $0x78] sm:$0xff]
  %v508 = vld [vmem:[%s5 + $0x80] sm:$0xff]
  %v509 = vld [vmem:[%s5 + $0x88] sm:$0xff]
  %v510 = vld [vmem:[%s5 + $0x90] sm:$0xff]
  %v511 = vld [vmem:[%s5 + $0x98] sm:$0xff]
  %v512 = vld [vmem:[%s5 + $0xa0] sm:$0xff]
  %v513 = vld [vmem:[%s5 + $0xa8] sm:$0xff]
  %v514 = vld [vmem:[%s5 + $0xb0] sm:$0xff]
  %v515 = vld [vmem:[%s5 + $0xb8] sm:$0xff]
  %v516 = vld [vmem:[%s5 + $0xc0] sm:$0xff]
  %v517 = vld [vmem:[%s5 + $0xc8] sm:$0xff]
  %v518 = vld [vmem:[%s5 + $0xd0] sm:$0xff]
  %v519 = vld [vmem:[%s5 + $0xd8] sm:$0xff]
  %v520 = vld [vmem:[%s5 + $0xe0] sm:$0xff]
  %v521 = vld [vmem:[%s5 + $0xe8] sm:$0xff]
  %v522 = vld [vmem:[%s5 + $0xf0] sm:$0xff]
  %v523 = vld [vmem:[%s5 + $0xf8] sm:$0xff]
  %v524 = vld [vmem:[%s5 + $0x100] sm:$0xff]
  %v525 = vld [vmem:[%s5 + $0x108] sm:$0xff]
  %v526 = vld [vmem:[%s5 + $0x110] sm:$0xff]
  %v527 = vld [vmem:[%s5 + $0x118] sm:$0xff]
  %v528 = vld [vmem:[%s5 + $0x120] sm:$0xff]
  %v529 = vld [vmem:[%s5 + $0x128] sm:$0xff]
  %v530 = vld [vmem:[%s5 + $0x130] sm:$0xff]
  %v531 = vld [vmem:[%s5 + $0x138] sm:$0xff]
  %v532 = vld [vmem:[%s5 + $0x140] sm:$0xff]
  %v533 = vld [vmem:[%s5 + $0x148] sm:$0xff]
  %v534 = vld [vmem:[%s5 + $0x150] sm:$0xff]
  %v535 = vld [vmem:[%s5 + $0x158] sm:$0xff]
  %v536 = vld [vmem:[%s5 + $0x160] sm:$0xff]
  %v537 = vld [vmem:[%s5 + $0x168] sm:$0xff]
  %v538 = vld [vmem:[%s5 + $0x170] sm:$0xff]
  %v539 = vld [vmem:[%s5 + $0x178] sm:$0xff]
  %v540 = vld [vmem:[%s4] sm:$0x1]
  %v541 = vld [vmem:[%s6] sm:$0x1]
  %v542 = vld [vmem:[%s7] sm:$0xff]
  %v543 = vld [vmem:[#allocation2] sm:$0xff]
  %v544 = vld [vmem:[#allocation2 + $0x8] sm:$0xff]
  %v545 = vld [vmem:[#allocation2 + $0x10] sm:$0xff]
  %546 = vmatprep.subr.mxu0 %v445
  %547 = vmatpush1.msra.mxu0 %v444
  %548 = vmatprep.subr.mxu0 %v448
  %549 = vmatpush1.msra.mxu0 %v447
  %550 = vmatprep.subr.mxu0 %v451
  %551 = vmatpush1.msra.mxu0 %v450
  %552 = vmatprep.subr.mxu0 %v454
  %553 = vmatpush1.msra.mxu0 %v453
  %554 = vmatprep.subr.mxu0 %v457
  %555 = vmatpush1.msra.mxu0 %v456
  %556 = vmatprep.subr.mxu0 %v460
  %557 = vmatpush1.msra.mxu0 %v459
  %558 = vmatprep.subr.mxu0 %v463
  %559 = vmatpush1.msra.mxu0 %v462
  %560 = vmatprep.subr.mxu0 %v466
  %561 = vmatpush1.msra.mxu0 %v465
  %562 = vmatprep.subr.mxu0 %v469
  %563 = vmatpush1.msra.mxu0 %v468
  %564 = vmatprep.subr.mxu0 %v472
  %565 = vmatpush1.msra.mxu0 %v471
  %566 = vmatprep.subr.mxu0 %v475
  %567 = vmatpush1.msra.mxu0 %v474
  %568 = vmatprep.subr.mxu0 %v478
  %569 = vmatpush1.msra.mxu0 %v477
  %570 = vmatprep.subr.mxu0 %v481
  %571 = vmatpush1.msra.mxu0 %v480
  %572 = vmatprep.subr.mxu0 %v484
  %573 = vmatpush1.msra.mxu0 %v483
  %574 = vmatprep.subr.mxu0 %v487
  %575 = vmatpush1.msra.mxu0 %v486
  %576 = vmatprep.subr.mxu0 %v490
  %577 = vmatpush1.msra.mxu0 %v489
  %578 = vmatprep.subr.mxu0 0.0
  %579 = vmatpush1.msra.mxu0 0.0
  %580 = vmatprep.subr.mxu0 0.0
  %581 = vmatpush1.msra.mxu0 0.0
  %582 = vmatprep.subr.mxu0 0.0
  %583 = vmatpush1.msra.mxu0 0.0
  %584 = vmatprep.subr.mxu0 0.0
  %585 = vmatpush1.msra.mxu0 0.0
  %586 = vmatprep.subr.mxu0 0.0
  %587 = vmatpush1.msra.mxu0 0.0
  %588 = vmatprep.subr.mxu0 0.0
  %589 = vmatpush1.msra.mxu0 0.0
  %590 = vmatprep.subr.mxu0 0.0
  %591 = vmatpush1.msra.mxu0 0.0
  %592 = vmatprep.subr.mxu0 0.0
  %593 = vmatpush1.msra.mxu0 0.0
  %594 = vmatprep.subr.mxu0 0.0
  %595 = vmatpush1.msra.mxu0 0.0
  %596 = vmatprep.subr.mxu0 0.0
  %597 = vmatpush1.msra.mxu0 0.0
  %598 = vmatprep.subr.mxu0 0.0
  %599 = vmatpush1.msra.mxu0 0.0
  %600 = vmatprep.subr.mxu0 0.0
  %601 = vmatpush1.msra.mxu0 0.0
  %602 = vmatprep.subr.mxu0 0.0
  %603 = vmatpush1.msra.mxu0 0.0
  %604 = vmatprep.subr.mxu0 0.0
  %605 = vmatpush1.msra.mxu0 0.0
  %606 = vmatprep.subr.mxu0 0.0
  %607 = vmatpush1.msra.mxu0 0.0
  %608 = vmatprep.subr.mxu0 0.0
  %609 = vmatpush1.msra.mxu0 0.0
  %610 = vmatprep.mubr.f32.mxu0 0.0
  %611 = vmatmul.mubr.f32.gmra.mrb[0].mxu0 0.0
  %v612 = vpop.f32.mrb[0].mxu0
  %v613 = vadd.f32 0.0, %v612
  %v614 = vpop.f32.mrb[0].mxu0
  %v615 = vadd.f32 0.0, %v614
  %616 = vdwg.mxu0
  %617 = vmatprep.subr.mxu0 0.0
  %618 = vmatpush1.msra.mxu0 %v446
  %619 = vmatprep.subr.mxu0 0.0
  %620 = vmatpush1.msra.mxu0 %v449
  %621 = vmatprep.subr.mxu0 0.0
  %622 = vmatpush1.msra.mxu0 %v452
  %623 = vmatprep.subr.mxu0 0.0
  %624 = vmatpush1.msra.mxu0 %v455
  %625 = vmatprep.subr.mxu0 0.0
  %626 = vmatpush1.msra.mxu0 %v458
  %627 = vmatprep.subr.mxu0 0.0
  %628 = vmatpush1.msra.mxu0 %v461
  %629 = vmatprep.subr.mxu0 0.0
  %630 = vmatpush1.msra.mxu0 %v464
  %631 = vmatprep.subr.mxu0 0.0
  %632 = vmatpush1.msra.mxu0 %v467
  %633 = vmatprep.subr.mxu0 0.0
  %634 = vmatpush1.msra.mxu0 %v470
  %635 = vmatprep.subr.mxu0 0.0
  %636 = vmatpush1.msra.mxu0 %v473
  %637 = vmatprep.subr.mxu0 0.0
  %638 = vmatpush1.msra.mxu0 %v476
  %639 = vmatprep.subr.mxu0 0.0
  %640 = vmatpush1.msra.mxu0 %v479
  %641 = vmatprep.subr.mxu0 0.0
  %642 = vmatpush1.msra.mxu0 %v482
  %643 = vmatprep.subr.mxu0 0.0
  %644 = vmatpush1.msra.mxu0 %v485
  %645 = vmatprep.subr.mxu0 0.0
  %646 = vmatpush1.msra.mxu0 %v488
  %647 = vmatprep.subr.mxu0 0.0
  %648 = vmatpush1.msra.mxu0 %v491
  %649 = vmatprep.subr.mxu0 0.0
  %650 = vmatpush1.msra.mxu0 0.0
  %651 = vmatprep.subr.mxu0 0.0
  %652 = vmatpush1.msra.mxu0 0.0
  %653 = vmatprep.subr.mxu0 0.0
  %654 = vmatpush1.msra.mxu0 0.0
  %655 = vmatprep.subr.mxu0 0.0
  %656 = vmatpush1.msra.mxu0 0.0
  %657 = vmatprep.subr.mxu0 0.0
  %658 = vmatpush1.msra.mxu0 0.0
  %659 = vmatprep.subr.mxu0 0.0
  %660 = vmatpush1.msra.mxu0 0.0
  %661 = vmatprep.subr.mxu0 0.0
  %662 = vmatpush1.msra.mxu0 0.0
  %663 = vmatprep.subr.mxu0 0.0
  %664 = vmatpush1.msra.mxu0 0.0
  %665 = vmatprep.subr.mxu0 0.0
  %666 = vmatpush1.msra.mxu0 0.0
  %667 = vmatprep.subr.mxu0 0.0
  %668 = vmatpush1.msra.mxu0 0.0
  %669 = vmatprep.subr.mxu0 0.0
  %670 = vmatpush1.msra.mxu0 0.0
  %671 = vmatprep.subr.mxu0 0.0
  %672 = vmatpush1.msra.mxu0 0.0
  %673 = vmatprep.subr.mxu0 0.0
  %674 = vmatpush1.msra.mxu0 0.0
  %675 = vmatprep.subr.mxu0 0.0
  %676 = vmatpush1.msra.mxu0 0.0
  %677 = vmatprep.subr.mxu0 0.0
  %678 = vmatpush1.msra.mxu0 0.0
  %679 = vmatprep.subr.mxu0 0.0
  %680 = vmatpush1.msra.mxu0 0.0
  %681 = vmatprep.mubr.f32.mxu0 0.0
  %682 = vmatmul.mubr.f32.gmra.mrb[0].mxu0 0.0
  %v683 = vpop.f32.mrb[0].mxu0
  %v684 = vadd.f32 0.0, %v683
  %v685 = vpop.f32.mrb[0].mxu0
  %686 = vdwg.mxu0
  %v687 = vadd.f32 %v543, %v613
  %v688 = vxor.u32 %v687, 2147483648
  %v689 = vmul.f32 %v688, 1.442695
  %v690 = vpow.pop %v689
  %v691 = vadd.f32 %v690, 1.0
  %v692 = vrcp.pop %v691
  %v693 = vmul.f32 1.0, %v692
  %v694 = vadd.f32 %v544, %v615
  %v695 = vxor.u32 %v694, 2147483648
  %v696 = vmul.f32 %v695, 1.442695
  %v697 = vpow.pop %v696
  %v698 = vadd.f32 %v697, 1.0
  %v699 = vrcp.pop %v698
  %v700 = vmul.f32 1.0, %v699
  %v702 = vlaneseq
  %v703 = vshrl.u32 %v702, 7
  %v704 = vsub.s32 0, %v703
  %v705 = vrot.slane %v540, %v704
  %v707 = vadd.f32 %v684, %v705
  %v708 = vmul.f32 %v693, %v707
  %v709 = vadd.f32 %v545, %v708
  %v710 = vtanh.pop %v709
  %v711 = vsub.f32 1.0, %v700
  %v712 = vmul.f32 %v711, %v710
  %v713 = vmul.f32 %v700, 0.0
  %v714 = vadd.f32 %v712, %v713
  %s715 = scalar_lea.vmem [#allocation3], 168
  %v716 = vld [vmem:[%s715] sm:$0xff]
  %v717 = vld [vmem:[%s715 + $0x8] sm:$0xff]
  %v718 = vld [vmem:[%s715 + $0x10] sm:$0xff]
  %719 = vmatprep.subr.mxu0 %v493
  %720 = vmatpush1.msra.mxu0 %v492
  %721 = vmatprep.subr.mxu0 %v496
  %722 = vmatpush1.msra.mxu0 %v495
  %723 = vmatprep.subr.mxu0 %v499
  %724 = vmatpush1.msra.mxu0 %v498
  %725 = vmatprep.subr.mxu0 %v502
  %726 = vmatpush1.msra.mxu0 %v501
  %727 = vmatprep.subr.mxu0 %v505
  %728 = vmatpush1.msra.mxu0 %v504
  %729 = vmatprep.subr.mxu0 %v508
  %730 = vmatpush1.msra.mxu0 %v507
  %731 = vmatprep.subr.mxu0 %v511
  %732 = vmatpush1.msra.mxu0 %v510
  %733 = vmatprep.subr.mxu0 %v514
  %734 = vmatpush1.msra.mxu0 %v513
  %735 = vmatprep.subr.mxu0 %v517
  %736 = vmatpush1.msra.mxu0 %v516
  %737 = vmatprep.subr.mxu0 %v520
  %738 = vmatpush1.msra.mxu0 %v519
  %739 = vmatprep.subr.mxu0 %v523
  %740 = vmatpush1.msra.mxu0 %v522
  %741 = vmatprep.subr.mxu0 %v526
  %742 = vmatpush1.msra.mxu0 %v525
  %743 = vmatprep.subr.mxu0 %v529
  %744 = vmatpush1.msra.mxu0 %v528
  %745 = vmatprep.subr.mxu0 %v532
  %746 = vmatpush1.msra.mxu0 %v531
  %747 = vmatprep.subr.mxu0 %v535
  %748 = vmatpush1.msra.mxu0 %v534
  %749 = vmatprep.subr.mxu0 %v538
  %750 = vmatpush1.msra.mxu0 %v537
  %751 = vmatprep.subr.mxu0 0.0
  %752 = vmatpush1.msra.mxu0 0.0
  %753 = vmatprep.subr.mxu0 0.0
  %754 = vmatpush1.msra.mxu0 0.0
  %755 = vmatprep.subr.mxu0 0.0
  %756 = vmatpush1.msra.mxu0 0.0
  %757 = vmatprep.subr.mxu0 0.0
  %758 = vmatpush1.msra.mxu0 0.0
  %759 = vmatprep.subr.mxu0 0.0
  %760 = vmatpush1.msra.mxu0 0.0
  %761 = vmatprep.subr.mxu0 0.0
  %762 = vmatpush1.msra.mxu0 0.0
  %763 = vmatprep.subr.mxu0 0.0
  %764 = vmatpush1.msra.mxu0 0.0
  %765 = vmatprep.subr.mxu0 0.0
  %766 = vmatpush1.msra.mxu0 0.0
  %767 = vmatprep.subr.mxu0 0.0
  %768 = vmatpush1.msra.mxu0 0.0
  %769 = vmatprep.subr.mxu0 0.0
  %770 = vmatpush1.msra.mxu0 0.0
  %771 = vmatprep.subr.mxu0 0.0
  %772 = vmatpush1.msra.mxu0 0.0
  %773 = vmatprep.subr.mxu0 0.0
  %774 = vmatpush1.msra.mxu0 0.0
  %775 = vmatprep.subr.mxu0 0.0
  %776 = vmatpush1.msra.mxu0 0.0
  %777 = vmatprep.subr.mxu0 0.0
  %778 = vmatpush1.msra.mxu0 0.0
  %779 = vmatprep.subr.mxu0 0.0
  %780 = vmatpush1.msra.mxu0 0.0
  %781 = vmatprep.subr.mxu0 0.0
  %782 = vmatpush1.msra.mxu0 0.0
  %783 = vmatprep.mubr.f32.mxu0 0.0
  %784 = vmatmul.mubr.f32.gmra.mrb[0].mxu0 0.0
  %v785 = vpop.f32.mrb[0].mxu0
  %v786 = vadd.f32 0.0, %v785
  %v787 = vpop.f32.mrb[0].mxu0
  %v788 = vadd.f32 0.0, %v787
  %789 = vdwg.mxu0
  %790 = vmatprep.subr.mxu0 0.0
  %791 = vmatpush1.msra.mxu0 %v494
  %792 = vmatprep.subr.mxu0 0.0
  %793 = vmatpush1.msra.mxu0 %v497
  %794 = vmatprep.subr.mxu0 0.0
  %795 = vmatpush1.msra.mxu0 %v500
  %796 = vmatprep.subr.mxu0 0.0
  %797 = vmatpush1.msra.mxu0 %v503
  %798 = vmatprep.subr.mxu0 0.0
  %799 = vmatpush1.msra.mxu0 %v506
  %800 = vmatprep.subr.mxu0 0.0
  %801 = vmatpush1.msra.mxu0 %v509
  %802 = vmatprep.subr.mxu0 0.0
  %803 = vmatpush1.msra.mxu0 %v512
  %804 = vmatprep.subr.mxu0 0.0
  %805 = vmatpush1.msra.mxu0 %v515
  %806 = vmatprep.subr.mxu0 0.0
  %807 = vmatpush1.msra.mxu0 %v518
  %808 = vmatprep.subr.mxu0 0.0
  %809 = vmatpush1.msra.mxu0 %v521
  %810 = vmatprep.subr.mxu0 0.0
  %811 = vmatpush1.msra.mxu0 %v524
  %812 = vmatprep.subr.mxu0 0.0
  %813 = vmatpush1.msra.mxu0 %v527
  %814 = vmatprep.subr.mxu0 0.0
  %815 = vmatpush1.msra.mxu0 %v530
  %816 = vmatprep.subr.mxu0 0.0
  %817 = vmatpush1.msra.mxu0 %v533
  %818 = vmatprep.subr.mxu0 0.0
  %819 = vmatpush1.msra.mxu0 %v536
  %820 = vmatprep.subr.mxu0 0.0
  %821 = vmatpush1.msra.mxu0 %v539
  %822 = vmatprep.subr.mxu0 0.0
  %823 = vmatpush1.msra.mxu0 0.0
  %824 = vmatprep.subr.mxu0 0.0
  %825 = vmatpush1.msra.mxu0 0.0
  %826 = vmatprep.subr.mxu0 0.0
  %827 = vmatpush1.msra.mxu0 0.0
  %828 = vmatprep.subr.mxu0 0.0
  %829 = vmatpush1.msra.mxu0 0.0
  %830 = vmatprep.subr.mxu0 0.0
  %831 = vmatpush1.msra.mxu0 0.0
  %832 = vmatprep.subr.mxu0 0.0
  %833 = vmatpush1.msra.mxu0 0.0
  %834 = vmatprep.subr.mxu0 0.0
  %835 = vmatpush1.msra.mxu0 0.0
  %836 = vmatprep.subr.mxu0 0.0
  %837 = vmatpush1.msra.mxu0 0.0
  %838 = vmatprep.subr.mxu0 0.0
  %839 = vmatpush1.msra.mxu0 0.0
  %840 = vmatprep.subr.mxu0 0.0
  %841 = vmatpush1.msra.mxu0 0.0
  %842 = vmatprep.subr.mxu0 0.0
  %843 = vmatpush1.msra.mxu0 0.0
  %844 = vmatprep.subr.mxu0 0.0
  %845 = vmatpush1.msra.mxu0 0.0
  %846 = vmatprep.subr.mxu0 0.0
  %847 = vmatpush1.msra.mxu0 0.0
  %848 = vmatprep.subr.mxu0 0.0
  %849 = vmatpush1.msra.mxu0 0.0
  %850 = vmatprep.subr.mxu0 0.0
  %851 = vmatpush1.msra.mxu0 0.0
  %852 = vmatprep.subr.mxu0 0.0
  %853 = vmatpush1.msra.mxu0 0.0
  %854 = vmatprep.mubr.f32.mxu0 0.0
  %855 = vmatmul.mubr.f32.gmra.mrb[0].mxu0 0.0
  %v856 = vpop.f32.mrb[0].mxu0
  %v857 = vadd.f32 0.0, %v856
  %v858 = vpop.f32.mrb[0].mxu0
  %859 = vdwg.mxu0
  %v860 = vadd.f32 %v716, %v786
  %v861 = vxor.u32 %v860, 2147483648
  %v862 = vmul.f32 %v861, 1.442695
  %v863 = vpow.pop %v862
  %v864 = vadd.f32 %v863, 1.0
  %v865 = vrcp.pop %v864
  %v866 = vmul.f32 1.0, %v865
  %v867 = vadd.f32 %v717, %v788
  %v868 = vxor.u32 %v867, 2147483648
  %v869 = vmul.f32 %v868, 1.442695
  %v870 = vpow.pop %v869
  %v871 = vadd.f32 %v870, 1.0
  %v872 = vrcp.pop %v871
  %v873 = vmul.f32 1.0, %v872
  %v875 = vlaneseq
  %v876 = vshrl.u32 %v875, 7
  %v877 = vsub.s32 0, %v876
  %v878 = vrot.slane %v541, %v877
  %v880 = vadd.f32 %v857, %v878
  %v881 = vmul.f32 %v866, %v880
  %v882 = vadd.f32 %v718, %v881
  %v883 = vtanh.pop %v882
  %v884 = vsub.f32 1.0, %v873
  %v885 = vmul.f32 %v884, %v883
  %v886 = vmul.f32 %v873, 0.0
  %v887 = vadd.f32 %v885, %v886
  %888 = vst [vmem:[%s8] sm:$0xff] %v714
  %s889 = scalar_lea.vmem %s8, 120
  %890 = vst [vmem:[%s889] sm:$0xff] %v887
  %vm891 = vcmp.eq.s32.totalorder %v542, 0
  %v892 = vsel %vm891, 1, 0
  %893 = vset.pattern.permute.xlu0 0
  %894 = vperm.xlu0 %893, %v892
  %v895 = vpop.permute.xlu0 %894
  %vm896 = vcmp.eq.s32.totalorder %v895, 1
  %v897 = vsel %vm896, %v714, 0.0
  %s898 = scalar_lea.vmem [#allocation2], 24
  %v899 = vld [vmem:[%s898] sm:$0xff]
  %v900 = vld [vmem:[%s898 + $0x8] sm:$0xff]
  %v901 = vld [vmem:[%s898 + $0x10] sm:$0xff]
  %902 = vmatprep.subr.mxu0 %v445
  %903 = vmatpush1.msra.mxu0 %v444
  %904 = vmatprep.subr.mxu0 %v448
  %905 = vmatpush1.msra.mxu0 %v447
  %906 = vmatprep.subr.mxu0 %v451
  %907 = vmatpush1.msra.mxu0 %v450
  %908 = vmatprep.subr.mxu0 %v454
  %909 = vmatpush1.msra.mxu0 %v453
  %910 = vmatprep.subr.mxu0 %v457
  %911 = vmatpush1.msra.mxu0 %v456
  %912 = vmatprep.subr.mxu0 %v460
  %913 = vmatpush1.msra.mxu0 %v459
  %914 = vmatprep.subr.mxu0 %v463
  %915 = vmatpush1.msra.mxu0 %v462
  %916 = vmatprep.subr.mxu0 %v466
  %917 = vmatpush1.msra.mxu0 %v465
  %918 = vmatprep.subr.mxu0 %v469
  %919 = vmatpush1.msra.mxu0 %v468
  %920 = vmatprep.subr.mxu0 %v472
  %921 = vmatpush1.msra.mxu0 %v471
  %922 = vmatprep.subr.mxu0 %v475
  %923 = vmatpush1.msra.mxu0 %v474
  %924 = vmatprep.subr.mxu0 %v478
  %925 = vmatpush1.msra.mxu0 %v477
  %926 = vmatprep.subr.mxu0 %v481
  %927 = vmatpush1.msra.mxu0 %v480
  %928 = vmatprep.subr.mxu0 %v484
  %929 = vmatpush1.msra.mxu0 %v483
  %930 = vmatprep.subr.mxu0 %v487
  %931 = vmatpush1.msra.mxu0 %v486
  %932 = vmatprep.subr.mxu0 %v490
  %933 = vmatpush1.msra.mxu0 %v489
  %934 = vmatprep.subr.mxu0 0.0
  %935 = vmatpush1.msra.mxu0 0.0
  %936 = vmatprep.subr.mxu0 0.0
  %937 = vmatpush1.msra.mxu0 0.0
  %938 = vmatprep.subr.mxu0 0.0
  %939 = vmatpush1.msra.mxu0 0.0
  %940 = vmatprep.subr.mxu0 0.0
  %941 = vmatpush1.msra.mxu0 0.0
  %942 = vmatprep.subr.mxu0 0.0
  %943 = vmatpush1.msra.mxu0 0.0
  %944 = vmatprep.subr.mxu0 0.0
  %945 = vmatpush1.msra.mxu0 0.0
  %946 = vmatprep.subr.mxu0 0.0
  %947 = vmatpush1.msra.mxu0 0.0
  %948 = vmatprep.subr.mxu0 0.0
  %949 = vmatpush1.msra.mxu0 0.0
  %950 = vmatprep.subr.mxu0 0.0
  %951 = vmatpush1.msra.mxu0 0.0
  %952 = vmatprep.subr.mxu0 0.0
  %953 = vmatpush1.msra.mxu0 0.0
  %954 = vmatprep.subr.mxu0 0.0
  %955 = vmatpush1.msra.mxu0 0.0
  %956 = vmatprep.subr.mxu0 0.0
  %957 = vmatpush1.msra.mxu0 0.0
  %958 = vmatprep.subr.mxu0 0.0
  %959 = vmatpush1.msra.mxu0 0.0
  %960 = vmatprep.subr.mxu0 0.0
  %961 = vmatpush1.msra.mxu0 0.0
  %962 = vmatprep.subr.mxu0 0.0
  %963 = vmatpush1.msra.mxu0 0.0
  %964 = vmatprep.subr.mxu0 0.0
  %965 = vmatpush1.msra.mxu0 0.0
  %966 = vmatprep.mubr.f32.mxu0 0.0
  %967 = vmatmul.mubr.f32.gmra.mrb[0].mxu0 %v714
  %v968 = vpop.f32.mrb[0].mxu0
  %v969 = vadd.f32 0.0, %v968
  %v970 = vpop.f32.mrb[0].mxu0
  %v971 = vadd.f32 0.0, %v970
  %972 = vdwg.mxu0
  %973 = vmatprep.subr.mxu0 0.0
  %974 = vmatpush1.msra.mxu0 %v446
  %975 = vmatprep.subr.mxu0 0.0
  %976 = vmatpush1.msra.mxu0 %v449
  %977 = vmatprep.subr.mxu0 0.0
  %978 = vmatpush1.msra.mxu0 %v452
  %979 = vmatprep.subr.mxu0 0.0
  %980 = vmatpush1.msra.mxu0 %v455
  %981 = vmatprep.subr.mxu0 0.0
  %982 = vmatpush1.msra.mxu0 %v458
  %983 = vmatprep.subr.mxu0 0.0
  %984 = vmatpush1.msra.mxu0 %v461
  %985 = vmatprep.subr.mxu0 0.0
  %986 = vmatpush1.msra.mxu0 %v464
  %987 = vmatprep.subr.mxu0 0.0
  %988 = vmatpush1.msra.mxu0 %v467
  %989 = vmatprep.subr.mxu0 0.0
  %990 = vmatpush1.msra.mxu0 %v470
  %991 = vmatprep.subr.mxu0 0.0
  %992 = vmatpush1.msra.mxu0 %v473
  %993 = vmatprep.subr.mxu0 0.0
  %994 = vmatpush1.msra.mxu0 %v476
  %995 = vmatprep.subr.mxu0 0.0
  %996 = vmatpush1.msra.mxu0 %v479
  %997 = vmatprep.subr.mxu0 0.0
  %998 = vmatpush1.msra.mxu0 %v482
  %999 = vmatprep.subr.mxu0 0.0
  %1000 = vmatpush1.msra.mxu0 %v485
  %1001 = vmatprep.subr.mxu0 0.0
  %1002 = vmatpush1.msra.mxu0 %v488
  %1003 = vmatprep.subr.mxu0 0.0
  %1004 = vmatpush1.msra.mxu0 %v491
  %1005 = vmatprep.subr.mxu0 0.0
  %1006 = vmatpush1.msra.mxu0 0.0
  %1007 = vmatprep.subr.mxu0 0.0
  %1008 = vmatpush1.msra.mxu0 0.0
  %1009 = vmatprep.subr.mxu0 0.0
  %1010 = vmatpush1.msra.mxu0 0.0
  %1011 = vmatprep.subr.mxu0 0.0
  %1012 = vmatpush1.msra.mxu0 0.0
  %1013 = vmatprep.subr.mxu0 0.0
  %1014 = vmatpush1.msra.mxu0 0.0
  %1015 = vmatprep.subr.mxu0 0.0
  %1016 = vmatpush1.msra.mxu0 0.0
  %1017 = vmatprep.subr.mxu0 0.0
  %1018 = vmatpush1.msra.mxu0 0.0
  %1019 = vmatprep.subr.mxu0 0.0
  %1020 = vmatpush1.msra.mxu0 0.0
  %1021 = vmatprep.subr.mxu0 0.0
  %1022 = vmatpush1.msra.mxu0 0.0
  %1023 = vmatprep.subr.mxu0 0.0
  %1024 = vmatpush1.msra.mxu0 0.0
  %1025 = vmatprep.subr.mxu0 0.0
  %1026 = vmatpush1.msra.mxu0 0.0
  %1027 = vmatprep.subr.mxu0 0.0
  %1028 = vmatpush1.msra.mxu0 0.0
  %1029 = vmatprep.subr.mxu0 0.0
  %1030 = vmatpush1.msra.mxu0 0.0
  %1031 = vmatprep.subr.mxu0 0.0
  %1032 = vmatpush1.msra.mxu0 0.0
  %1033 = vmatprep.subr.mxu0 0.0
  %1034 = vmatpush1.msra.mxu0 0.0
  %1035 = vmatprep.subr.mxu0 0.0
  %1036 = vmatpush1.msra.mxu0 0.0
  %1037 = vmatprep.mubr.f32.mxu0 0.0
  %1038 = vmatmul.mubr.f32.gmra.mrb[0].mxu0 %v714
  %v1039 = vpop.f32.mrb[0].mxu0
  %v1040 = vadd.f32 0.0, %v1039
  %v1041 = vpop.f32.mrb[0].mxu0
  %1042 = vdwg.mxu0
  %v1043 = vadd.f32 %v899, %v969
  %v1044 = vxor.u32 %v1043, 2147483648
  %v1045 = vmul.f32 %v1044, 1.442695
  %v1046 = vpow.pop %v1045
  %v1047 = vadd.f32 %v1046, 1.0
  %v1048 = vrcp.pop %v1047
  %v1049 = vmul.f32 1.0, %v1048
  %v1050 = vadd.f32 %v900, %v971
  %v1051 = vxor.u32 %v1050, 2147483648
  %v1052 = vmul.f32 %v1051, 1.442695
  %v1053 = vpow.pop %v1052
  %v1054 = vadd.f32 %v1053, 1.0
  %v1055 = vrcp.pop %v1054
  %v1056 = vmul.f32 1.0, %v1055
  %v1057 = vadd.f32 %v1040, %v705
  %v1058 = vmul.f32 %v1049, %v1057
  %v1059 = vadd.f32 %v901, %v1058
  %v1060 = vtanh.pop %v1059
  %v1061 = vsub.f32 1.0, %v1056
  %v1062 = vmul.f32 %v1061, %v1060
  %v1063 = vmul.f32 %v1056, %v714
  %v1064 = vadd.f32 %v1062, %v1063
  %s1065 = scalar_lea.vmem [#allocation3], 144
  %v1066 = vld [vmem:[%s1065] sm:$0xff]
  %v1067 = vld [vmem:[%s1065 + $0x8] sm:$0xff]
  %v1068 = vld [vmem:[%s1065 + $0x10] sm:$0xff]
  %1069 = vmatprep.subr.mxu0 %v493
  %1070 = vmatpush1.msra.mxu0 %v492
  %1071 = vmatprep.subr.mxu0 %v496
  %1072 = vmatpush1.msra.mxu0 %v495
  %1073 = vmatprep.subr.mxu0 %v499
  %1074 = vmatpush1.msra.mxu0 %v498
  %1075 = vmatprep.subr.mxu0 %v502
  %1076 = vmatpush1.msra.mxu0 %v501
  %1077 = vmatprep.subr.mxu0 %v505
  %1078 = vmatpush1.msra.mxu0 %v504
  %1079 = vmatprep.subr.mxu0 %v508
  %1080 = vmatpush1.msra.mxu0 %v507
  %1081 = vmatprep.subr.mxu0 %v511
  %1082 = vmatpush1.msra.mxu0 %v510
  %1083 = vmatprep.subr.mxu0 %v514
  %1084 = vmatpush1.msra.mxu0 %v513
  %1085 = vmatprep.subr.mxu0 %v517
  %1086 = vmatpush1.msra.mxu0 %v516
  %1087 = vmatprep.subr.mxu0 %v520
  %1088 = vmatpush1.msra.mxu0 %v519
  %1089 = vmatprep.subr.mxu0 %v523
  %1090 = vmatpush1.msra.mxu0 %v522
  %1091 = vmatprep.subr.mxu0 %v526
  %1092 = vmatpush1.msra.mxu0 %v525
  %1093 = vmatprep.subr.mxu0 %v529
  %1094 = vmatpush1.msra.mxu0 %v528
  %1095 = vmatprep.subr.mxu0 %v532
  %1096 = vmatpush1.msra.mxu0 %v531
  %1097 = vmatprep.subr.mxu0 %v535
  %1098 = vmatpush1.msra.mxu0 %v534
  %1099 = vmatprep.subr.mxu0 %v538
  %1100 = vmatpush1.msra.mxu0 %v537
  %1101 = vmatprep.subr.mxu0 0.0
  %1102 = vmatpush1.msra.mxu0 0.0
  %1103 = vmatprep.subr.mxu0 0.0
  %1104 = vmatpush1.msra.mxu0 0.0
  %1105 = vmatprep.subr.mxu0 0.0
  %1106 = vmatpush1.msra.mxu0 0.0
  %1107 = vmatprep.subr.mxu0 0.0
  %1108 = vmatpush1.msra.mxu0 0.0
  %1109 = vmatprep.subr.mxu0 0.0
  %1110 = vmatpush1.msra.mxu0 0.0
  %1111 = vmatprep.subr.mxu0 0.0
  %1112 = vmatpush1.msra.mxu0 0.0
  %1113 = vmatprep.subr.mxu0 0.0
  %1114 = vmatpush1.msra.mxu0 0.0
  %1115 = vmatprep.subr.mxu0 0.0
  %1116 = vmatpush1.msra.mxu0 0.0
  %1117 = vmatprep.subr.mxu0 0.0
  %1118 = vmatpush1.msra.mxu0 0.0
  %1119 = vmatprep.subr.mxu0 0.0
  %1120 = vmatpush1.msra.mxu0 0.0
  %1121 = vmatprep.subr.mxu0 0.0
  %1122 = vmatpush1.msra.mxu0 0.0
  %1123 = vmatprep.subr.mxu0 0.0
  %1124 = vmatpush1.msra.mxu0 0.0
  %1125 = vmatprep.subr.mxu0 0.0
  %1126 = vmatpush1.msra.mxu0 0.0
  %1127 = vmatprep.subr.mxu0 0.0
  %1128 = vmatpush1.msra.mxu0 0.0
  %1129 = vmatprep.subr.mxu0 0.0
  %1130 = vmatpush1.msra.mxu0 0.0
  %1131 = vmatprep.subr.mxu0 0.0
  %1132 = vmatpush1.msra.mxu0 0.0
  %1133 = vmatprep.mubr.f32.mxu0 0.0
  %1134 = vmatmul.mubr.f32.gmra.mrb[0].mxu0 %v887
  %v1135 = vpop.f32.mrb[0].mxu0
  %v1136 = vadd.f32 0.0, %v1135
  %v1137 = vpop.f32.mrb[0].mxu0
  %v1138 = vadd.f32 0.0, %v1137
  %1139 = vdwg.mxu0
  %1140 = vmatprep.subr.mxu0 0.0
  %1141 = vmatpush1.msra.mxu0 %v494
  %1142 = vmatprep.subr.mxu0 0.0
  %1143 = vmatpush1.msra.mxu0 %v497
  %1144 = vmatprep.subr.mxu0 0.0
  %1145 = vmatpush1.msra.mxu0 %v500
  %1146 = vmatprep.subr.mxu0 0.0
  %1147 = vmatpush1.msra.mxu0 %v503
  %1148 = vmatprep.subr.mxu0 0.0
  %1149 = vmatpush1.msra.mxu0 %v506
  %1150 = vmatprep.subr.mxu0 0.0
  %1151 = vmatpush1.msra.mxu0 %v509
  %1152 = vmatprep.subr.mxu0 0.0
  %1153 = vmatpush1.msra.mxu0 %v512
  %1154 = vmatprep.subr.mxu0 0.0
  %1155 = vmatpush1.msra.mxu0 %v515
  %1156 = vmatprep.subr.mxu0 0.0
  %1157 = vmatpush1.msra.mxu0 %v518
  %1158 = vmatprep.subr.mxu0 0.0
  %1159 = vmatpush1.msra.mxu0 %v521
  %1160 = vmatprep.subr.mxu0 0.0
  %1161 = vmatpush1.msra.mxu0 %v524
  %1162 = vmatprep.subr.mxu0 0.0
  %1163 = vmatpush1.msra.mxu0 %v527
  %1164 = vmatprep.subr.mxu0 0.0
  %1165 = vmatpush1.msra.mxu0 %v530
  %1166 = vmatprep.subr.mxu0 0.0
  %1167 = vmatpush1.msra.mxu0 %v533
  %1168 = vmatprep.subr.mxu0 0.0
  %1169 = vmatpush1.msra.mxu0 %v536
  %1170 = vmatprep.subr.mxu0 0.0
  %1171 = vmatpush1.msra.mxu0 %v539
  %1172 = vmatprep.subr.mxu0 0.0
  %1173 = vmatpush1.msra.mxu0 0.0
  %1174 = vmatprep.subr.mxu0 0.0
  %1175 = vmatpush1.msra.mxu0 0.0
  %1176 = vmatprep.subr.mxu0 0.0
  %1177 = vmatpush1.msra.mxu0 0.0
  %1178 = vmatprep.subr.mxu0 0.0
  %1179 = vmatpush1.msra.mxu0 0.0
  %1180 = vmatprep.subr.mxu0 0.0
  %1181 = vmatpush1.msra.mxu0 0.0
  %1182 = vmatprep.subr.mxu0 0.0
  %1183 = vmatpush1.msra.mxu0 0.0
  %1184 = vmatprep.subr.mxu0 0.0
  %1185 = vmatpush1.msra.mxu0 0.0
  %1186 = vmatprep.subr.mxu0 0.0
  %1187 = vmatpush1.msra.mxu0 0.0
  %1188 = vmatprep.subr.mxu0 0.0
  %1189 = vmatpush1.msra.mxu0 0.0
  %1190 = vmatprep.subr.mxu0 0.0
  %1191 = vmatpush1.msra.mxu0 0.0
  %1192 = vmatprep.subr.mxu0 0.0
  %1193 = vmatpush1.msra.mxu0 0.0
  %1194 = vmatprep.subr.mxu0 0.0
  %1195 = vmatpush1.msra.mxu0 0.0
  %1196 = vmatprep.subr.mxu0 0.0
  %1197 = vmatpush1.msra.mxu0 0.0
  %1198 = vmatprep.subr.mxu0 0.0
  %1199 = vmatpush1.msra.mxu0 0.0
  %1200 = vmatprep.subr.mxu0 0.0
  %1201 = vmatpush1.msra.mxu0 0.0
  %1202 = vmatprep.subr.mxu0 0.0
  %1203 = vmatpush1.msra.mxu0 0.0
  %1204 = vmatprep.mubr.f32.mxu0 0.0
  %1205 = vmatmul.mubr.f32.gmra.mrb[0].mxu0 %v887
  %v1206 = vpop.f32.mrb[0].mxu0
  %v1207 = vadd.f32 0.0, %v1206
  %v1208 = vpop.f32.mrb[0].mxu0
  %1209 = vdwg.mxu0
  %v1210 = vadd.f32 %v1066, %v1136
  %v1211 = vxor.u32 %v1210, 2147483648
  %v1212 = vmul.f32 %v1211, 1.442695
  %v1213 = vpow.pop %v1212
  %v1214 = vadd.f32 %v1213, 1.0
  %v1215 = vrcp.pop %v1214
  %v1216 = vmul.f32 1.0, %v1215
  %v1217 = vadd.f32 %v1067, %v1138
  %v1218 = vxor.u32 %v1217, 2147483648
  %v1219 = vmul.f32 %v1218, 1.442695
  %v1220 = vpow.pop %v1219
  %v1221 = vadd.f32 %v1220, 1.0
  %v1222 = vrcp.pop %v1221
  %v1223 = vmul.f32 1.0, %v1222
  %v1224 = vadd.f32 %v1207, %v878
  %v1225 = vmul.f32 %v1216, %v1224
  %v1226 = vadd.f32 %v1068, %v1225
  %v1227 = vtanh.pop %v1226
  %v1228 = vsub.f32 1.0, %v1223
  %v1229 = vmul.f32 %v1228, %v1227
  %v1230 = vmul.f32 %v1223, %v887
  %v1231 = vadd.f32 %v1229, %v1230
  %s1232 = scalar_lea.vmem %s8, 16
  %1233 = vst [vmem:[%s1232] sm:$0xff] %v1064
  %s1234 = scalar_lea.vmem %s8, 104
  %1235 = vst [vmem:[%s1234] sm:$0xff] %v1231
  %vm1236 = vcmp.eq.s32.totalorder %v542, 1
  %v1237 = vsel %vm1236, 1, 0
  %1238 = vset.pattern.permute.xlu0 0
  %1239 = vperm.xlu0 %1238, %v1237
  %v1240 = vpop.permute.xlu0 %1239
  %vm1241 = vcmp.eq.s32.totalorder %v1240, 1
  %v1242 = vsel %vm1241, %v1064, %v897
  %s1243 = scalar_lea.vmem [#allocation2], 48
  %v1244 = vld [vmem:[%s1243] sm:$0xff]
  %v1245 = vld [vmem:[%s1243 + $0x8] sm:$0xff]
  %v1246 = vld [vmem:[%s1243 + $0x10] sm:$0xff]
  %1247 = vmatprep.subr.mxu0 %v445
  %1248 = vmatpush1.msra.mxu0 %v444
  %1249 = vmatprep.subr.mxu0 %v448
  %1250 = vmatpush1.msra.mxu0 %v447
  %1251 = vmatprep.subr.mxu0 %v451
  %1252 = vmatpush1.msra.mxu0 %v450
  %1253 = vmatprep.subr.mxu0 %v454
  %1254 = vmatpush1.msra.mxu0 %v453
  %1255 = vmatprep.subr.mxu0 %v457
  %1256 = vmatpush1.msra.mxu0 %v456
  %1257 = vmatprep.subr.mxu0 %v460
  %1258 = vmatpush1.msra.mxu0 %v459
  %1259 = vmatprep.subr.mxu0 %v463
  %1260 = vmatpush1.msra.mxu0 %v462
  %1261 = vmatprep.subr.mxu0 %v466
  %1262 = vmatpush1.msra.mxu0 %v465
  %1263 = vmatprep.subr.mxu0 %v469
  %1264 = vmatpush1.msra.mxu0 %v468
  %1265 = vmatprep.subr.mxu0 %v472
  %1266 = vmatpush1.msra.mxu0 %v471
  %1267 = vmatprep.subr.mxu0 %v475
  %1268 = vmatpush1.msra.mxu0 %v474
  %1269 = vmatprep.subr.mxu0 %v478
  %1270 = vmatpush1.msra.mxu0 %v477
  %1271 = vmatprep.subr.mxu0 %v481
  %1272 = vmatpush1.msra.mxu0 %v480
  %1273 = vmatprep.subr.mxu0 %v484
  %1274 = vmatpush1.msra.mxu0 %v483
  %1275 = vmatprep.subr.mxu0 %v487
  %1276 = vmatpush1.msra.mxu0 %v486
  %1277 = vmatprep.subr.mxu0 %v490
  %1278 = vmatpush1.msra.mxu0 %v489
  %1279 = vmatprep.subr.mxu0 0.0
  %1280 = vmatpush1.msra.mxu0 0.0
  %1281 = vmatprep.subr.mxu0 0.0
  %1282 = vmatpush1.msra.mxu0 0.0
  %1283 = vmatprep.subr.mxu0 0.0
  %1284 = vmatpush1.msra.mxu0 0.0
  %1285 = vmatprep.subr.mxu0 0.0
  %1286 = vmatpush1.msra.mxu0 0.0
  %1287 = vmatprep.subr.mxu0 0.0
  %1288 = vmatpush1.msra.mxu0 0.0
  %1289 = vmatprep.subr.mxu0 0.0
  %1290 = vmatpush1.msra.mxu0 0.0
  %1291 = vmatprep.subr.mxu0 0.0
  %1292 = vmatpush1.msra.mxu0 0.0
  %1293 = vmatprep.subr.mxu0 0.0
  %1294 = vmatpush1.msra.mxu0 0.0
  %1295 = vmatprep.subr.mxu0 0.0
  %1296 = vmatpush1.msra.mxu0 0.0
  %1297 = vmatprep.subr.mxu0 0.0
  %1298 = vmatpush1.msra.mxu0 0.0
  %1299 = vmatprep.subr.mxu0 0.0
  %1300 = vmatpush1.msra.mxu0 0.0
  %1301 = vmatprep.subr.mxu0 0.0
  %1302 = vmatpush1.msra.mxu0 0.0
  %1303 = vmatprep.subr.mxu0 0.0
  %1304 = vmatpush1.msra.mxu0 0.0
  %1305 = vmatprep.subr.mxu0 0.0
  %1306 = vmatpush1.msra.mxu0 0.0
  %1307 = vmatprep.subr.mxu0 0.0
  %1308 = vmatpush1.msra.mxu0 0.0
  %1309 = vmatprep.subr.mxu0 0.0
  %1310 = vmatpush1.msra.mxu0 0.0
  %1311 = vmatprep.mubr.f32.mxu0 0.0
  %1312 = vmatmul.mubr.f32.gmra.mrb[0].mxu0 %v1064
  %v1313 = vpop.f32.mrb[0].mxu0
  %v1314 = vadd.f32 0.0, %v1313
  %v1315 = vpop.f32.mrb[0].mxu0
  %v1316 = vadd.f32 0.0, %v1315
  %1317 = vdwg.mxu0
  %1318 = vmatprep.subr.mxu0 0.0
  %1319 = vmatpush1.msra.mxu0 %v446
  %1320 = vmatprep.subr.mxu0 0.0
  %1321 = vmatpush1.msra.mxu0 %v449
  %1322 = vmatprep.subr.mxu0 0.0
  %1323 = vmatpush1.msra.mxu0 %v452
  %1324 = vmatprep.subr.mxu0 0.0
  %1325 = vmatpush1.msra.mxu0 %v455
  %1326 = vmatprep.subr.mxu0 0.0
  %1327 = vmatpush1.msra.mxu0 %v458
  %1328 = vmatprep.subr.mxu0 0.0
  %1329 = vmatpush1.msra.mxu0 %v461
  %1330 = vmatprep.subr.mxu0 0.0
  %1331 = vmatpush1.msra.mxu0 %v464
  %1332 = vmatprep.subr.mxu0 0.0
  %1333 = vmatpush1.msra.mxu0 %v467
  %1334 = vmatprep.subr.mxu0 0.0
  %1335 = vmatpush1.msra.mxu0 %v470
  %1336 = vmatprep.subr.mxu0 0.0
  %1337 = vmatpush1.msra.mxu0 %v473
  %1338 = vmatprep.subr.mxu0 0.0
  %1339 = vmatpush1.msra.mxu0 %v476
  %1340 = vmatprep.subr.mxu0 0.0
  %1341 = vmatpush1.msra.mxu0 %v479
  %1342 = vmatprep.subr.mxu0 0.0
  %1343 = vmatpush1.msra.mxu0 %v482
  %1344 = vmatprep.subr.mxu0 0.0
  %1345 = vmatpush1.msra.mxu0 %v485
  %1346 = vmatprep.subr.mxu0 0.0
  %1347 = vmatpush1.msra.mxu0 %v488
  %1348 = vmatprep.subr.mxu0 0.0
  %1349 = vmatpush1.msra.mxu0 %v491
  %1350 = vmatprep.subr.mxu0 0.0
  %1351 = vmatpush1.msra.mxu0 0.0
  %1352 = vmatprep.subr.mxu0 0.0
  %1353 = vmatpush1.msra.mxu0 0.0
  %1354 = vmatprep.subr.mxu0 0.0
  %1355 = vmatpush1.msra.mxu0 0.0
  %1356 = vmatprep.subr.mxu0 0.0
  %1357 = vmatpush1.msra.mxu0 0.0
  %1358 = vmatprep.subr.mxu0 0.0
  %1359 = vmatpush1.msra.mxu0 0.0
  %1360 = vmatprep.subr.mxu0 0.0
  %1361 = vmatpush1.msra.mxu0 0.0
  %1362 = vmatprep.subr.mxu0 0.0
  %1363 = vmatpush1.msra.mxu0 0.0
  %1364 = vmatprep.subr.mxu0 0.0
  %1365 = vmatpush1.msra.mxu0 0.0
  %1366 = vmatprep.subr.mxu0 0.0
  %1367 = vmatpush1.msra.mxu0 0.0
  %1368 = vmatprep.subr.mxu0 0.0
  %1369 = vmatpush1.msra.mxu0 0.0
  %1370 = vmatprep.subr.mxu0 0.0
  %1371 = vmatpush1.msra.mxu0 0.0
  %1372 = vmatprep.subr.mxu0 0.0
  %1373 = vmatpush1.msra.mxu0 0.0
  %1374 = vmatprep.subr.mxu0 0.0
  %1375 = vmatpush1.msra.mxu0 0.0
  %1376 = vmatprep.subr.mxu0 0.0
  %1377 = vmatpush1.msra.mxu0 0.0
  %1378 = vmatprep.subr.mxu0 0.0
  %1379 = vmatpush1.msra.mxu0 0.0
  %1380 = vmatprep.subr.mxu0 0.0
  %1381 = vmatpush1.msra.mxu0 0.0
  %1382 = vmatprep.mubr.f32.mxu0 0.0
  %1383 = vmatmul.mubr.f32.gmra.mrb[0].mxu0 %v1064
  %v1384 = vpop.f32.mrb[0].mxu0
  %v1385 = vadd.f32 0.0, %v1384
  %v1386 = vpop.f32.mrb[0].mxu0
  %1387 = vdwg.mxu0
  %v1388 = vadd.f32 %v1244, %v1314
  %v1389 = vxor.u32 %v1388, 2147483648
  %v1390 = vmul.f32 %v1389, 1.442695
  %v1391 = vpow.pop %v1390
  %v1392 = vadd.f32 %v1391, 1.0
  %v1393 = vrcp.pop %v1392
  %v1394 = vmul.f32 1.0, %v1393
  %v1395 = vadd.f32 %v1245, %v1316
  %v1396 = vxor.u32 %v1395, 2147483648
  %v1397 = vmul.f32 %v1396, 1.442695
  %v1398 = vpow.pop %v1397
  %v1399 = vadd.f32 %v1398, 1.0
  %v1400 = vrcp.pop %v1399
  %v1401 = vmul.f32 1.0, %v1400
  %v1402 = vadd.f32 %v1385, %v705
  %v1403 = vmul.f32 %v1394, %v1402
  %v1404 = vadd.f32 %v1246, %v1403
  %v1405 = vtanh.pop %v1404
  %v1406 = vsub.f32 1.0, %v1401
  %v1407 = vmul.f32 %v1406, %v1405
  %v1408 = vmul.f32 %v1401, %v1064
  %v1409 = vadd.f32 %v1407, %v1408
  %s1410 = scalar_lea.vmem [#allocation3], 120
  %v1411 = vld [vmem:[%s1410] sm:$0xff]
  %v1412 = vld [vmem:[%s1410 + $0x8] sm:$0xff]
  %v1413 = vld [vmem:[%s1410 + $0x10] sm:$0xff]
  %1414 = vmatprep.subr.mxu0 %v493
  %1415 = vmatpush1.msra.mxu0 %v492
  %1416 = vmatprep.subr.mxu0 %v496
  %1417 = vmatpush1.msra.mxu0 %v495
  %1418 = vmatprep.subr.mxu0 %v499
  %1419 = vmatpush1.msra.mxu0 %v498
  %1420 = vmatprep.subr.mxu0 %v502
  %1421 = vmatpush1.msra.mxu0 %v501
  %1422 = vmatprep.subr.mxu0 %v505
  %1423 = vmatpush1.msra.mxu0 %v504
  %1424 = vmatprep.subr.mxu0 %v508
  %1425 = vmatpush1.msra.mxu0 %v507
  %1426 = vmatprep.subr.mxu0 %v511
  %1427 = vmatpush1.msra.mxu0 %v510
  %1428 = vmatprep.subr.mxu0 %v514
  %1429 = vmatpush1.msra.mxu0 %v513
  %1430 = vmatprep.subr.mxu0 %v517
  %1431 = vmatpush1.msra.mxu0 %v516
  %1432 = vmatprep.subr.mxu0 %v520
  %1433 = vmatpush1.msra.mxu0 %v519
  %1434 = vmatprep.subr.mxu0 %v523
  %1435 = vmatpush1.msra.mxu0 %v522
  %1436 = vmatprep.subr.mxu0 %v526
  %1437 = vmatpush1.msra.mxu0 %v525
  %1438 = vmatprep.subr.mxu0 %v529
  %1439 = vmatpush1.msra.mxu0 %v528
  %1440 = vmatprep.subr.mxu0 %v532
  %1441 = vmatpush1.msra.mxu0 %v531
  %1442 = vmatprep.subr.mxu0 %v535
  %1443 = vmatpush1.msra.mxu0 %v534
  %1444 = vmatprep.subr.mxu0 %v538
  %1445 = vmatpush1.msra.mxu0 %v537
  %1446 = vmatprep.subr.mxu0 0.0
  %1447 = vmatpush1.msra.mxu0 0.0
  %1448 = vmatprep.subr.mxu0 0.0
  %1449 = vmatpush1.msra.mxu0 0.0
  %1450 = vmatprep.subr.mxu0 0.0
  %1451 = vmatpush1.msra.mxu0 0.0
  %1452 = vmatprep.subr.mxu0 0.0
  %1453 = vmatpush1.msra.mxu0 0.0
  %1454 = vmatprep.subr.mxu0 0.0
  %1455 = vmatpush1.msra.mxu0 0.0
  %1456 = vmatprep.subr.mxu0 0.0
  %1457 = vmatpush1.msra.mxu0 0.0
  %1458 = vmatprep.subr.mxu0 0.0
  %1459 = vmatpush1.msra.mxu0 0.0
  %1460 = vmatprep.subr.mxu0 0.0
  %1461 = vmatpush1.msra.mxu0 0.0
  %1462 = vmatprep.subr.mxu0 0.0
  %1463 = vmatpush1.msra.mxu0 0.0
  %1464 = vmatprep.subr.mxu0 0.0
  %1465 = vmatpush1.msra.mxu0 0.0
  %1466 = vmatprep.subr.mxu0 0.0
  %1467 = vmatpush1.msra.mxu0 0.0
  %1468 = vmatprep.subr.mxu0 0.0
  %1469 = vmatpush1.msra.mxu0 0.0
  %1470 = vmatprep.subr.mxu0 0.0
  %1471 = vmatpush1.msra.mxu0 0.0
  %1472 = vmatprep.subr.mxu0 0.0
  %1473 = vmatpush1.msra.mxu0 0.0
  %1474 = vmatprep.subr.mxu0 0.0
  %1475 = vmatpush1.msra.mxu0 0.0
  %1476 = vmatprep.subr.mxu0 0.0
  %1477 = vmatpush1.msra.mxu0 0.0
  %1478 = vmatprep.mubr.f32.mxu0 0.0
  %1479 = vmatmul.mubr.f32.gmra.mrb[0].mxu0 %v1231
  %v1480 = vpop.f32.mrb[0].mxu0
  %v1481 = vadd.f32 0.0, %v1480
  %v1482 = vpop.f32.mrb[0].mxu0
  %v1483 = vadd.f32 0.0, %v1482
  %1484 = vdwg.mxu0
  %1485 = vmatprep.subr.mxu0 0.0
  %1486 = vmatpush1.msra.mxu0 %v494
  %1487 = vmatprep.subr.mxu0 0.0
  %1488 = vmatpush1.msra.mxu0 %v497
  %1489 = vmatprep.subr.mxu0 0.0
  %1490 = vmatpush1.msra.mxu0 %v500
  %1491 = vmatprep.subr.mxu0 0.0
  %1492 = vmatpush1.msra.mxu0 %v503
  %1493 = vmatprep.subr.mxu0 0.0
  %1494 = vmatpush1.msra.mxu0 %v506
  %1495 = vmatprep.subr.mxu0 0.0
  %1496 = vmatpush1.msra.mxu0 %v509
  %1497 = vmatprep.subr.mxu0 0.0
  %1498 = vmatpush1.msra.mxu0 %v512
  %1499 = vmatprep.subr.mxu0 0.0
  %1500 = vmatpush1.msra.mxu0 %v515
  %1501 = vmatprep.subr.mxu0 0.0
  %1502 = vmatpush1.msra.mxu0 %v518
  %1503 = vmatprep.subr.mxu0 0.0
  %1504 = vmatpush1.msra.mxu0 %v521
  %1505 = vmatprep.subr.mxu0 0.0
  %1506 = vmatpush1.msra.mxu0 %v524
  %1507 = vmatprep.subr.mxu0 0.0
  %1508 = vmatpush1.msra.mxu0 %v527
  %1509 = vmatprep.subr.mxu0 0.0
  %1510 = vmatpush1.msra.mxu0 %v530
  %1511 = vmatprep.subr.mxu0 0.0
  %1512 = vmatpush1.msra.mxu0 %v533
  %1513 = vmatprep.subr.mxu0 0.0
  %1514 = vmatpush1.msra.mxu0 %v536
  %1515 = vmatprep.subr.mxu0 0.0
  %1516 = vmatpush1.msra.mxu0 %v539
  %1517 = vmatprep.subr.mxu0 0.0
  %1518 = vmatpush1.msra.mxu0 0.0
  %1519 = vmatprep.subr.mxu0 0.0
  %1520 = vmatpush1.msra.mxu0 0.0
  %1521 = vmatprep.subr.mxu0 0.0
  %1522 = vmatpush1.msra.mxu0 0.0
  %1523 = vmatprep.subr.mxu0 0.0
  %1524 = vmatpush1.msra.mxu0 0.0
  %1525 = vmatprep.subr.mxu0 0.0
  %1526 = vmatpush1.msra.mxu0 0.0
  %1527 = vmatprep.subr.mxu0 0.0
  %1528 = vmatpush1.msra.mxu0 0.0
  %1529 = vmatprep.subr.mxu0 0.0
  %1530 = vmatpush1.msra.mxu0 0.0
  %1531 = vmatprep.subr.mxu0 0.0
  %1532 = vmatpush1.msra.mxu0 0.0
  %1533 = vmatprep.subr.mxu0 0.0
  %1534 = vmatpush1.msra.mxu0 0.0
  %1535 = vmatprep.subr.mxu0 0.0
  %1536 = vmatpush1.msra.mxu0 0.0
  %1537 = vmatprep.subr.mxu0 0.0
  %1538 = vmatpush1.msra.mxu0 0.0
  %1539 = vmatprep.subr.mxu0 0.0
  %1540 = vmatpush1.msra.mxu0 0.0
  %1541 = vmatprep.subr.mxu0 0.0
  %1542 = vmatpush1.msra.mxu0 0.0
  %1543 = vmatprep.subr.mxu0 0.0
  %1544 = vmatpush1.msra.mxu0 0.0
  %1545 = vmatprep.subr.mxu0 0.0
  %1546 = vmatpush1.msra.mxu0 0.0
  %1547 = vmatprep.subr.mxu0 0.0
  %1548 = vmatpush1.msra.mxu0 0.0
  %1549 = vmatprep.mubr.f32.mxu0 0.0
  %1550 = vmatmul.mubr.f32.gmra.mrb[0].mxu0 %v1231
  %v1551 = vpop.f32.mrb[0].mxu0
  %v1552 = vadd.f32 0.0, %v1551
  %v1553 = vpop.f32.mrb[0].mxu0
  %1554 = vdwg.mxu0
  %v1555 = vadd.f32 %v1411, %v1481
  %v1556 = vxor.u32 %v1555, 2147483648
  %v1557 = vmul.f32 %v1556, 1.442695
  %v1558 = vpow.pop %v1557
  %v1559 = vadd.f32 %v1558, 1.0
  %v1560 = vrcp.pop %v1559
  %v1561 = vmul.f32 1.0, %v1560
  %v1562 = vadd.f32 %v1412, %v1483
  %v1563 = vxor.u32 %v1562, 2147483648
  %v1564 = vmul.f32 %v1563, 1.442695
  %v1565 = vpow.pop %v1564
  %v1566 = vadd.f32 %v1565, 1.0
  %v1567 = vrcp.pop %v1566
  %v1568 = vmul.f32 1.0, %v1567
  %v1569 = vadd.f32 %v1552, %v878
  %v1570 = vmul.f32 %v1561, %v1569
  %v1571 = vadd.f32 %v1413, %v1570
  %v1572 = vtanh.pop %v1571
  %v1573 = vsub.f32 1.0, %v1568
  %v1574 = vmul.f32 %v1573, %v1572
  %v1575 = vmul.f32 %v1568, %v1231
  %v1576 = vadd.f32 %v1574, %v1575
  %s1577 = scalar_lea.vmem %s8, 32
  %1578 = vst [vmem:[%s1577] sm:$0xff] %v1409
  %s1579 = scalar_lea.vmem %s8, 88
  %1580 = vst [vmem:[%s1579] sm:$0xff] %v1576
  %vm1581 = vcmp.eq.s32.totalorder %v542, 2
  %v1582 = vsel %vm1581, 1, 0
  %1583 = vset.pattern.permute.xlu0 0
  %1584 = vperm.xlu0 %1583, %v1582
  %v1585 = vpop.permute.xlu0 %1584
  %vm1586 = vcmp.eq.s32.totalorder %v1585, 1
  %v1587 = vsel %vm1586, %v1409, %v1242
  %s1588 = scalar_lea.vmem [#allocation2], 72
  %v1589 = vld [vmem:[%s1588] sm:$0xff]
  %v1590 = vld [vmem:[%s1588 + $0x8] sm:$0xff]
  %v1591 = vld [vmem:[%s1588 + $0x10] sm:$0xff]
  %1592 = vmatprep.subr.mxu0 %v445
  %1593 = vmatpush1.msra.mxu0 %v444
  %1594 = vmatprep.subr.mxu0 %v448
  %1595 = vmatpush1.msra.mxu0 %v447
  %1596 = vmatprep.subr.mxu0 %v451
  %1597 = vmatpush1.msra.mxu0 %v450
  %1598 = vmatprep.subr.mxu0 %v454
  %1599 = vmatpush1.msra.mxu0 %v453
  %1600 = vmatprep.subr.mxu0 %v457
  %1601 = vmatpush1.msra.mxu0 %v456
  %1602 = vmatprep.subr.mxu0 %v460
  %1603 = vmatpush1.msra.mxu0 %v459
  %1604 = vmatprep.subr.mxu0 %v463
  %1605 = vmatpush1.msra.mxu0 %v462
  %1606 = vmatprep.subr.mxu0 %v466
  %1607 = vmatpush1.msra.mxu0 %v465
  %1608 = vmatprep.subr.mxu0 %v469
  %1609 = vmatpush1.msra.mxu0 %v468
  %1610 = vmatprep.subr.mxu0 %v472
  %1611 = vmatpush1.msra.mxu0 %v471
  %1612 = vmatprep.subr.mxu0 %v475
  %1613 = vmatpush1.msra.mxu0 %v474
  %1614 = vmatprep.subr.mxu0 %v478
  %1615 = vmatpush1.msra.mxu0 %v477
  %1616 = vmatprep.subr.mxu0 %v481
  %1617 = vmatpush1.msra.mxu0 %v480
  %1618 = vmatprep.subr.mxu0 %v484
  %1619 = vmatpush1.msra.mxu0 %v483
  %1620 = vmatprep.subr.mxu0 %v487
  %1621 = vmatpush1.msra.mxu0 %v486
  %1622 = vmatprep.subr.mxu0 %v490
  %1623 = vmatpush1.msra.mxu0 %v489
  %1624 = vmatprep.subr.mxu0 0.0
  %1625 = vmatpush1.msra.mxu0 0.0
  %1626 = vmatprep.subr.mxu0 0.0
  %1627 = vmatpush1.msra.mxu0 0.0
  %1628 = vmatprep.subr.mxu0 0.0
  %1629 = vmatpush1.msra.mxu0 0.0
  %1630 = vmatprep.subr.mxu0 0.0
  %1631 = vmatpush1.msra.mxu0 0.0
  %1632 = vmatprep.subr.mxu0 0.0
  %1633 = vmatpush1.msra.mxu0 0.0
  %1634 = vmatprep.subr.mxu0 0.0
  %1635 = vmatpush1.msra.mxu0 0.0
  %1636 = vmatprep.subr.mxu0 0.0
  %1637 = vmatpush1.msra.mxu0 0.0
  %1638 = vmatprep.subr.mxu0 0.0
  %1639 = vmatpush1.msra.mxu0 0.0
  %1640 = vmatprep.subr.mxu0 0.0
  %1641 = vmatpush1.msra.mxu0 0.0
  %1642 = vmatprep.subr.mxu0 0.0
  %1643 = vmatpush1.msra.mxu0 0.0
  %1644 = vmatprep.subr.mxu0 0.0
  %1645 = vmatpush1.msra.mxu0 0.0
  %1646 = vmatprep.subr.mxu0 0.0
  %1647 = vmatpush1.msra.mxu0 0.0
  %1648 = vmatprep.subr.mxu0 0.0
  %1649 = vmatpush1.msra.mxu0 0.0
  %1650 = vmatprep.subr.mxu0 0.0
  %1651 = vmatpush1.msra.mxu0 0.0
  %1652 = vmatprep.subr.mxu0 0.0
  %1653 = vmatpush1.msra.mxu0 0.0
  %1654 = vmatprep.subr.mxu0 0.0
  %1655 = vmatpush1.msra.mxu0 0.0
  %1656 = vmatprep.mubr.f32.mxu0 0.0
  %1657 = vmatmul.mubr.f32.gmra.mrb[0].mxu0 %v1409
  %v1658 = vpop.f32.mrb[0].mxu0
  %v1659 = vadd.f32 0.0, %v1658
  %v1660 = vpop.f32.mrb[0].mxu0
  %v1661 = vadd.f32 0.0, %v1660
  %1662 = vdwg.mxu0
  %1663 = vmatprep.subr.mxu0 0.0
  %1664 = vmatpush1.msra.mxu0 %v446
  %1665 = vmatprep.subr.mxu0 0.0
  %1666 = vmatpush1.msra.mxu0 %v449
  %1667 = vmatprep.subr.mxu0 0.0
  %1668 = vmatpush1.msra.mxu0 %v452
  %1669 = vmatprep.subr.mxu0 0.0
  %1670 = vmatpush1.msra.mxu0 %v455
  %1671 = vmatprep.subr.mxu0 0.0
  %1672 = vmatpush1.msra.mxu0 %v458
  %1673 = vmatprep.subr.mxu0 0.0
  %1674 = vmatpush1.msra.mxu0 %v461
  %1675 = vmatprep.subr.mxu0 0.0
  %1676 = vmatpush1.msra.mxu0 %v464
  %1677 = vmatprep.subr.mxu0 0.0
  %1678 = vmatpush1.msra.mxu0 %v467
  %1679 = vmatprep.subr.mxu0 0.0
  %1680 = vmatpush1.msra.mxu0 %v470
  %1681 = vmatprep.subr.mxu0 0.0
  %1682 = vmatpush1.msra.mxu0 %v473
  %1683 = vmatprep.subr.mxu0 0.0
  %1684 = vmatpush1.msra.mxu0 %v476
  %1685 = vmatprep.subr.mxu0 0.0
  %1686 = vmatpush1.msra.mxu0 %v479
  %1687 = vmatprep.subr.mxu0 0.0
  %1688 = vmatpush1.msra.mxu0 %v482
  %1689 = vmatprep.subr.mxu0 0.0
  %1690 = vmatpush1.msra.mxu0 %v485
  %1691 = vmatprep.subr.mxu0 0.0
  %1692 = vmatpush1.msra.mxu0 %v488
  %1693 = vmatprep.subr.mxu0 0.0
  %1694 = vmatpush1.msra.mxu0 %v491
  %1695 = vmatprep.subr.mxu0 0.0
  %1696 = vmatpush1.msra.mxu0 0.0
  %1697 = vmatprep.subr.mxu0 0.0
  %1698 = vmatpush1.msra.mxu0 0.0
  %1699 = vmatprep.subr.mxu0 0.0
  %1700 = vmatpush1.msra.mxu0 0.0
  %1701 = vmatprep.subr.mxu0 0.0
  %1702 = vmatpush1.msra.mxu0 0.0
  %1703 = vmatprep.subr.mxu0 0.0
  %1704 = vmatpush1.msra.mxu0 0.0
  %1705 = vmatprep.subr.mxu0 0.0
  %1706 = vmatpush1.msra.mxu0 0.0
  %1707 = vmatprep.subr.mxu0 0.0
  %1708 = vmatpush1.msra.mxu0 0.0
  %1709 = vmatprep.subr.mxu0 0.0
  %1710 = vmatpush1.msra.mxu0 0.0
  %1711 = vmatprep.subr.mxu0 0.0
  %1712 = vmatpush1.msra.mxu0 0.0
  %1713 = vmatprep.subr.mxu0 0.0
  %1714 = vmatpush1.msra.mxu0 0.0
  %1715 = vmatprep.subr.mxu0 0.0
  %1716 = vmatpush1.msra.mxu0 0.0
  %1717 = vmatprep.subr.mxu0 0.0
  %1718 = vmatpush1.msra.mxu0 0.0
  %1719 = vmatprep.subr.mxu0 0.0
  %1720 = vmatpush1.msra.mxu0 0.0
  %1721 = vmatprep.subr.mxu0 0.0
  %1722 = vmatpush1.msra.mxu0 0.0
  %1723 = vmatprep.subr.mxu0 0.0
  %1724 = vmatpush1.msra.mxu0 0.0
  %1725 = vmatprep.subr.mxu0 0.0
  %1726 = vmatpush1.msra.mxu0 0.0
  %1727 = vmatprep.mubr.f32.mxu0 0.0
  %1728 = vmatmul.mubr.f32.gmra.mrb[0].mxu0 %v1409
  %v1729 = vpop.f32.mrb[0].mxu0
  %v1730 = vadd.f32 0.0, %v1729
  %v1731 = vpop.f32.mrb[0].mxu0
  %1732 = vdwg.mxu0
  %v1733 = vadd.f32 %v1589, %v1659
  %v1734 = vxor.u32 %v1733, 2147483648
  %v1735 = vmul.f32 %v1734, 1.442695
  %v1736 = vpow.pop %v1735
  %v1737 = vadd.f32 %v1736, 1.0
  %v1738 = vrcp.pop %v1737
  %v1739 = vmul.f32 1.0, %v1738
  %v1740 = vadd.f32 %v1590, %v1661
  %v1741 = vxor.u32 %v1740, 2147483648
  %v1742 = vmul.f32 %v1741, 1.442695
  %v1743 = vpow.pop %v1742
  %v1744 = vadd.f32 %v1743, 1.0
  %v1745 = vrcp.pop %v1744
  %v1746 = vmul.f32 1.0, %v1745
  %v1747 = vadd.f32 %v1730, %v705
  %v1748 = vmul.f32 %v1739, %v1747
  %v1749 = vadd.f32 %v1591, %v1748
  %v1750 = vtanh.pop %v1749
  %v1751 = vsub.f32 1.0, %v1746
  %v1752 = vmul.f32 %v1751, %v1750
  %v1753 = vmul.f32 %v1746, %v1409
  %v1754 = vadd.f32 %v1752, %v1753
  %s1755 = scalar_lea.vmem [#allocation3], 96
  %v1756 = vld [vmem:[%s1755] sm:$0xff]
  %v1757 = vld [vmem:[%s1755 + $0x8] sm:$0xff]
  %v1758 = vld [vmem:[%s1755 + $0x10] sm:$0xff]
  %1759 = vmatprep.subr.mxu0 %v493
  %1760 = vmatpush1.msra.mxu0 %v492
  %1761 = vmatprep.subr.mxu0 %v496
  %1762 = vmatpush1.msra.mxu0 %v495
  %1763 = vmatprep.subr.mxu0 %v499
  %1764 = vmatpush1.msra.mxu0 %v498
  %1765 = vmatprep.subr.mxu0 %v502
  %1766 = vmatpush1.msra.mxu0 %v501
  %1767 = vmatprep.subr.mxu0 %v505
  %1768 = vmatpush1.msra.mxu0 %v504
  %1769 = vmatprep.subr.mxu0 %v508
  %1770 = vmatpush1.msra.mxu0 %v507
  %1771 = vmatprep.subr.mxu0 %v511
  %1772 = vmatpush1.msra.mxu0 %v510
  %1773 = vmatprep.subr.mxu0 %v514
  %1774 = vmatpush1.msra.mxu0 %v513
  %1775 = vmatprep.subr.mxu0 %v517
  %1776 = vmatpush1.msra.mxu0 %v516
  %1777 = vmatprep.subr.mxu0 %v520
  %1778 = vmatpush1.msra.mxu0 %v519
  %1779 = vmatprep.subr.mxu0 %v523
  %1780 = vmatpush1.msra.mxu0 %v522
  %1781 = vmatprep.subr.mxu0 %v526
  %1782 = vmatpush1.msra.mxu0 %v525
  %1783 = vmatprep.subr.mxu0 %v529
  %1784 = vmatpush1.msra.mxu0 %v528
  %1785 = vmatprep.subr.mxu0 %v532
  %1786 = vmatpush1.msra.mxu0 %v531
  %1787 = vmatprep.subr.mxu0 %v535
  %1788 = vmatpush1.msra.mxu0 %v534
  %1789 = vmatprep.subr.mxu0 %v538
  %1790 = vmatpush1.msra.mxu0 %v537
  %1791 = vmatprep.subr.mxu0 0.0
  %1792 = vmatpush1.msra.mxu0 0.0
  %1793 = vmatprep.subr.mxu0 0.0
  %1794 = vmatpush1.msra.mxu0 0.0
  %1795 = vmatprep.subr.mxu0 0.0
  %1796 = vmatpush1.msra.mxu0 0.0
  %1797 = vmatprep.subr.mxu0 0.0
  %1798 = vmatpush1.msra.mxu0 0.0
  %1799 = vmatprep.subr.mxu0 0.0
  %1800 = vmatpush1.msra.mxu0 0.0
  %1801 = vmatprep.subr.mxu0 0.0
  %1802 = vmatpush1.msra.mxu0 0.0
  %1803 = vmatprep.subr.mxu0 0.0
  %1804 = vmatpush1.msra.mxu0 0.0
  %1805 = vmatprep.subr.mxu0 0.0
  %1806 = vmatpush1.msra.mxu0 0.0
  %1807 = vmatprep.subr.mxu0 0.0
  %1808 = vmatpush1.msra.mxu0 0.0
  %1809 = vmatprep.subr.mxu0 0.0
  %1810 = vmatpush1.msra.mxu0 0.0
  %1811 = vmatprep.subr.mxu0 0.0
  %1812 = vmatpush1.msra.mxu0 0.0
  %1813 = vmatprep.subr.mxu0 0.0
  %1814 = vmatpush1.msra.mxu0 0.0
  %1815 = vmatprep.subr.mxu0 0.0
  %1816 = vmatpush1.msra.mxu0 0.0
  %1817 = vmatprep.subr.mxu0 0.0
  %1818 = vmatpush1.msra.mxu0 0.0
  %1819 = vmatprep.subr.mxu0 0.0
  %1820 = vmatpush1.msra.mxu0 0.0
  %1821 = vmatprep.subr.mxu0 0.0
  %1822 = vmatpush1.msra.mxu0 0.0
  %1823 = vmatprep.mubr.f32.mxu0 0.0
  %1824 = vmatmul.mubr.f32.gmra.mrb[0].mxu0 %v1576
  %v1825 = vpop.f32.mrb[0].mxu0
  %v1826 = vadd.f32 0.0, %v1825
  %v1827 = vpop.f32.mrb[0].mxu0
  %v1828 = vadd.f32 0.0, %v1827
  %1829 = vdwg.mxu0
  %1830 = vmatprep.subr.mxu0 0.0
  %1831 = vmatpush1.msra.mxu0 %v494
  %1832 = vmatprep.subr.mxu0 0.0
  %1833 = vmatpush1.msra.mxu0 %v497
  %1834 = vmatprep.subr.mxu0 0.0
  %1835 = vmatpush1.msra.mxu0 %v500
  %1836 = vmatprep.subr.mxu0 0.0
  %1837 = vmatpush1.msra.mxu0 %v503
  %1838 = vmatprep.subr.mxu0 0.0
  %1839 = vmatpush1.msra.mxu0 %v506
  %1840 = vmatprep.subr.mxu0 0.0
  %1841 = vmatpush1.msra.mxu0 %v509
  %1842 = vmatprep.subr.mxu0 0.0
  %1843 = vmatpush1.msra.mxu0 %v512
  %1844 = vmatprep.subr.mxu0 0.0
  %1845 = vmatpush1.msra.mxu0 %v515
  %1846 = vmatprep.subr.mxu0 0.0
  %1847 = vmatpush1.msra.mxu0 %v518
  %1848 = vmatprep.subr.mxu0 0.0
  %1849 = vmatpush1.msra.mxu0 %v521
  %1850 = vmatprep.subr.mxu0 0.0
  %1851 = vmatpush1.msra.mxu0 %v524
  %1852 = vmatprep.subr.mxu0 0.0
  %1853 = vmatpush1.msra.mxu0 %v527
  %1854 = vmatprep.subr.mxu0 0.0
  %1855 = vmatpush1.msra.mxu0 %v530
  %1856 = vmatprep.subr.mxu0 0.0
  %1857 = vmatpush1.msra.mxu0 %v533
  %1858 = vmatprep.subr.mxu0 0.0
  %1859 = vmatpush1.msra.mxu0 %v536
  %1860 = vmatprep.subr.mxu0 0.0
  %1861 = vmatpush1.msra.mxu0 %v539
  %1862 = vmatprep.subr.mxu0 0.0
  %1863 = vmatpush1.msra.mxu0 0.0
  %1864 = vmatprep.subr.mxu0 0.0
  %1865 = vmatpush1.msra.mxu0 0.0
  %1866 = vmatprep.subr.mxu0 0.0
  %1867 = vmatpush1.msra.mxu0 0.0
  %1868 = vmatprep.subr.mxu0 0.0
  %1869 = vmatpush1.msra.mxu0 0.0
  %1870 = vmatprep.subr.mxu0 0.0
  %1871 = vmatpush1.msra.mxu0 0.0
  %1872 = vmatprep.subr.mxu0 0.0
  %1873 = vmatpush1.msra.mxu0 0.0
  %1874 = vmatprep.subr.mxu0 0.0
  %1875 = vmatpush1.msra.mxu0 0.0
  %1876 = vmatprep.subr.mxu0 0.0
  %1877 = vmatpush1.msra.mxu0 0.0
  %1878 = vmatprep.subr.mxu0 0.0
  %1879 = vmatpush1.msra.mxu0 0.0
  %1880 = vmatprep.subr.mxu0 0.0
  %1881 = vmatpush1.msra.mxu0 0.0
  %1882 = vmatprep.subr.mxu0 0.0
  %1883 = vmatpush1.msra.mxu0 0.0
  %1884 = vmatprep.subr.mxu0 0.0
  %1885 = vmatpush1.msra.mxu0 0.0
  %1886 = vmatprep.subr.mxu0 0.0
  %1887 = vmatpush1.msra.mxu0 0.0
  %1888 = vmatprep.subr.mxu0 0.0
  %1889 = vmatpush1.msra.mxu0 0.0
  %1890 = vmatprep.subr.mxu0 0.0
  %1891 = vmatpush1.msra.mxu0 0.0
  %1892 = vmatprep.subr.mxu0 0.0
  %1893 = vmatpush1.msra.mxu0 0.0
  %1894 = vmatprep.mubr.f32.mxu0 0.0
  %1895 = vmatmul.mubr.f32.gmra.mrb[0].mxu0 %v1576
  %v1896 = vpop.f32.mrb[0].mxu0
  %v1897 = vadd.f32 0.0, %v1896
  %v1898 = vpop.f32.mrb[0].mxu0
  %1899 = vdwg.mxu0
  %v1900 = vadd.f32 %v1756, %v1826
  %v1901 = vxor.u32 %v1900, 2147483648
  %v1902 = vmul.f32 %v1901, 1.442695
  %v1903 = vpow.pop %v1902
  %v1904 = vadd.f32 %v1903, 1.0
  %v1905 = vrcp.pop %v1904
  %v1906 = vmul.f32 1.0, %v1905
  %v1907 = vadd.f32 %v1757, %v1828
  %v1908 = vxor.u32 %v1907, 2147483648
  %v1909 = vmul.f32 %v1908, 1.442695
  %v1910 = vpow.pop %v1909
  %v1911 = vadd.f32 %v1910, 1.0
  %v1912 = vrcp.pop %v1911
  %v1913 = vmul.f32 1.0, %v1912
  %v1914 = vadd.f32 %v1897, %v878
  %v1915 = vmul.f32 %v1906, %v1914
  %v1916 = vadd.f32 %v1758, %v1915
  %v1917 = vtanh.pop %v1916
  %v1918 = vsub.f32 1.0, %v1913
  %v1919 = vmul.f32 %v1918, %v1917
  %v1920 = vmul.f32 %v1913, %v1576
  %v1921 = vadd.f32 %v1919, %v1920
  %s1922 = scalar_lea.vmem %s8, 48
  %1923 = vst [vmem:[%s1922] sm:$0xff] %v1754
  %s1924 = scalar_lea.vmem %s8, 72
  %1925 = vst [vmem:[%s1924] sm:$0xff] %v1921
  %vm1926 = vcmp.eq.s32.totalorder %v542, 3
  %v1927 = vsel %vm1926, 1, 0
  %1928 = vset.pattern.permute.xlu0 0
  %1929 = vperm.xlu0 %1928, %v1927
  %v1930 = vpop.permute.xlu0 %1929
  %vm1931 = vcmp.eq.s32.totalorder %v1930, 1
  %v1932 = vsel %vm1931, %v1754, %v1587
  %s1933 = scalar_lea.vmem [#allocation2], 96
  %v1934 = vld [vmem:[%s1933] sm:$0xff]
  %v1935 = vld [vmem:[%s1933 + $0x8] sm:$0xff]
  %v1936 = vld [vmem:[%s1933 + $0x10] sm:$0xff]
  %1937 = vmatprep.subr.mxu0 %v445
  %1938 = vmatpush1.msra.mxu0 %v444
  %1939 = vmatprep.subr.mxu0 %v448
  %1940 = vmatpush1.msra.mxu0 %v447
  %1941 = vmatprep.subr.mxu0 %v451
  %1942 = vmatpush1.msra.mxu0 %v450
  %1943 = vmatprep.subr.mxu0 %v454
  %1944 = vmatpush1.msra.mxu0 %v453
  %1945 = vmatprep.subr.mxu0 %v457
  %1946 = vmatpush1.msra.mxu0 %v456
  %1947 = vmatprep.subr.mxu0 %v460
  %1948 = vmatpush1.msra.mxu0 %v459
  %1949 = vmatprep.subr.mxu0 %v463
  %1950 = vmatpush1.msra.mxu0 %v462
  %1951 = vmatprep.subr.mxu0 %v466
  %1952 = vmatpush1.msra.mxu0 %v465
  %1953 = vmatprep.subr.mxu0 %v469
  %1954 = vmatpush1.msra.mxu0 %v468
  %1955 = vmatprep.subr.mxu0 %v472
  %1956 = vmatpush1.msra.mxu0 %v471
  %1957 = vmatprep.subr.mxu0 %v475
  %1958 = vmatpush1.msra.mxu0 %v474
  %1959 = vmatprep.subr.mxu0 %v478
  %1960 = vmatpush1.msra.mxu0 %v477
  %1961 = vmatprep.subr.mxu0 %v481
  %1962 = vmatpush1.msra.mxu0 %v480
  %1963 = vmatprep.subr.mxu0 %v484
  %1964 = vmatpush1.msra.mxu0 %v483
  %1965 = vmatprep.subr.mxu0 %v487
  %1966 = vmatpush1.msra.mxu0 %v486
  %1967 = vmatprep.subr.mxu0 %v490
  %1968 = vmatpush1.msra.mxu0 %v489
  %1969 = vmatprep.subr.mxu0 0.0
  %1970 = vmatpush1.msra.mxu0 0.0
  %1971 = vmatprep.subr.mxu0 0.0
  %1972 = vmatpush1.msra.mxu0 0.0
  %1973 = vmatprep.subr.mxu0 0.0
  %1974 = vmatpush1.msra.mxu0 0.0
  %1975 = vmatprep.subr.mxu0 0.0
  %1976 = vmatpush1.msra.mxu0 0.0
  %1977 = vmatprep.subr.mxu0 0.0
  %1978 = vmatpush1.msra.mxu0 0.0
  %1979 = vmatprep.subr.mxu0 0.0
  %1980 = vmatpush1.msra.mxu0 0.0
  %1981 = vmatprep.subr.mxu0 0.0
  %1982 = vmatpush1.msra.mxu0 0.0
  %1983 = vmatprep.subr.mxu0 0.0
  %1984 = vmatpush1.msra.mxu0 0.0
  %1985 = vmatprep.subr.mxu0 0.0
  %1986 = vmatpush1.msra.mxu0 0.0
  %1987 = vmatprep.subr.mxu0 0.0
  %1988 = vmatpush1.msra.mxu0 0.0
  %1989 = vmatprep.subr.mxu0 0.0
  %1990 = vmatpush1.msra.mxu0 0.0
  %1991 = vmatprep.subr.mxu0 0.0
  %1992 = vmatpush1.msra.mxu0 0.0
  %1993 = vmatprep.subr.mxu0 0.0
  %1994 = vmatpush1.msra.mxu0 0.0
  %1995 = vmatprep.subr.mxu0 0.0
  %1996 = vmatpush1.msra.mxu0 0.0
  %1997 = vmatprep.subr.mxu0 0.0
  %1998 = vmatpush1.msra.mxu0 0.0
  %1999 = vmatprep.subr.mxu0 0.0
  %2000 = vmatpush1.msra.mxu0 0.0
  %2001 = vmatprep.mubr.f32.mxu0 0.0
  %2002 = vmatmul.mubr.f32.gmra.mrb[0].mxu0 %v1754
  %v2003 = vpop.f32.mrb[0].mxu0
  %v2004 = vadd.f32 0.0, %v2003
  %v2005 = vpop.f32.mrb[0].mxu0
  %v2006 = vadd.f32 0.0, %v2005
  %2007 = vdwg.mxu0
  %2008 = vmatprep.subr.mxu0 0.0
  %2009 = vmatpush1.msra.mxu0 %v446
  %2010 = vmatprep.subr.mxu0 0.0
  %2011 = vmatpush1.msra.mxu0 %v449
  %2012 = vmatprep.subr.mxu0 0.0
  %2013 = vmatpush1.msra.mxu0 %v452
  %2014 = vmatprep.subr.mxu0 0.0
  %2015 = vmatpush1.msra.mxu0 %v455
  %2016 = vmatprep.subr.mxu0 0.0
  %2017 = vmatpush1.msra.mxu0 %v458
  %2018 = vmatprep.subr.mxu0 0.0
  %2019 = vmatpush1.msra.mxu0 %v461
  %2020 = vmatprep.subr.mxu0 0.0
  %2021 = vmatpush1.msra.mxu0 %v464
  %2022 = vmatprep.subr.mxu0 0.0
  %2023 = vmatpush1.msra.mxu0 %v467
  %2024 = vmatprep.subr.mxu0 0.0
  %2025 = vmatpush1.msra.mxu0 %v470
  %2026 = vmatprep.subr.mxu0 0.0
  %2027 = vmatpush1.msra.mxu0 %v473
  %2028 = vmatprep.subr.mxu0 0.0
  %2029 = vmatpush1.msra.mxu0 %v476
  %2030 = vmatprep.subr.mxu0 0.0
  %2031 = vmatpush1.msra.mxu0 %v479
  %2032 = vmatprep.subr.mxu0 0.0
  %2033 = vmatpush1.msra.mxu0 %v482
  %2034 = vmatprep.subr.mxu0 0.0
  %2035 = vmatpush1.msra.mxu0 %v485
  %2036 = vmatprep.subr.mxu0 0.0
  %2037 = vmatpush1.msra.mxu0 %v488
  %2038 = vmatprep.subr.mxu0 0.0
  %2039 = vmatpush1.msra.mxu0 %v491
  %2040 = vmatprep.subr.mxu0 0.0
  %2041 = vmatpush1.msra.mxu0 0.0
  %2042 = vmatprep.subr.mxu0 0.0
  %2043 = vmatpush1.msra.mxu0 0.0
  %2044 = vmatprep.subr.mxu0 0.0
  %2045 = vmatpush1.msra.mxu0 0.0
  %2046 = vmatprep.subr.mxu0 0.0
  %2047 = vmatpush1.msra.mxu0 0.0
  %2048 = vmatprep.subr.mxu0 0.0
  %2049 = vmatpush1.msra.mxu0 0.0
  %2050 = vmatprep.subr.mxu0 0.0
  %2051 = vmatpush1.msra.mxu0 0.0
  %2052 = vmatprep.subr.mxu0 0.0
  %2053 = vmatpush1.msra.mxu0 0.0
  %2054 = vmatprep.subr.mxu0 0.0
  %2055 = vmatpush1.msra.mxu0 0.0
  %2056 = vmatprep.subr.mxu0 0.0
  %2057 = vmatpush1.msra.mxu0 0.0
  %2058 = vmatprep.subr.mxu0 0.0
  %2059 = vmatpush1.msra.mxu0 0.0
  %2060 = vmatprep.subr.mxu0 0.0
  %2061 = vmatpush1.msra.mxu0 0.0
  %2062 = vmatprep.subr.mxu0 0.0
  %2063 = vmatpush1.msra.mxu0 0.0
  %2064 = vmatprep.subr.mxu0 0.0
  %2065 = vmatpush1.msra.mxu0 0.0
  %2066 = vmatprep.subr.mxu0 0.0
  %2067 = vmatpush1.msra.mxu0 0.0
  %2068 = vmatprep.subr.mxu0 0.0
  %2069 = vmatpush1.msra.mxu0 0.0
  %2070 = vmatprep.subr.mxu0 0.0
  %2071 = vmatpush1.msra.mxu0 0.0
  %2072 = vmatprep.mubr.f32.mxu0 0.0
  %2073 = vmatmul.mubr.f32.gmra.mrb[0].mxu0 %v1754
  %v2074 = vpop.f32.mrb[0].mxu0
  %v2075 = vadd.f32 0.0, %v2074
  %v2076 = vpop.f32.mrb[0].mxu0
  %2077 = vdwg.mxu0
  %v2078 = vadd.f32 %v1934, %v2004
  %v2079 = vxor.u32 %v2078, 2147483648
  %v2080 = vmul.f32 %v2079, 1.442695
  %v2081 = vpow.pop %v2080
  %v2082 = vadd.f32 %v2081, 1.0
  %v2083 = vrcp.pop %v2082
  %v2084 = vmul.f32 1.0, %v2083
  %v2085 = vadd.f32 %v1935, %v2006
  %v2086 = vxor.u32 %v2085, 2147483648
  %v2087 = vmul.f32 %v2086, 1.442695
  %v2088 = vpow.pop %v2087
  %v2089 = vadd.f32 %v2088, 1.0
  %v2090 = vrcp.pop %v2089
  %v2091 = vmul.f32 1.0, %v2090
  %v2092 = vadd.f32 %v2075, %v705
  %v2093 = vmul.f32 %v2084, %v2092
  %v2094 = vadd.f32 %v1936, %v2093
  %v2095 = vtanh.pop %v2094
  %v2096 = vsub.f32 1.0, %v2091
  %v2097 = vmul.f32 %v2096, %v2095
  %v2098 = vmul.f32 %v2091, %v1754
  %v2099 = vadd.f32 %v2097, %v2098
  %s2100 = scalar_lea.vmem [#allocation3], 72
  %v2101 = vld [vmem:[%s2100] sm:$0xff]
  %v2102 = vld [vmem:[%s2100 + $0x8] sm:$0xff]
  %v2103 = vld [vmem:[%s2100 + $0x10] sm:$0xff]
  %2104 = vmatprep.subr.mxu0 %v493
  %2105 = vmatpush1.msra.mxu0 %v492
  %2106 = vmatprep.subr.mxu0 %v496
  %2107 = vmatpush1.msra.mxu0 %v495
  %2108 = vmatprep.subr.mxu0 %v499
  %2109 = vmatpush1.msra.mxu0 %v498
  %2110 = vmatprep.subr.mxu0 %v502
  %2111 = vmatpush1.msra.mxu0 %v501
  %2112 = vmatprep.subr.mxu0 %v505
  %2113 = vmatpush1.msra.mxu0 %v504
  %2114 = vmatprep.subr.mxu0 %v508
  %2115 = vmatpush1.msra.mxu0 %v507
  %2116 = vmatprep.subr.mxu0 %v511
  %2117 = vmatpush1.msra.mxu0 %v510
  %2118 = vmatprep.subr.mxu0 %v514
  %2119 = vmatpush1.msra.mxu0 %v513
  %2120 = vmatprep.subr.mxu0 %v517
  %2121 = vmatpush1.msra.mxu0 %v516
  %2122 = vmatprep.subr.mxu0 %v520
  %2123 = vmatpush1.msra.mxu0 %v519
  %2124 = vmatprep.subr.mxu0 %v523
  %2125 = vmatpush1.msra.mxu0 %v522
  %2126 = vmatprep.subr.mxu0 %v526
  %2127 = vmatpush1.msra.mxu0 %v525
  %2128 = vmatprep.subr.mxu0 %v529
  %2129 = vmatpush1.msra.mxu0 %v528
  %2130 = vmatprep.subr.mxu0 %v532
  %2131 = vmatpush1.msra.mxu0 %v531
  %2132 = vmatprep.subr.mxu0 %v535
  %2133 = vmatpush1.msra.mxu0 %v534
  %2134 = vmatprep.subr.mxu0 %v538
  %2135 = vmatpush1.msra.mxu0 %v537
  %2136 = vmatprep.subr.mxu0 0.0
  %2137 = vmatpush1.msra.mxu0 0.0
  %2138 = vmatprep.subr.mxu0 0.0
  %2139 = vmatpush1.msra.mxu0 0.0
  %2140 = vmatprep.subr.mxu0 0.0
  %2141 = vmatpush1.msra.mxu0 0.0
  %2142 = vmatprep.subr.mxu0 0.0
  %2143 = vmatpush1.msra.mxu0 0.0
  %2144 = vmatprep.subr.mxu0 0.0
  %2145 = vmatpush1.msra.mxu0 0.0
  %2146 = vmatprep.subr.mxu0 0.0
  %2147 = vmatpush1.msra.mxu0 0.0
  %2148 = vmatprep.subr.mxu0 0.0
  %2149 = vmatpush1.msra.mxu0 0.0
  %2150 = vmatprep.subr.mxu0 0.0
  %2151 = vmatpush1.msra.mxu0 0.0
  %2152 = vmatprep.subr.mxu0 0.0
  %2153 = vmatpush1.msra.mxu0 0.0
  %2154 = vmatprep.subr.mxu0 0.0
  %2155 = vmatpush1.msra.mxu0 0.0
  %2156 = vmatprep.subr.mxu0 0.0
  %2157 = vmatpush1.msra.mxu0 0.0
  %2158 = vmatprep.subr.mxu0 0.0
  %2159 = vmatpush1.msra.mxu0 0.0
  %2160 = vmatprep.subr.mxu0 0.0
  %2161 = vmatpush1.msra.mxu0 0.0
  %2162 = vmatprep.subr.mxu0 0.0
  %2163 = vmatpush1.msra.mxu0 0.0
  %2164 = vmatprep.subr.mxu0 0.0
  %2165 = vmatpush1.msra.mxu0 0.0
  %2166 = vmatprep.subr.mxu0 0.0
  %2167 = vmatpush1.msra.mxu0 0.0
  %2168 = vmatprep.mubr.f32.mxu0 0.0
  %2169 = vmatmul.mubr.f32.gmra.mrb[0].mxu0 %v1921
  %v2170 = vpop.f32.mrb[0].mxu0
  %v2171 = vadd.f32 0.0, %v2170
  %v2172 = vpop.f32.mrb[0].mxu0
  %v2173 = vadd.f32 0.0, %v2172
  %2174 = vdwg.mxu0
  %2175 = vmatprep.subr.mxu0 0.0
  %2176 = vmatpush1.msra.mxu0 %v494
  %2177 = vmatprep.subr.mxu0 0.0
  %2178 = vmatpush1.msra.mxu0 %v497
  %2179 = vmatprep.subr.mxu0 0.0
  %2180 = vmatpush1.msra.mxu0 %v500
  %2181 = vmatprep.subr.mxu0 0.0
  %2182 = vmatpush1.msra.mxu0 %v503
  %2183 = vmatprep.subr.mxu0 0.0
  %2184 = vmatpush1.msra.mxu0 %v506
  %2185 = vmatprep.subr.mxu0 0.0
  %2186 = vmatpush1.msra.mxu0 %v509
  %2187 = vmatprep.subr.mxu0 0.0
  %2188 = vmatpush1.msra.mxu0 %v512
  %2189 = vmatprep.subr.mxu0 0.0
  %2190 = vmatpush1.msra.mxu0 %v515
  %2191 = vmatprep.subr.mxu0 0.0
  %2192 = vmatpush1.msra.mxu0 %v518
  %2193 = vmatprep.subr.mxu0 0.0
  %2194 = vmatpush1.msra.mxu0 %v521
  %2195 = vmatprep.subr.mxu0 0.0
  %2196 = vmatpush1.msra.mxu0 %v524
  %2197 = vmatprep.subr.mxu0 0.0
  %2198 = vmatpush1.msra.mxu0 %v527
  %2199 = vmatprep.subr.mxu0 0.0
  %2200 = vmatpush1.msra.mxu0 %v530
  %2201 = vmatprep.subr.mxu0 0.0
  %2202 = vmatpush1.msra.mxu0 %v533
  %2203 = vmatprep.subr.mxu0 0.0
  %2204 = vmatpush1.msra.mxu0 %v536
  %2205 = vmatprep.subr.mxu0 0.0
  %2206 = vmatpush1.msra.mxu0 %v539
  %2207 = vmatprep.subr.mxu0 0.0
  %2208 = vmatpush1.msra.mxu0 0.0
  %2209 = vmatprep.subr.mxu0 0.0
  %2210 = vmatpush1.msra.mxu0 0.0
  %2211 = vmatprep.subr.mxu0 0.0
  %2212 = vmatpush1.msra.mxu0 0.0
  %2213 = vmatprep.subr.mxu0 0.0
  %2214 = vmatpush1.msra.mxu0 0.0
  %2215 = vmatprep.subr.mxu0 0.0
  %2216 = vmatpush1.msra.mxu0 0.0
  %2217 = vmatprep.subr.mxu0 0.0
  %2218 = vmatpush1.msra.mxu0 0.0
  %2219 = vmatprep.subr.mxu0 0.0
  %2220 = vmatpush1.msra.mxu0 0.0
  %2221 = vmatprep.subr.mxu0 0.0
  %2222 = vmatpush1.msra.mxu0 0.0
  %2223 = vmatprep.subr.mxu0 0.0
  %2224 = vmatpush1.msra.mxu0 0.0
  %2225 = vmatprep.subr.mxu0 0.0
  %2226 = vmatpush1.msra.mxu0 0.0
  %2227 = vmatprep.subr.mxu0 0.0
  %2228 = vmatpush1.msra.mxu0 0.0
  %2229 = vmatprep.subr.mxu0 0.0
  %2230 = vmatpush1.msra.mxu0 0.0
  %2231 = vmatprep.subr.mxu0 0.0
  %2232 = vmatpush1.msra.mxu0 0.0
  %2233 = vmatprep.subr.mxu0 0.0
  %2234 = vmatpush1.msra.mxu0 0.0
  %2235 = vmatprep.subr.mxu0 0.0
  %2236 = vmatpush1.msra.mxu0 0.0
  %2237 = vmatprep.subr.mxu0 0.0
  %2238 = vmatpush1.msra.mxu0 0.0
  %2239 = vmatprep.mubr.f32.mxu0 0.0
  %2240 = vmatmul.mubr.f32.gmra.mrb[0].mxu0 %v1921
  %v2241 = vpop.f32.mrb[0].mxu0
  %v2242 = vadd.f32 0.0, %v2241
  %v2243 = vpop.f32.mrb[0].mxu0
  %2244 = vdwg.mxu0
  %v2245 = vadd.f32 %v2101, %v2171
  %v2246 = vxor.u32 %v2245, 2147483648
  %v2247 = vmul.f32 %v2246, 1.442695
  %v2248 = vpow.pop %v2247
  %v2249 = vadd.f32 %v2248, 1.0
  %v2250 = vrcp.pop %v2249
  %v2251 = vmul.f32 1.0, %v2250
  %v2252 = vadd.f32 %v2102, %v2173
  %v2253 = vxor.u32 %v2252, 2147483648
  %v2254 = vmul.f32 %v2253, 1.442695
  %v2255 = vpow.pop %v2254
  %v2256 = vadd.f32 %v2255, 1.0
  %v2257 = vrcp.pop %v2256
  %v2258 = vmul.f32 1.0, %v2257
  %v2259 = vadd.f32 %v2242, %v878
  %v2260 = vmul.f32 %v2251, %v2259
  %v2261 = vadd.f32 %v2103, %v2260
  %v2262 = vtanh.pop %v2261
  %v2263 = vsub.f32 1.0, %v2258
  %v2264 = vmul.f32 %v2263, %v2262
  %v2265 = vmul.f32 %v2258, %v1921
  %v2266 = vadd.f32 %v2264, %v2265
  %s2267 = scalar_lea.vmem %s8, 64
  %2268 = vst [vmem:[%s2267] sm:$0xff] %v2099
  %s2269 = scalar_lea.vmem %s8, 56
  %2270 = vst [vmem:[%s2269] sm:$0xff] %v2266
  %vm2271 = vcmp.eq.s32.totalorder %v542, 4
  %v2272 = vsel %vm2271, 1, 0
  %2273 = vset.pattern.permute.xlu0 0
  %2274 = vperm.xlu0 %2273, %v2272
  %v2275 = vpop.permute.xlu0 %2274
  %vm2276 = vcmp.eq.s32.totalorder %v2275, 1
  %v2277 = vsel %vm2276, %v2099, %v1932
  %s2278 = scalar_lea.vmem [#allocation2], 120
  %v2279 = vld [vmem:[%s2278] sm:$0xff]
  %v2280 = vld [vmem:[%s2278 + $0x8] sm:$0xff]
  %v2281 = vld [vmem:[%s2278 + $0x10] sm:$0xff]
  %2282 = vmatprep.subr.mxu0 %v445
  %2283 = vmatpush1.msra.mxu0 %v444
  %2284 = vmatprep.subr.mxu0 %v448
  %2285 = vmatpush1.msra.mxu0 %v447
  %2286 = vmatprep.subr.mxu0 %v451
  %2287 = vmatpush1.msra.mxu0 %v450
  %2288 = vmatprep.subr.mxu0 %v454
  %2289 = vmatpush1.msra.mxu0 %v453
  %2290 = vmatprep.subr.mxu0 %v457
  %2291 = vmatpush1.msra.mxu0 %v456
  %2292 = vmatprep.subr.mxu0 %v460
  %2293 = vmatpush1.msra.mxu0 %v459
  %2294 = vmatprep.subr.mxu0 %v463
  %2295 = vmatpush1.msra.mxu0 %v462
  %2296 = vmatprep.subr.mxu0 %v466
  %2297 = vmatpush1.msra.mxu0 %v465
  %2298 = vmatprep.subr.mxu0 %v469
  %2299 = vmatpush1.msra.mxu0 %v468
  %2300 = vmatprep.subr.mxu0 %v472
  %2301 = vmatpush1.msra.mxu0 %v471
  %2302 = vmatprep.subr.mxu0 %v475
  %2303 = vmatpush1.msra.mxu0 %v474
  %2304 = vmatprep.subr.mxu0 %v478
  %2305 = vmatpush1.msra.mxu0 %v477
  %2306 = vmatprep.subr.mxu0 %v481
  %2307 = vmatpush1.msra.mxu0 %v480
  %2308 = vmatprep.subr.mxu0 %v484
  %2309 = vmatpush1.msra.mxu0 %v483
  %2310 = vmatprep.subr.mxu0 %v487
  %2311 = vmatpush1.msra.mxu0 %v486
  %2312 = vmatprep.subr.mxu0 %v490
  %2313 = vmatpush1.msra.mxu0 %v489
  %2314 = vmatprep.subr.mxu0 0.0
  %2315 = vmatpush1.msra.mxu0 0.0
  %2316 = vmatprep.subr.mxu0 0.0
  %2317 = vmatpush1.msra.mxu0 0.0
  %2318 = vmatprep.subr.mxu0 0.0
  %2319 = vmatpush1.msra.mxu0 0.0
  %2320 = vmatprep.subr.mxu0 0.0
  %2321 = vmatpush1.msra.mxu0 0.0
  %2322 = vmatprep.subr.mxu0 0.0
  %2323 = vmatpush1.msra.mxu0 0.0
  %2324 = vmatprep.subr.mxu0 0.0
  %2325 = vmatpush1.msra.mxu0 0.0
  %2326 = vmatprep.subr.mxu0 0.0
  %2327 = vmatpush1.msra.mxu0 0.0
  %2328 = vmatprep.subr.mxu0 0.0
  %2329 = vmatpush1.msra.mxu0 0.0
  %2330 = vmatprep.subr.mxu0 0.0
  %2331 = vmatpush1.msra.mxu0 0.0
  %2332 = vmatprep.subr.mxu0 0.0
  %2333 = vmatpush1.msra.mxu0 0.0
  %2334 = vmatprep.subr.mxu0 0.0
  %2335 = vmatpush1.msra.mxu0 0.0
  %2336 = vmatprep.subr.mxu0 0.0
  %2337 = vmatpush1.msra.mxu0 0.0
  %2338 = vmatprep.subr.mxu0 0.0
  %2339 = vmatpush1.msra.mxu0 0.0
  %2340 = vmatprep.subr.mxu0 0.0
  %2341 = vmatpush1.msra.mxu0 0.0
  %2342 = vmatprep.subr.mxu0 0.0
  %2343 = vmatpush1.msra.mxu0 0.0
  %2344 = vmatprep.subr.mxu0 0.0
  %2345 = vmatpush1.msra.mxu0 0.0
  %2346 = vmatprep.mubr.f32.mxu0 0.0
  %2347 = vmatmul.mubr.f32.gmra.mrb[0].mxu0 %v2099
  %v2348 = vpop.f32.mrb[0].mxu0
  %v2349 = vadd.f32 0.0, %v2348
  %v2350 = vpop.f32.mrb[0].mxu0
  %v2351 = vadd.f32 0.0, %v2350
  %2352 = vdwg.mxu0
  %2353 = vmatprep.subr.mxu0 0.0
  %2354 = vmatpush1.msra.mxu0 %v446
  %2355 = vmatprep.subr.mxu0 0.0
  %2356 = vmatpush1.msra.mxu0 %v449
  %2357 = vmatprep.subr.mxu0 0.0
  %2358 = vmatpush1.msra.mxu0 %v452
  %2359 = vmatprep.subr.mxu0 0.0
  %2360 = vmatpush1.msra.mxu0 %v455
  %2361 = vmatprep.subr.mxu0 0.0
  %2362 = vmatpush1.msra.mxu0 %v458
  %2363 = vmatprep.subr.mxu0 0.0
  %2364 = vmatpush1.msra.mxu0 %v461
  %2365 = vmatprep.subr.mxu0 0.0
  %2366 = vmatpush1.msra.mxu0 %v464
  %2367 = vmatprep.subr.mxu0 0.0
  %2368 = vmatpush1.msra.mxu0 %v467
  %2369 = vmatprep.subr.mxu0 0.0
  %2370 = vmatpush1.msra.mxu0 %v470
  %2371 = vmatprep.subr.mxu0 0.0
  %2372 = vmatpush1.msra.mxu0 %v473
  %2373 = vmatprep.subr.mxu0 0.0
  %2374 = vmatpush1.msra.mxu0 %v476
  %2375 = vmatprep.subr.mxu0 0.0
  %2376 = vmatpush1.msra.mxu0 %v479
  %2377 = vmatprep.subr.mxu0 0.0
  %2378 = vmatpush1.msra.mxu0 %v482
  %2379 = vmatprep.subr.mxu0 0.0
  %2380 = vmatpush1.msra.mxu0 %v485
  %2381 = vmatprep.subr.mxu0 0.0
  %2382 = vmatpush1.msra.mxu0 %v488
  %2383 = vmatprep.subr.mxu0 0.0
  %2384 = vmatpush1.msra.mxu0 %v491
  %2385 = vmatprep.subr.mxu0 0.0
  %2386 = vmatpush1.msra.mxu0 0.0
  %2387 = vmatprep.subr.mxu0 0.0
  %2388 = vmatpush1.msra.mxu0 0.0
  %2389 = vmatprep.subr.mxu0 0.0
  %2390 = vmatpush1.msra.mxu0 0.0
  %2391 = vmatprep.subr.mxu0 0.0
  %2392 = vmatpush1.msra.mxu0 0.0
  %2393 = vmatprep.subr.mxu0 0.0
  %2394 = vmatpush1.msra.mxu0 0.0
  %2395 = vmatprep.subr.mxu0 0.0
  %2396 = vmatpush1.msra.mxu0 0.0
  %2397 = vmatprep.subr.mxu0 0.0
  %2398 = vmatpush1.msra.mxu0 0.0
  %2399 = vmatprep.subr.mxu0 0.0
  %2400 = vmatpush1.msra.mxu0 0.0
  %2401 = vmatprep.subr.mxu0 0.0
  %2402 = vmatpush1.msra.mxu0 0.0
  %2403 = vmatprep.subr.mxu0 0.0
  %2404 = vmatpush1.msra.mxu0 0.0
  %2405 = vmatprep.subr.mxu0 0.0
  %2406 = vmatpush1.msra.mxu0 0.0
  %2407 = vmatprep.subr.mxu0 0.0
  %2408 = vmatpush1.msra.mxu0 0.0
  %2409 = vmatprep.subr.mxu0 0.0
  %2410 = vmatpush1.msra.mxu0 0.0
  %2411 = vmatprep.subr.mxu0 0.0
  %2412 = vmatpush1.msra.mxu0 0.0
  %2413 = vmatprep.subr.mxu0 0.0
  %2414 = vmatpush1.msra.mxu0 0.0
  %2415 = vmatprep.subr.mxu0 0.0
  %2416 = vmatpush1.msra.mxu0 0.0
  %2417 = vmatprep.mubr.f32.mxu0 0.0
  %2418 = vmatmul.mubr.f32.gmra.mrb[0].mxu0 %v2099
  %v2419 = vpop.f32.mrb[0].mxu0
  %v2420 = vadd.f32 0.0, %v2419
  %v2421 = vpop.f32.mrb[0].mxu0
  %2422 = vdwg.mxu0
  %v2423 = vadd.f32 %v2279, %v2349
  %v2424 = vxor.u32 %v2423, 2147483648
  %v2425 = vmul.f32 %v2424, 1.442695
  %v2426 = vpow.pop %v2425
  %v2427 = vadd.f32 %v2426, 1.0
  %v2428 = vrcp.pop %v2427
  %v2429 = vmul.f32 1.0, %v2428
  %v2430 = vadd.f32 %v2280, %v2351
  %v2431 = vxor.u32 %v2430, 2147483648
  %v2432 = vmul.f32 %v2431, 1.442695
  %v2433 = vpow.pop %v2432
  %v2434 = vadd.f32 %v2433, 1.0
  %v2435 = vrcp.pop %v2434
  %v2436 = vmul.f32 1.0, %v2435
  %v2437 = vadd.f32 %v2420, %v705
  %v2438 = vmul.f32 %v2429, %v2437
  %v2439 = vadd.f32 %v2281, %v2438
  %v2440 = vtanh.pop %v2439
  %v2441 = vsub.f32 1.0, %v2436
  %v2442 = vmul.f32 %v2441, %v2440
  %v2443 = vmul.f32 %v2436, %v2099
  %v2444 = vadd.f32 %v2442, %v2443
  %s2445 = scalar_lea.vmem [#allocation3], 48
  %v2446 = vld [vmem:[%s2445] sm:$0xff]
  %v2447 = vld [vmem:[%s2445 + $0x8] sm:$0xff]
  %v2448 = vld [vmem:[%s2445 + $0x10] sm:$0xff]
  %2449 = vmatprep.subr.mxu0 %v493
  %2450 = vmatpush1.msra.mxu0 %v492
  %2451 = vmatprep.subr.mxu0 %v496
  %2452 = vmatpush1.msra.mxu0 %v495
  %2453 = vmatprep.subr.mxu0 %v499
  %2454 = vmatpush1.msra.mxu0 %v498
  %2455 = vmatprep.subr.mxu0 %v502
  %2456 = vmatpush1.msra.mxu0 %v501
  %2457 = vmatprep.subr.mxu0 %v505
  %2458 = vmatpush1.msra.mxu0 %v504
  %2459 = vmatprep.subr.mxu0 %v508
  %2460 = vmatpush1.msra.mxu0 %v507
  %2461 = vmatprep.subr.mxu0 %v511
  %2462 = vmatpush1.msra.mxu0 %v510
  %2463 = vmatprep.subr.mxu0 %v514
  %2464 = vmatpush1.msra.mxu0 %v513
  %2465 = vmatprep.subr.mxu0 %v517
  %2466 = vmatpush1.msra.mxu0 %v516
  %2467 = vmatprep.subr.mxu0 %v520
  %2468 = vmatpush1.msra.mxu0 %v519
  %2469 = vmatprep.subr.mxu0 %v523
  %2470 = vmatpush1.msra.mxu0 %v522
  %2471 = vmatprep.subr.mxu0 %v526
  %2472 = vmatpush1.msra.mxu0 %v525
  %2473 = vmatprep.subr.mxu0 %v529
  %2474 = vmatpush1.msra.mxu0 %v528
  %2475 = vmatprep.subr.mxu0 %v532
  %2476 = vmatpush1.msra.mxu0 %v531
  %2477 = vmatprep.subr.mxu0 %v535
  %2478 = vmatpush1.msra.mxu0 %v534
  %2479 = vmatprep.subr.mxu0 %v538
  %2480 = vmatpush1.msra.mxu0 %v537
  %2481 = vmatprep.subr.mxu0 0.0
  %2482 = vmatpush1.msra.mxu0 0.0
  %2483 = vmatprep.subr.mxu0 0.0
  %2484 = vmatpush1.msra.mxu0 0.0
  %2485 = vmatprep.subr.mxu0 0.0
  %2486 = vmatpush1.msra.mxu0 0.0
  %2487 = vmatprep.subr.mxu0 0.0
  %2488 = vmatpush1.msra.mxu0 0.0
  %2489 = vmatprep.subr.mxu0 0.0
  %2490 = vmatpush1.msra.mxu0 0.0
  %2491 = vmatprep.subr.mxu0 0.0
  %2492 = vmatpush1.msra.mxu0 0.0
  %2493 = vmatprep.subr.mxu0 0.0
  %2494 = vmatpush1.msra.mxu0 0.0
  %2495 = vmatprep.subr.mxu0 0.0
  %2496 = vmatpush1.msra.mxu0 0.0
  %2497 = vmatprep.subr.mxu0 0.0
  %2498 = vmatpush1.msra.mxu0 0.0
  %2499 = vmatprep.subr.mxu0 0.0
  %2500 = vmatpush1.msra.mxu0 0.0
  %2501 = vmatprep.subr.mxu0 0.0
  %2502 = vmatpush1.msra.mxu0 0.0
  %2503 = vmatprep.subr.mxu0 0.0
  %2504 = vmatpush1.msra.mxu0 0.0
  %2505 = vmatprep.subr.mxu0 0.0
  %2506 = vmatpush1.msra.mxu0 0.0
  %2507 = vmatprep.subr.mxu0 0.0
  %2508 = vmatpush1.msra.mxu0 0.0
  %2509 = vmatprep.subr.mxu0 0.0
  %2510 = vmatpush1.msra.mxu0 0.0
  %2511 = vmatprep.subr.mxu0 0.0
  %2512 = vmatpush1.msra.mxu0 0.0
  %2513 = vmatprep.mubr.f32.mxu0 0.0
  %2514 = vmatmul.mubr.f32.gmra.mrb[0].mxu0 %v2266
  %v2515 = vpop.f32.mrb[0].mxu0
  %v2516 = vadd.f32 0.0, %v2515
  %v2517 = vpop.f32.mrb[0].mxu0
  %v2518 = vadd.f32 0.0, %v2517
  %2519 = vdwg.mxu0
  %2520 = vmatprep.subr.mxu0 0.0
  %2521 = vmatpush1.msra.mxu0 %v494
  %2522 = vmatprep.subr.mxu0 0.0
  %2523 = vmatpush1.msra.mxu0 %v497
  %2524 = vmatprep.subr.mxu0 0.0
  %2525 = vmatpush1.msra.mxu0 %v500
  %2526 = vmatprep.subr.mxu0 0.0
  %2527 = vmatpush1.msra.mxu0 %v503
  %2528 = vmatprep.subr.mxu0 0.0
  %2529 = vmatpush1.msra.mxu0 %v506
  %2530 = vmatprep.subr.mxu0 0.0
  %2531 = vmatpush1.msra.mxu0 %v509
  %2532 = vmatprep.subr.mxu0 0.0
  %2533 = vmatpush1.msra.mxu0 %v512
  %2534 = vmatprep.subr.mxu0 0.0
  %2535 = vmatpush1.msra.mxu0 %v515
  %2536 = vmatprep.subr.mxu0 0.0
  %2537 = vmatpush1.msra.mxu0 %v518
  %2538 = vmatprep.subr.mxu0 0.0
  %2539 = vmatpush1.msra.mxu0 %v521
  %2540 = vmatprep.subr.mxu0 0.0
  %2541 = vmatpush1.msra.mxu0 %v524
  %2542 = vmatprep.subr.mxu0 0.0
  %2543 = vmatpush1.msra.mxu0 %v527
  %2544 = vmatprep.subr.mxu0 0.0
  %2545 = vmatpush1.msra.mxu0 %v530
  %2546 = vmatprep.subr.mxu0 0.0
  %2547 = vmatpush1.msra.mxu0 %v533
  %2548 = vmatprep.subr.mxu0 0.0
  %2549 = vmatpush1.msra.mxu0 %v536
  %2550 = vmatprep.subr.mxu0 0.0
  %2551 = vmatpush1.msra.mxu0 %v539
  %2552 = vmatprep.subr.mxu0 0.0
  %2553 = vmatpush1.msra.mxu0 0.0
  %2554 = vmatprep.subr.mxu0 0.0
  %2555 = vmatpush1.msra.mxu0 0.0
  %2556 = vmatprep.subr.mxu0 0.0
  %2557 = vmatpush1.msra.mxu0 0.0
  %2558 = vmatprep.subr.mxu0 0.0
  %2559 = vmatpush1.msra.mxu0 0.0
  %2560 = vmatprep.subr.mxu0 0.0
  %2561 = vmatpush1.msra.mxu0 0.0
  %2562 = vmatprep.subr.mxu0 0.0
  %2563 = vmatpush1.msra.mxu0 0.0
  %2564 = vmatprep.subr.mxu0 0.0
  %2565 = vmatpush1.msra.mxu0 0.0
  %2566 = vmatprep.subr.mxu0 0.0
  %2567 = vmatpush1.msra.mxu0 0.0
  %2568 = vmatprep.subr.mxu0 0.0
  %2569 = vmatpush1.msra.mxu0 0.0
  %2570 = vmatprep.subr.mxu0 0.0
  %2571 = vmatpush1.msra.mxu0 0.0
  %2572 = vmatprep.subr.mxu0 0.0
  %2573 = vmatpush1.msra.mxu0 0.0
  %2574 = vmatprep.subr.mxu0 0.0
  %2575 = vmatpush1.msra.mxu0 0.0
  %2576 = vmatprep.subr.mxu0 0.0
  %2577 = vmatpush1.msra.mxu0 0.0
  %2578 = vmatprep.subr.mxu0 0.0
  %2579 = vmatpush1.msra.mxu0 0.0
  %2580 = vmatprep.subr.mxu0 0.0
  %2581 = vmatpush1.msra.mxu0 0.0
  %2582 = vmatprep.subr.mxu0 0.0
  %2583 = vmatpush1.msra.mxu0 0.0
  %2584 = vmatprep.mubr.f32.mxu0 0.0
  %2585 = vmatmul.mubr.f32.gmra.mrb[0].mxu0 %v2266
  %v2586 = vpop.f32.mrb[0].mxu0
  %v2587 = vadd.f32 0.0, %v2586
  %v2588 = vpop.f32.mrb[0].mxu0
  %2589 = vdwg.mxu0
  %v2590 = vadd.f32 %v2446, %v2516
  %v2591 = vxor.u32 %v2590, 2147483648
  %v2592 = vmul.f32 %v2591, 1.442695
  %v2593 = vpow.pop %v2592
  %v2594 = vadd.f32 %v2593, 1.0
  %v2595 = vrcp.pop %v2594
  %v2596 = vmul.f32 1.0, %v2595
  %v2597 = vadd.f32 %v2447, %v2518
  %v2598 = vxor.u32 %v2597, 2147483648
  %v2599 = vmul.f32 %v2598, 1.442695
  %v2600 = vpow.pop %v2599
  %v2601 = vadd.f32 %v2600, 1.0
  %v2602 = vrcp.pop %v2601
  %v2603 = vmul.f32 1.0, %v2602
  %v2604 = vadd.f32 %v2587, %v878
  %v2605 = vmul.f32 %v2596, %v2604
  %v2606 = vadd.f32 %v2448, %v2605
  %v2607 = vtanh.pop %v2606
  %v2608 = vsub.f32 1.0, %v2603
  %v2609 = vmul.f32 %v2608, %v2607
  %v2610 = vmul.f32 %v2603, %v2266
  %v2611 = vadd.f32 %v2609, %v2610
  %s2612 = scalar_lea.vmem %s8, 80
  %2613 = vst [vmem:[%s2612] sm:$0xff] %v2444
  %s2614 = scalar_lea.vmem %s8, 40
  %2615 = vst [vmem:[%s2614] sm:$0xff] %v2611
  %vm2616 = vcmp.eq.s32.totalorder %v542, 5
  %v2617 = vsel %vm2616, 1, 0
  %2618 = vset.pattern.permute.xlu0 0
  %2619 = vperm.xlu0 %2618, %v2617
  %v2620 = vpop.permute.xlu0 %2619
  %vm2621 = vcmp.eq.s32.totalorder %v2620, 1
  %v2622 = vsel %vm2621, %v2444, %v2277
  %s2623 = scalar_lea.vmem [#allocation2], 144
  %v2624 = vld [vmem:[%s2623] sm:$0xff]
  %v2625 = vld [vmem:[%s2623 + $0x8] sm:$0xff]
  %v2626 = vld [vmem:[%s2623 + $0x10] sm:$0xff]
  %2627 = vmatprep.subr.mxu0 %v445
  %2628 = vmatpush1.msra.mxu0 %v444
  %2629 = vmatprep.subr.mxu0 %v448
  %2630 = vmatpush1.msra.mxu0 %v447
  %2631 = vmatprep.subr.mxu0 %v451
  %2632 = vmatpush1.msra.mxu0 %v450
  %2633 = vmatprep.subr.mxu0 %v454
  %2634 = vmatpush1.msra.mxu0 %v453
  %2635 = vmatprep.subr.mxu0 %v457
  %2636 = vmatpush1.msra.mxu0 %v456
  %2637 = vmatprep.subr.mxu0 %v460
  %2638 = vmatpush1.msra.mxu0 %v459
  %2639 = vmatprep.subr.mxu0 %v463
  %2640 = vmatpush1.msra.mxu0 %v462
  %2641 = vmatprep.subr.mxu0 %v466
  %2642 = vmatpush1.msra.mxu0 %v465
  %2643 = vmatprep.subr.mxu0 %v469
  %2644 = vmatpush1.msra.mxu0 %v468
  %2645 = vmatprep.subr.mxu0 %v472
  %2646 = vmatpush1.msra.mxu0 %v471
  %2647 = vmatprep.subr.mxu0 %v475
  %2648 = vmatpush1.msra.mxu0 %v474
  %2649 = vmatprep.subr.mxu0 %v478
  %2650 = vmatpush1.msra.mxu0 %v477
  %2651 = vmatprep.subr.mxu0 %v481
  %2652 = vmatpush1.msra.mxu0 %v480
  %2653 = vmatprep.subr.mxu0 %v484
  %2654 = vmatpush1.msra.mxu0 %v483
  %2655 = vmatprep.subr.mxu0 %v487
  %2656 = vmatpush1.msra.mxu0 %v486
  %2657 = vmatprep.subr.mxu0 %v490
  %2658 = vmatpush1.msra.mxu0 %v489
  %2659 = vmatprep.subr.mxu0 0.0
  %2660 = vmatpush1.msra.mxu0 0.0
  %2661 = vmatprep.subr.mxu0 0.0
  %2662 = vmatpush1.msra.mxu0 0.0
  %2663 = vmatprep.subr.mxu0 0.0
  %2664 = vmatpush1.msra.mxu0 0.0
  %2665 = vmatprep.subr.mxu0 0.0
  %2666 = vmatpush1.msra.mxu0 0.0
  %2667 = vmatprep.subr.mxu0 0.0
  %2668 = vmatpush1.msra.mxu0 0.0
  %2669 = vmatprep.subr.mxu0 0.0
  %2670 = vmatpush1.msra.mxu0 0.0
  %2671 = vmatprep.subr.mxu0 0.0
  %2672 = vmatpush1.msra.mxu0 0.0
  %2673 = vmatprep.subr.mxu0 0.0
  %2674 = vmatpush1.msra.mxu0 0.0
  %2675 = vmatprep.subr.mxu0 0.0
  %2676 = vmatpush1.msra.mxu0 0.0
  %2677 = vmatprep.subr.mxu0 0.0
  %2678 = vmatpush1.msra.mxu0 0.0
  %2679 = vmatprep.subr.mxu0 0.0
  %2680 = vmatpush1.msra.mxu0 0.0
  %2681 = vmatprep.subr.mxu0 0.0
  %2682 = vmatpush1.msra.mxu0 0.0
  %2683 = vmatprep.subr.mxu0 0.0
  %2684 = vmatpush1.msra.mxu0 0.0
  %2685 = vmatprep.subr.mxu0 0.0
  %2686 = vmatpush1.msra.mxu0 0.0
  %2687 = vmatprep.subr.mxu0 0.0
  %2688 = vmatpush1.msra.mxu0 0.0
  %2689 = vmatprep.subr.mxu0 0.0
  %2690 = vmatpush1.msra.mxu0 0.0
  %2691 = vmatprep.mubr.f32.mxu0 0.0
  %2692 = vmatmul.mubr.f32.gmra.mrb[0].mxu0 %v2444
  %v2693 = vpop.f32.mrb[0].mxu0
  %v2694 = vadd.f32 0.0, %v2693
  %v2695 = vpop.f32.mrb[0].mxu0
  %v2696 = vadd.f32 0.0, %v2695
  %2697 = vdwg.mxu0
  %2698 = vmatprep.subr.mxu0 0.0
  %2699 = vmatpush1.msra.mxu0 %v446
  %2700 = vmatprep.subr.mxu0 0.0
  %2701 = vmatpush1.msra.mxu0 %v449
  %2702 = vmatprep.subr.mxu0 0.0
  %2703 = vmatpush1.msra.mxu0 %v452
  %2704 = vmatprep.subr.mxu0 0.0
  %2705 = vmatpush1.msra.mxu0 %v455
  %2706 = vmatprep.subr.mxu0 0.0
  %2707 = vmatpush1.msra.mxu0 %v458
  %2708 = vmatprep.subr.mxu0 0.0
  %2709 = vmatpush1.msra.mxu0 %v461
  %2710 = vmatprep.subr.mxu0 0.0
  %2711 = vmatpush1.msra.mxu0 %v464
  %2712 = vmatprep.subr.mxu0 0.0
  %2713 = vmatpush1.msra.mxu0 %v467
  %2714 = vmatprep.subr.mxu0 0.0
  %2715 = vmatpush1.msra.mxu0 %v470
  %2716 = vmatprep.subr.mxu0 0.0
  %2717 = vmatpush1.msra.mxu0 %v473
  %2718 = vmatprep.subr.mxu0 0.0
  %2719 = vmatpush1.msra.mxu0 %v476
  %2720 = vmatprep.subr.mxu0 0.0
  %2721 = vmatpush1.msra.mxu0 %v479
  %2722 = vmatprep.subr.mxu0 0.0
  %2723 = vmatpush1.msra.mxu0 %v482
  %2724 = vmatprep.subr.mxu0 0.0
  %2725 = vmatpush1.msra.mxu0 %v485
  %2726 = vmatprep.subr.mxu0 0.0
  %2727 = vmatpush1.msra.mxu0 %v488
  %2728 = vmatprep.subr.mxu0 0.0
  %2729 = vmatpush1.msra.mxu0 %v491
  %2730 = vmatprep.subr.mxu0 0.0
  %2731 = vmatpush1.msra.mxu0 0.0
  %2732 = vmatprep.subr.mxu0 0.0
  %2733 = vmatpush1.msra.mxu0 0.0
  %2734 = vmatprep.subr.mxu0 0.0
  %2735 = vmatpush1.msra.mxu0 0.0
  %2736 = vmatprep.subr.mxu0 0.0
  %2737 = vmatpush1.msra.mxu0 0.0
  %2738 = vmatprep.subr.mxu0 0.0
  %2739 = vmatpush1.msra.mxu0 0.0
  %2740 = vmatprep.subr.mxu0 0.0
  %2741 = vmatpush1.msra.mxu0 0.0
  %2742 = vmatprep.subr.mxu0 0.0
  %2743 = vmatpush1.msra.mxu0 0.0
  %2744 = vmatprep.subr.mxu0 0.0
  %2745 = vmatpush1.msra.mxu0 0.0
  %2746 = vmatprep.subr.mxu0 0.0
  %2747 = vmatpush1.msra.mxu0 0.0
  %2748 = vmatprep.subr.mxu0 0.0
  %2749 = vmatpush1.msra.mxu0 0.0
  %2750 = vmatprep.subr.mxu0 0.0
  %2751 = vmatpush1.msra.mxu0 0.0
  %2752 = vmatprep.subr.mxu0 0.0
  %2753 = vmatpush1.msra.mxu0 0.0
  %2754 = vmatprep.subr.mxu0 0.0
  %2755 = vmatpush1.msra.mxu0 0.0
  %2756 = vmatprep.subr.mxu0 0.0
  %2757 = vmatpush1.msra.mxu0 0.0
  %2758 = vmatprep.subr.mxu0 0.0
  %2759 = vmatpush1.msra.mxu0 0.0
  %2760 = vmatprep.subr.mxu0 0.0
  %2761 = vmatpush1.msra.mxu0 0.0
  %2762 = vmatprep.mubr.f32.mxu0 0.0
  %2763 = vmatmul.mubr.f32.gmra.mrb[0].mxu0 %v2444
  %v2764 = vpop.f32.mrb[0].mxu0
  %v2765 = vadd.f32 0.0, %v2764
  %v2766 = vpop.f32.mrb[0].mxu0
  %2767 = vdwg.mxu0
  %v2768 = vadd.f32 %v2624, %v2694
  %v2769 = vxor.u32 %v2768, 2147483648
  %v2770 = vmul.f32 %v2769, 1.442695
  %v2771 = vpow.pop %v2770
  %v2772 = vadd.f32 %v2771, 1.0
  %v2773 = vrcp.pop %v2772
  %v2774 = vmul.f32 1.0, %v2773
  %v2775 = vadd.f32 %v2625, %v2696
  %v2776 = vxor.u32 %v2775, 2147483648
  %v2777 = vmul.f32 %v2776, 1.442695
  %v2778 = vpow.pop %v2777
  %v2779 = vadd.f32 %v2778, 1.0
  %v2780 = vrcp.pop %v2779
  %v2781 = vmul.f32 1.0, %v2780
  %v2782 = vadd.f32 %v2765, %v705
  %v2783 = vmul.f32 %v2774, %v2782
  %v2784 = vadd.f32 %v2626, %v2783
  %v2785 = vtanh.pop %v2784
  %v2786 = vsub.f32 1.0, %v2781
  %v2787 = vmul.f32 %v2786, %v2785
  %v2788 = vmul.f32 %v2781, %v2444
  %v2789 = vadd.f32 %v2787, %v2788
  %s2790 = scalar_lea.vmem [#allocation3], 24
  %v2791 = vld [vmem:[%s2790] sm:$0xff]
  %v2792 = vld [vmem:[%s2790 + $0x8] sm:$0xff]
  %v2793 = vld [vmem:[%s2790 + $0x10] sm:$0xff]
  %2794 = vmatprep.subr.mxu0 %v493
  %2795 = vmatpush1.msra.mxu0 %v492
  %2796 = vmatprep.subr.mxu0 %v496
  %2797 = vmatpush1.msra.mxu0 %v495
  %2798 = vmatprep.subr.mxu0 %v499
  %2799 = vmatpush1.msra.mxu0 %v498
  %2800 = vmatprep.subr.mxu0 %v502
  %2801 = vmatpush1.msra.mxu0 %v501
  %2802 = vmatprep.subr.mxu0 %v505
  %2803 = vmatpush1.msra.mxu0 %v504
  %2804 = vmatprep.subr.mxu0 %v508
  %2805 = vmatpush1.msra.mxu0 %v507
  %2806 = vmatprep.subr.mxu0 %v511
  %2807 = vmatpush1.msra.mxu0 %v510
  %2808 = vmatprep.subr.mxu0 %v514
  %2809 = vmatpush1.msra.mxu0 %v513
  %2810 = vmatprep.subr.mxu0 %v517
  %2811 = vmatpush1.msra.mxu0 %v516
  %2812 = vmatprep.subr.mxu0 %v520
  %2813 = vmatpush1.msra.mxu0 %v519
  %2814 = vmatprep.subr.mxu0 %v523
  %2815 = vmatpush1.msra.mxu0 %v522
  %2816 = vmatprep.subr.mxu0 %v526
  %2817 = vmatpush1.msra.mxu0 %v525
  %2818 = vmatprep.subr.mxu0 %v529
  %2819 = vmatpush1.msra.mxu0 %v528
  %2820 = vmatprep.subr.mxu0 %v532
  %2821 = vmatpush1.msra.mxu0 %v531
  %2822 = vmatprep.subr.mxu0 %v535
  %2823 = vmatpush1.msra.mxu0 %v534
  %2824 = vmatprep.subr.mxu0 %v538
  %2825 = vmatpush1.msra.mxu0 %v537
  %2826 = vmatprep.subr.mxu0 0.0
  %2827 = vmatpush1.msra.mxu0 0.0
  %2828 = vmatprep.subr.mxu0 0.0
  %2829 = vmatpush1.msra.mxu0 0.0
  %2830 = vmatprep.subr.mxu0 0.0
  %2831 = vmatpush1.msra.mxu0 0.0
  %2832 = vmatprep.subr.mxu0 0.0
  %2833 = vmatpush1.msra.mxu0 0.0
  %2834 = vmatprep.subr.mxu0 0.0
  %2835 = vmatpush1.msra.mxu0 0.0
  %2836 = vmatprep.subr.mxu0 0.0
  %2837 = vmatpush1.msra.mxu0 0.0
  %2838 = vmatprep.subr.mxu0 0.0
  %2839 = vmatpush1.msra.mxu0 0.0
  %2840 = vmatprep.subr.mxu0 0.0
  %2841 = vmatpush1.msra.mxu0 0.0
  %2842 = vmatprep.subr.mxu0 0.0
  %2843 = vmatpush1.msra.mxu0 0.0
  %2844 = vmatprep.subr.mxu0 0.0
  %2845 = vmatpush1.msra.mxu0 0.0
  %2846 = vmatprep.subr.mxu0 0.0
  %2847 = vmatpush1.msra.mxu0 0.0
  %2848 = vmatprep.subr.mxu0 0.0
  %2849 = vmatpush1.msra.mxu0 0.0
  %2850 = vmatprep.subr.mxu0 0.0
  %2851 = vmatpush1.msra.mxu0 0.0
  %2852 = vmatprep.subr.mxu0 0.0
  %2853 = vmatpush1.msra.mxu0 0.0
  %2854 = vmatprep.subr.mxu0 0.0
  %2855 = vmatpush1.msra.mxu0 0.0
  %2856 = vmatprep.subr.mxu0 0.0
  %2857 = vmatpush1.msra.mxu0 0.0
  %2858 = vmatprep.mubr.f32.mxu0 0.0
  %2859 = vmatmul.mubr.f32.gmra.mrb[0].mxu0 %v2611
  %v2860 = vpop.f32.mrb[0].mxu0
  %v2861 = vadd.f32 0.0, %v2860
  %v2862 = vpop.f32.mrb[0].mxu0
  %v2863 = vadd.f32 0.0, %v2862
  %2864 = vdwg.mxu0
  %2865 = vmatprep.subr.mxu0 0.0
  %2866 = vmatpush1.msra.mxu0 %v494
  %2867 = vmatprep.subr.mxu0 0.0
  %2868 = vmatpush1.msra.mxu0 %v497
  %2869 = vmatprep.subr.mxu0 0.0
  %2870 = vmatpush1.msra.mxu0 %v500
  %2871 = vmatprep.subr.mxu0 0.0
  %2872 = vmatpush1.msra.mxu0 %v503
  %2873 = vmatprep.subr.mxu0 0.0
  %2874 = vmatpush1.msra.mxu0 %v506
  %2875 = vmatprep.subr.mxu0 0.0
  %2876 = vmatpush1.msra.mxu0 %v509
  %2877 = vmatprep.subr.mxu0 0.0
  %2878 = vmatpush1.msra.mxu0 %v512
  %2879 = vmatprep.subr.mxu0 0.0
  %2880 = vmatpush1.msra.mxu0 %v515
  %2881 = vmatprep.subr.mxu0 0.0
  %2882 = vmatpush1.msra.mxu0 %v518
  %2883 = vmatprep.subr.mxu0 0.0
  %2884 = vmatpush1.msra.mxu0 %v521
  %2885 = vmatprep.subr.mxu0 0.0
  %2886 = vmatpush1.msra.mxu0 %v524
  %2887 = vmatprep.subr.mxu0 0.0
  %2888 = vmatpush1.msra.mxu0 %v527
  %2889 = vmatprep.subr.mxu0 0.0
  %2890 = vmatpush1.msra.mxu0 %v530
  %2891 = vmatprep.subr.mxu0 0.0
  %2892 = vmatpush1.msra.mxu0 %v533
  %2893 = vmatprep.subr.mxu0 0.0
  %2894 = vmatpush1.msra.mxu0 %v536
  %2895 = vmatprep.subr.mxu0 0.0
  %2896 = vmatpush1.msra.mxu0 %v539
  %2897 = vmatprep.subr.mxu0 0.0
  %2898 = vmatpush1.msra.mxu0 0.0
  %2899 = vmatprep.subr.mxu0 0.0
  %2900 = vmatpush1.msra.mxu0 0.0
  %2901 = vmatprep.subr.mxu0 0.0
  %2902 = vmatpush1.msra.mxu0 0.0
  %2903 = vmatprep.subr.mxu0 0.0
  %2904 = vmatpush1.msra.mxu0 0.0
  %2905 = vmatprep.subr.mxu0 0.0
  %2906 = vmatpush1.msra.mxu0 0.0
  %2907 = vmatprep.subr.mxu0 0.0
  %2908 = vmatpush1.msra.mxu0 0.0
  %2909 = vmatprep.subr.mxu0 0.0
  %2910 = vmatpush1.msra.mxu0 0.0
  %2911 = vmatprep.subr.mxu0 0.0
  %2912 = vmatpush1.msra.mxu0 0.0
  %2913 = vmatprep.subr.mxu0 0.0
  %2914 = vmatpush1.msra.mxu0 0.0
  %2915 = vmatprep.subr.mxu0 0.0
  %2916 = vmatpush1.msra.mxu0 0.0
  %2917 = vmatprep.subr.mxu0 0.0
  %2918 = vmatpush1.msra.mxu0 0.0
  %2919 = vmatprep.subr.mxu0 0.0
  %2920 = vmatpush1.msra.mxu0 0.0
  %2921 = vmatprep.subr.mxu0 0.0
  %2922 = vmatpush1.msra.mxu0 0.0
  %2923 = vmatprep.subr.mxu0 0.0
  %2924 = vmatpush1.msra.mxu0 0.0
  %2925 = vmatprep.subr.mxu0 0.0
  %2926 = vmatpush1.msra.mxu0 0.0
  %2927 = vmatprep.subr.mxu0 0.0
  %2928 = vmatpush1.msra.mxu0 0.0
  %2929 = vmatprep.mubr.f32.mxu0 0.0
  %2930 = vmatmul.mubr.f32.gmra.mrb[0].mxu0 %v2611
  %v2931 = vpop.f32.mrb[0].mxu0
  %v2932 = vadd.f32 0.0, %v2931
  %v2933 = vpop.f32.mrb[0].mxu0
  %2934 = vdwg.mxu0
  %v2935 = vadd.f32 %v2791, %v2861
  %v2936 = vxor.u32 %v2935, 2147483648
  %v2937 = vmul.f32 %v2936, 1.442695
  %v2938 = vpow.pop %v2937
  %v2939 = vadd.f32 %v2938, 1.0
  %v2940 = vrcp.pop %v2939
  %v2941 = vmul.f32 1.0, %v2940
  %v2942 = vadd.f32 %v2792, %v2863
  %v2943 = vxor.u32 %v2942, 2147483648
  %v2944 = vmul.f32 %v2943, 1.442695
  %v2945 = vpow.pop %v2944
  %v2946 = vadd.f32 %v2945, 1.0
  %v2947 = vrcp.pop %v2946
  %v2948 = vmul.f32 1.0, %v2947
  %v2949 = vadd.f32 %v2932, %v878
  %v2950 = vmul.f32 %v2941, %v2949
  %v2951 = vadd.f32 %v2793, %v2950
  %v2952 = vtanh.pop %v2951
  %v2953 = vsub.f32 1.0, %v2948
  %v2954 = vmul.f32 %v2953, %v2952
  %v2955 = vmul.f32 %v2948, %v2611
  %v2956 = vadd.f32 %v2954, %v2955
  %s2957 = scalar_lea.vmem %s8, 96
  %2958 = vst [vmem:[%s2957] sm:$0xff] %v2789
  %s2959 = scalar_lea.vmem %s8, 24
  %2960 = vst [vmem:[%s2959] sm:$0xff] %v2956
  %vm2961 = vcmp.eq.s32.totalorder %v542, 6
  %v2962 = vsel %vm2961, 1, 0
  %2963 = vset.pattern.permute.xlu0 0
  %2964 = vperm.xlu0 %2963, %v2962
  %v2965 = vpop.permute.xlu0 %2964
  %vm2966 = vcmp.eq.s32.totalorder %v2965, 1
  %v2967 = vsel %vm2966, %v2789, %v2622
  %s2968 = scalar_lea.vmem [#allocation2], 168
  %v2969 = vld [vmem:[%s2968] sm:$0xff]
  %v2970 = vld [vmem:[%s2968 + $0x8] sm:$0xff]
  %v2971 = vld [vmem:[%s2968 + $0x10] sm:$0xff]
  %2972 = vmatprep.subr.mxu0 %v445
  %2973 = vmatpush1.msra.mxu0 %v444
  %2974 = vmatprep.subr.mxu0 %v448
  %2975 = vmatpush1.msra.mxu0 %v447
  %2976 = vmatprep.subr.mxu0 %v451
  %2977 = vmatpush1.msra.mxu0 %v450
  %2978 = vmatprep.subr.mxu0 %v454
  %2979 = vmatpush1.msra.mxu0 %v453
  %2980 = vmatprep.subr.mxu0 %v457
  %2981 = vmatpush1.msra.mxu0 %v456
  %2982 = vmatprep.subr.mxu0 %v460
  %2983 = vmatpush1.msra.mxu0 %v459
  %2984 = vmatprep.subr.mxu0 %v463
  %2985 = vmatpush1.msra.mxu0 %v462
  %2986 = vmatprep.subr.mxu0 %v466
  %2987 = vmatpush1.msra.mxu0 %v465
  %2988 = vmatprep.subr.mxu0 %v469
  %2989 = vmatpush1.msra.mxu0 %v468
  %2990 = vmatprep.subr.mxu0 %v472
  %2991 = vmatpush1.msra.mxu0 %v471
  %2992 = vmatprep.subr.mxu0 %v475
  %2993 = vmatpush1.msra.mxu0 %v474
  %2994 = vmatprep.subr.mxu0 %v478
  %2995 = vmatpush1.msra.mxu0 %v477
  %2996 = vmatprep.subr.mxu0 %v481
  %2997 = vmatpush1.msra.mxu0 %v480
  %2998 = vmatprep.subr.mxu0 %v484
  %2999 = vmatpush1.msra.mxu0 %v483
  %3000 = vmatprep.subr.mxu0 %v487
  %3001 = vmatpush1.msra.mxu0 %v486
  %3002 = vmatprep.subr.mxu0 %v490
  %3003 = vmatpush1.msra.mxu0 %v489
  %3004 = vmatprep.subr.mxu0 0.0
  %3005 = vmatpush1.msra.mxu0 0.0
  %3006 = vmatprep.subr.mxu0 0.0
  %3007 = vmatpush1.msra.mxu0 0.0
  %3008 = vmatprep.subr.mxu0 0.0
  %3009 = vmatpush1.msra.mxu0 0.0
  %3010 = vmatprep.subr.mxu0 0.0
  %3011 = vmatpush1.msra.mxu0 0.0
  %3012 = vmatprep.subr.mxu0 0.0
  %3013 = vmatpush1.msra.mxu0 0.0
  %3014 = vmatprep.subr.mxu0 0.0
  %3015 = vmatpush1.msra.mxu0 0.0
  %3016 = vmatprep.subr.mxu0 0.0
  %3017 = vmatpush1.msra.mxu0 0.0
  %3018 = vmatprep.subr.mxu0 0.0
  %3019 = vmatpush1.msra.mxu0 0.0
  %3020 = vmatprep.subr.mxu0 0.0
  %3021 = vmatpush1.msra.mxu0 0.0
  %3022 = vmatprep.subr.mxu0 0.0
  %3023 = vmatpush1.msra.mxu0 0.0
  %3024 = vmatprep.subr.mxu0 0.0
  %3025 = vmatpush1.msra.mxu0 0.0
  %3026 = vmatprep.subr.mxu0 0.0
  %3027 = vmatpush1.msra.mxu0 0.0
  %3028 = vmatprep.subr.mxu0 0.0
  %3029 = vmatpush1.msra.mxu0 0.0
  %3030 = vmatprep.subr.mxu0 0.0
  %3031 = vmatpush1.msra.mxu0 0.0
  %3032 = vmatprep.subr.mxu0 0.0
  %3033 = vmatpush1.msra.mxu0 0.0
  %3034 = vmatprep.subr.mxu0 0.0
  %3035 = vmatpush1.msra.mxu0 0.0
  %3036 = vmatprep.mubr.f32.mxu0 0.0
  %3037 = vmatmul.mubr.f32.gmra.mrb[0].mxu0 %v2789
  %v3038 = vpop.f32.mrb[0].mxu0
  %v3039 = vadd.f32 0.0, %v3038
  %v3040 = vpop.f32.mrb[0].mxu0
  %v3041 = vadd.f32 0.0, %v3040
  %3042 = vdwg.mxu0
  %3043 = vmatprep.subr.mxu0 0.0
  %3044 = vmatpush1.msra.mxu0 %v446
  %3045 = vmatprep.subr.mxu0 0.0
  %3046 = vmatpush1.msra.mxu0 %v449
  %3047 = vmatprep.subr.mxu0 0.0
  %3048 = vmatpush1.msra.mxu0 %v452
  %3049 = vmatprep.subr.mxu0 0.0
  %3050 = vmatpush1.msra.mxu0 %v455
  %3051 = vmatprep.subr.mxu0 0.0
  %3052 = vmatpush1.msra.mxu0 %v458
  %3053 = vmatprep.subr.mxu0 0.0
  %3054 = vmatpush1.msra.mxu0 %v461
  %3055 = vmatprep.subr.mxu0 0.0
  %3056 = vmatpush1.msra.mxu0 %v464
  %3057 = vmatprep.subr.mxu0 0.0
  %3058 = vmatpush1.msra.mxu0 %v467
  %3059 = vmatprep.subr.mxu0 0.0
  %3060 = vmatpush1.msra.mxu0 %v470
  %3061 = vmatprep.subr.mxu0 0.0
  %3062 = vmatpush1.msra.mxu0 %v473
  %3063 = vmatprep.subr.mxu0 0.0
  %3064 = vmatpush1.msra.mxu0 %v476
  %3065 = vmatprep.subr.mxu0 0.0
  %3066 = vmatpush1.msra.mxu0 %v479
  %3067 = vmatprep.subr.mxu0 0.0
  %3068 = vmatpush1.msra.mxu0 %v482
  %3069 = vmatprep.subr.mxu0 0.0
  %3070 = vmatpush1.msra.mxu0 %v485
  %3071 = vmatprep.subr.mxu0 0.0
  %3072 = vmatpush1.msra.mxu0 %v488
  %3073 = vmatprep.subr.mxu0 0.0
  %3074 = vmatpush1.msra.mxu0 %v491
  %3075 = vmatprep.subr.mxu0 0.0
  %3076 = vmatpush1.msra.mxu0 0.0
  %3077 = vmatprep.subr.mxu0 0.0
  %3078 = vmatpush1.msra.mxu0 0.0
  %3079 = vmatprep.subr.mxu0 0.0
  %3080 = vmatpush1.msra.mxu0 0.0
  %3081 = vmatprep.subr.mxu0 0.0
  %3082 = vmatpush1.msra.mxu0 0.0
  %3083 = vmatprep.subr.mxu0 0.0
  %3084 = vmatpush1.msra.mxu0 0.0
  %3085 = vmatprep.subr.mxu0 0.0
  %3086 = vmatpush1.msra.mxu0 0.0
  %3087 = vmatprep.subr.mxu0 0.0
  %3088 = vmatpush1.msra.mxu0 0.0
  %3089 = vmatprep.subr.mxu0 0.0
  %3090 = vmatpush1.msra.mxu0 0.0
  %3091 = vmatprep.subr.mxu0 0.0
  %3092 = vmatpush1.msra.mxu0 0.0
  %3093 = vmatprep.subr.mxu0 0.0
  %3094 = vmatpush1.msra.mxu0 0.0
  %3095 = vmatprep.subr.mxu0 0.0
  %3096 = vmatpush1.msra.mxu0 0.0
  %3097 = vmatprep.subr.mxu0 0.0
  %3098 = vmatpush1.msra.mxu0 0.0
  %3099 = vmatprep.subr.mxu0 0.0
  %3100 = vmatpush1.msra.mxu0 0.0
  %3101 = vmatprep.subr.mxu0 0.0
  %3102 = vmatpush1.msra.mxu0 0.0
  %3103 = vmatprep.subr.mxu0 0.0
  %3104 = vmatpush1.msra.mxu0 0.0
  %3105 = vmatprep.subr.mxu0 0.0
  %3106 = vmatpush1.msra.mxu0 0.0
  %3107 = vmatprep.mubr.f32.mxu0 0.0
  %3108 = vmatmul.mubr.f32.gmra.mrb[0].mxu0 %v2789
  %v3109 = vpop.f32.mrb[0].mxu0
  %v3110 = vadd.f32 0.0, %v3109
  %v3111 = vpop.f32.mrb[0].mxu0
  %3112 = vdwg.mxu0
  %v3113 = vadd.f32 %v2969, %v3039
  %v3114 = vxor.u32 %v3113, 2147483648
  %v3115 = vmul.f32 %v3114, 1.442695
  %v3116 = vpow.pop %v3115
  %v3117 = vadd.f32 %v3116, 1.0
  %v3118 = vrcp.pop %v3117
  %v3119 = vmul.f32 1.0, %v3118
  %v3120 = vadd.f32 %v2970, %v3041
  %v3121 = vxor.u32 %v3120, 2147483648
  %v3122 = vmul.f32 %v3121, 1.442695
  %v3123 = vpow.pop %v3122
  %v3124 = vadd.f32 %v3123, 1.0
  %v3125 = vrcp.pop %v3124
  %v3126 = vmul.f32 1.0, %v3125
  %v3127 = vadd.f32 %v3110, %v705
  %v3128 = vmul.f32 %v3119, %v3127
  %v3129 = vadd.f32 %v2971, %v3128
  %v3130 = vtanh.pop %v3129
  %v3131 = vsub.f32 1.0, %v3126
  %v3132 = vmul.f32 %v3131, %v3130
  %v3133 = vmul.f32 %v3126, %v2789
  %v3134 = vadd.f32 %v3132, %v3133
  %v3135 = vld [vmem:[#allocation3] sm:$0xff]
  %v3136 = vld [vmem:[#allocation3 + $0x8] sm:$0xff]
  %v3137 = vld [vmem:[#allocation3 + $0x10] sm:$0xff]
  %3138 = vmatprep.subr.mxu0 %v493
  %3139 = vmatpush1.msra.mxu0 %v492
  %3140 = vmatprep.subr.mxu0 %v496
  %3141 = vmatpush1.msra.mxu0 %v495
  %3142 = vmatprep.subr.mxu0 %v499
  %3143 = vmatpush1.msra.mxu0 %v498
  %3144 = vmatprep.subr.mxu0 %v502
  %3145 = vmatpush1.msra.mxu0 %v501
  %3146 = vmatprep.subr.mxu0 %v505
  %3147 = vmatpush1.msra.mxu0 %v504
  %3148 = vmatprep.subr.mxu0 %v508
  %3149 = vmatpush1.msra.mxu0 %v507
  %3150 = vmatprep.subr.mxu0 %v511
  %3151 = vmatpush1.msra.mxu0 %v510
  %3152 = vmatprep.subr.mxu0 %v514
  %3153 = vmatpush1.msra.mxu0 %v513
  %3154 = vmatprep.subr.mxu0 %v517
  %3155 = vmatpush1.msra.mxu0 %v516
  %3156 = vmatprep.subr.mxu0 %v520
  %3157 = vmatpush1.msra.mxu0 %v519
  %3158 = vmatprep.subr.mxu0 %v523
  %3159 = vmatpush1.msra.mxu0 %v522
  %3160 = vmatprep.subr.mxu0 %v526
  %3161 = vmatpush1.msra.mxu0 %v525
  %3162 = vmatprep.subr.mxu0 %v529
  %3163 = vmatpush1.msra.mxu0 %v528
  %3164 = vmatprep.subr.mxu0 %v532
  %3165 = vmatpush1.msra.mxu0 %v531
  %3166 = vmatprep.subr.mxu0 %v535
  %3167 = vmatpush1.msra.mxu0 %v534
  %3168 = vmatprep.subr.mxu0 %v538
  %3169 = vmatpush1.msra.mxu0 %v537
  %3170 = vmatprep.subr.mxu0 0.0
  %3171 = vmatpush1.msra.mxu0 0.0
  %3172 = vmatprep.subr.mxu0 0.0
  %3173 = vmatpush1.msra.mxu0 0.0
  %3174 = vmatprep.subr.mxu0 0.0
  %3175 = vmatpush1.msra.mxu0 0.0
  %3176 = vmatprep.subr.mxu0 0.0
  %3177 = vmatpush1.msra.mxu0 0.0
  %3178 = vmatprep.subr.mxu0 0.0
  %3179 = vmatpush1.msra.mxu0 0.0
  %3180 = vmatprep.subr.mxu0 0.0
  %3181 = vmatpush1.msra.mxu0 0.0
  %3182 = vmatprep.subr.mxu0 0.0
  %3183 = vmatpush1.msra.mxu0 0.0
  %3184 = vmatprep.subr.mxu0 0.0
  %3185 = vmatpush1.msra.mxu0 0.0
  %3186 = vmatprep.subr.mxu0 0.0
  %3187 = vmatpush1.msra.mxu0 0.0
  %3188 = vmatprep.subr.mxu0 0.0
  %3189 = vmatpush1.msra.mxu0 0.0
  %3190 = vmatprep.subr.mxu0 0.0
  %3191 = vmatpush1.msra.mxu0 0.0
  %3192 = vmatprep.subr.mxu0 0.0
  %3193 = vmatpush1.msra.mxu0 0.0
  %3194 = vmatprep.subr.mxu0 0.0
  %3195 = vmatpush1.msra.mxu0 0.0
  %3196 = vmatprep.subr.mxu0 0.0
  %3197 = vmatpush1.msra.mxu0 0.0
  %3198 = vmatprep.subr.mxu0 0.0
  %3199 = vmatpush1.msra.mxu0 0.0
  %3200 = vmatprep.subr.mxu0 0.0
  %3201 = vmatpush1.msra.mxu0 0.0
  %3202 = vmatprep.mubr.f32.mxu0 0.0
  %3203 = vmatmul.mubr.f32.gmra.mrb[0].mxu0 %v2956
  %v3204 = vpop.f32.mrb[0].mxu0
  %v3205 = vadd.f32 0.0, %v3204
  %v3206 = vpop.f32.mrb[0].mxu0
  %v3207 = vadd.f32 0.0, %v3206
  %3208 = vdwg.mxu0
  %3209 = vmatprep.subr.mxu0 0.0
  %3210 = vmatpush1.msra.mxu0 %v494
  %3211 = vmatprep.subr.mxu0 0.0
  %3212 = vmatpush1.msra.mxu0 %v497
  %3213 = vmatprep.subr.mxu0 0.0
  %3214 = vmatpush1.msra.mxu0 %v500
  %3215 = vmatprep.subr.mxu0 0.0
  %3216 = vmatpush1.msra.mxu0 %v503
  %3217 = vmatprep.subr.mxu0 0.0
  %3218 = vmatpush1.msra.mxu0 %v506
  %3219 = vmatprep.subr.mxu0 0.0
  %3220 = vmatpush1.msra.mxu0 %v509
  %3221 = vmatprep.subr.mxu0 0.0
  %3222 = vmatpush1.msra.mxu0 %v512
  %3223 = vmatprep.subr.mxu0 0.0
  %3224 = vmatpush1.msra.mxu0 %v515
  %3225 = vmatprep.subr.mxu0 0.0
  %3226 = vmatpush1.msra.mxu0 %v518
  %3227 = vmatprep.subr.mxu0 0.0
  %3228 = vmatpush1.msra.mxu0 %v521
  %3229 = vmatprep.subr.mxu0 0.0
  %3230 = vmatpush1.msra.mxu0 %v524
  %3231 = vmatprep.subr.mxu0 0.0
  %3232 = vmatpush1.msra.mxu0 %v527
  %3233 = vmatprep.subr.mxu0 0.0
  %3234 = vmatpush1.msra.mxu0 %v530
  %3235 = vmatprep.subr.mxu0 0.0
  %3236 = vmatpush1.msra.mxu0 %v533
  %3237 = vmatprep.subr.mxu0 0.0
  %3238 = vmatpush1.msra.mxu0 %v536
  %3239 = vmatprep.subr.mxu0 0.0
  %3240 = vmatpush1.msra.mxu0 %v539
  %3241 = vmatprep.subr.mxu0 0.0
  %3242 = vmatpush1.msra.mxu0 0.0
  %3243 = vmatprep.subr.mxu0 0.0
  %3244 = vmatpush1.msra.mxu0 0.0
  %3245 = vmatprep.subr.mxu0 0.0
  %3246 = vmatpush1.msra.mxu0 0.0
  %3247 = vmatprep.subr.mxu0 0.0
  %3248 = vmatpush1.msra.mxu0 0.0
  %3249 = vmatprep.subr.mxu0 0.0
  %3250 = vmatpush1.msra.mxu0 0.0
  %3251 = vmatprep.subr.mxu0 0.0
  %3252 = vmatpush1.msra.mxu0 0.0
  %3253 = vmatprep.subr.mxu0 0.0
  %3254 = vmatpush1.msra.mxu0 0.0
  %3255 = vmatprep.subr.mxu0 0.0
  %3256 = vmatpush1.msra.mxu0 0.0
  %3257 = vmatprep.subr.mxu0 0.0
  %3258 = vmatpush1.msra.mxu0 0.0
  %3259 = vmatprep.subr.mxu0 0.0
  %3260 = vmatpush1.msra.mxu0 0.0
  %3261 = vmatprep.subr.mxu0 0.0
  %3262 = vmatpush1.msra.mxu0 0.0
  %3263 = vmatprep.subr.mxu0 0.0
  %3264 = vmatpush1.msra.mxu0 0.0
  %3265 = vmatprep.subr.mxu0 0.0
  %3266 = vmatpush1.msra.mxu0 0.0
  %3267 = vmatprep.subr.mxu0 0.0
  %3268 = vmatpush1.msra.mxu0 0.0
  %3269 = vmatprep.subr.mxu0 0.0
  %3270 = vmatpush1.msra.mxu0 0.0
  %3271 = vmatprep.subr.mxu0 0.0
  %3272 = vmatpush1.msra.mxu0 0.0
  %3273 = vmatprep.mubr.f32.mxu0 0.0
  %3274 = vmatmul.mubr.f32.gmra.mrb[0].mxu0 %v2956
  %v3275 = vpop.f32.mrb[0].mxu0
  %v3276 = vadd.f32 0.0, %v3275
  %v3277 = vpop.f32.mrb[0].mxu0
  %3278 = vdwg.mxu0
  %v3279 = vadd.f32 %v3135, %v3205
  %v3280 = vxor.u32 %v3279, 2147483648
  %v3281 = vmul.f32 %v3280, 1.442695
  %v3282 = vpow.pop %v3281
  %v3283 = vadd.f32 %v3282, 1.0
  %v3284 = vrcp.pop %v3283
  %v3285 = vmul.f32 1.0, %v3284
  %v3286 = vadd.f32 %v3136, %v3207
  %v3287 = vxor.u32 %v3286, 2147483648
  %v3288 = vmul.f32 %v3287, 1.442695
  %v3289 = vpow.pop %v3288
  %v3290 = vadd.f32 %v3289, 1.0
  %v3291 = vrcp.pop %v3290
  %v3292 = vmul.f32 1.0, %v3291
  %v3293 = vadd.f32 %v3276, %v878
  %v3294 = vmul.f32 %v3285, %v3293
  %v3295 = vadd.f32 %v3137, %v3294
  %v3296 = vtanh.pop %v3295
  %v3297 = vsub.f32 1.0, %v3292
  %v3298 = vmul.f32 %v3297, %v3296
  %v3299 = vmul.f32 %v3292, %v2956
  %v3300 = vadd.f32 %v3298, %v3299
  %s3301 = scalar_lea.vmem %s8, 112
  %3302 = vst [vmem:[%s3301] sm:$0xff] %v3134
  %s3303 = scalar_lea.vmem %s8, 8
  %3304 = vst [vmem:[%s3303] sm:$0xff] %v3300
  %vm3305 = vcmp.eq.s32.totalorder %v542, 7
  %v3306 = vsel %vm3305, 1, 0
  %3307 = vset.pattern.permute.xlu0 0
  %3308 = vperm.xlu0 %3307, %v3306
  %v3309 = vpop.permute.xlu0 %3308
  %vm3310 = vcmp.eq.s32.totalorder %v3309, 1
  %v3311 = vsel %vm3310, %v3134, %v2967
  %3312 = vst [vmem:[%s9] sm:$0xff] %v3311
  %s3313 = scalar_lea.vmem %s9, 8
  %3314 = vst [vmem:[%s3313] sm:$0xff] %v3300
  // Predicated region
  $region34: #{bidirectional_encoder_forward.1} parent=0 // pred_check
    _
  $region35: #{bidirectional_encoder_forward.1} parent=0 // pred_check_branch
    %3316 = sbr.rel (0) target = $region37
  $region36: #{bidirectional_encoder_forward.1} parent=0 // pred_region
    _
  $region37: #{bidirectional_encoder_forward.1} parent=0 // pred_fallthru
    _
  // Predicated region
  $region38: #{bidirectional_encoder_forward.1} parent=0 // pred_check
    _
  $region39: #{bidirectional_encoder_forward.1} parent=0 // pred_check_branch
    %3318 = sbr.rel (0) target = $region41
  $region40: #{bidirectional_encoder_forward.1} parent=0 // pred_region
    _
  $region41: #{bidirectional_encoder_forward.1} parent=0 // pred_fallthru
    _
  // Predicated region
  $region42: #{bidirectional_encoder_forward.1} parent=0 // pred_check
    _
  $region43: #{bidirectional_encoder_forward.1} parent=0 // pred_check_branch
    %3320 = sbr.rel (0) target = $region45
  $region44: #{bidirectional_encoder_forward.1} parent=0 // pred_region
    _
  $region45: #{bidirectional_encoder_forward.1} parent=0 // pred_fallthru
    _
  // Predicated region
  $region46: #{bidirectional_encoder_forward.1} parent=0 // pred_check
    _
  $region47: #{bidirectional_encoder_forward.1} parent=0 // pred_check_branch
    %3322 = sbr.rel (0) target = $region49
  $region48: #{bidirectional_encoder_forward.1} parent=0 // pred_region
    _
  $region49: #{bidirectional_encoder_forward.1} parent=0 // pred_fallthru
    _

</llo_original>
